<compile_context>
chip_gen: v7x
topology: tpu7x:2x2x1
jax: 0.10.0
libtpu: 0.0.40
codegen_flags: <defaults>
</compile_context>

<pallas_src>
import functools

import numpy as np
import jax
import jax.numpy as jnp
from jax.experimental import pallas as pl
from jax.experimental.pallas import tpu as pltpu

LANE = 128


def _round_up(x, m):
    return (x + m - 1) // m * m


def _pad2d(x, rows, cols):
    return jnp.pad(x, ((0, rows - x.shape[0]), (0, cols - x.shape[1])))


# ----------------------------------------------------------------------------
# Fused kernel: 9-tap conv (accumulating MXU dots over the flattened padded
# slab) + bias + ReLU + masked global-average-pool matmul + FC head.
# ----------------------------------------------------------------------------
def _holistic_kernel(xf_ref, wc_ref, bc_ref, pool_ref, wf_ref, bf_ref, o_ref,
                     *, m_rows, wp):
    # xf_ref  : (B*Hp*Wp, Cin) f32   flattened zero-padded NHWC input slab
    # wc_ref  : (9, Cin, Cp)   bf16  per-tap conv weights (Cout zero-padded)
    # bc_ref  : (1, Cp)        f32   conv bias (zero-padded)
    # pool_ref: (B, M)         f32   masked global-average-pool matrix
    # wf_ref  : (Cp, Np)       bf16  fc weight (zero-padded)
    # bf_ref  : (1, Np)        f32   fc bias (zero-padded)
    # o_ref   : (B, Np)        f32   padded logits
    cp = wc_ref.shape[-1]
    acc = jnp.zeros((m_rows, cp), jnp.float32)
    # 3x3 "same" conv over the flattened slab: output row m, tap (kh, kw)
    # reads input row m + kh*Wp + kw.  bf16 at the MXU inputs, f32 accumulate.
    for kh in range(3):
        for kw in range(3):
            off = kh * wp + kw
            tap = xf_ref[off:off + m_rows, :].astype(jnp.bfloat16)
            acc = acc + jnp.dot(tap, wc_ref[kh * 3 + kw],
                                preferred_element_type=jnp.float32)
    acc = jnp.maximum(acc + bc_ref[...], 0.0)                 # bias + ReLU (f32)

    # Masked global average pool: rows outside each image's valid HxW window
    # (halo columns / pad rows) have weight 0, valid rows 1/(H*W).  (B, Cp) f32.
    pooled = jnp.dot(pool_ref[...], acc, preferred_element_type=jnp.float32)

    # Classification head (bf16 MXU operands, f32 accumulation + f32 bias).
    logits = jnp.dot(pooled.astype(wf_ref.dtype), wf_ref[...],
                     preferred_element_type=jnp.float32) + bf_ref[...]
    o_ref[...] = logits


@jax.jit
def holistic_forward(x_nchw, conv_w, conv_b, fc_w, fc_b):
    """Stand-in for pretrained_holistic(batch_footer).

    x_nchw : (B, Cin, H, W) float32  (PyTorch layout)
    conv_w : (Cout, Cin, 3, 3)
    conv_b : (Cout,)
    fc_w   : (NC, Cout)              (PyTorch nn.Linear layout)
    fc_b   : (NC,)
    returns: (B, NC) float32 logits
    """
    B, Cin, H, W = x_nchw.shape
    Cout = conv_w.shape[0]
    NC = fc_w.shape[0]
    Hp, Wp = H + 2, W + 2
    R = Hp * Wp
    Cp = _round_up(Cout, LANE)
    Np = _round_up(NC, LANE)
    # Number of conv-output rows evaluated over the flattened slab; with a
    # (1,1) spatial pad the deepest tap read of the last valid row lands
    # exactly on the final slab row, so no extra row padding is needed.
    M = (B - 1) * R + (H - 1) * Wp + W

    # ---- layout plumbing (fused into a single XLA fusion under jit) -------
    xp = jnp.pad(jnp.transpose(x_nchw, (0, 2, 3, 1)),
                 ((0, 0), (1, 1), (1, 1), (0, 0)))            # (B, Hp, Wp, Cin)
    xf = xp.reshape(B * R, Cin)                               # flat slab, f32

    # conv weight (Cout, Cin, 3, 3) -> (9, Cin, Cp) bf16, tap-major (kh, kw)
    wc = jnp.transpose(conv_w, (2, 3, 1, 0)).reshape(9, Cin, Cout)
    wc = jnp.pad(wc, ((0, 0), (0, 0), (0, Cp - Cout))).astype(jnp.bfloat16)
    bc = _pad2d(conv_b.reshape(1, Cout), 1, Cp)               # (1, Cp)  f32
    wf = _pad2d(fc_w.T, Cp, Np).astype(jnp.bfloat16)          # (Cp, Np) bf16
    bf = _pad2d(fc_b.reshape(1, NC), 1, Np)                   # (1, Np)  f32

    # Compile-time-constant masked global-average-pool matrix (B, M):
    # weight 1/(H*W) on the H*W valid conv-output rows of each image, else 0.
    pool_np = np.zeros((B, M), np.float32)
    for b in range(B):
        rows = b * R + np.arange(H)[:, None] * Wp + np.arange(W)[None, :]
        pool_np[b, rows.ravel()] = 1.0 / (H * W)
    pool = jnp.asarray(pool_np)

    flops = 2 * 9 * M * Cin * Cp + 2 * B * M * Cp + 2 * B * Cp * Np
    bytes_accessed = (4 * (xf.size + bc.size + pool.size + bf.size + B * Np)
                      + 2 * (wc.size + wf.size))

    out = pl.pallas_call(
        functools.partial(_holistic_kernel, m_rows=M, wp=Wp),
        out_shape=jax.ShapeDtypeStruct((B, Np), jnp.float32),
        grid_spec=pltpu.PrefetchScalarGridSpec(
            num_scalar_prefetch=0,
            grid=(1,),                                        # single fused step
            in_specs=[
                pl.BlockSpec((B * R, Cin), lambda g: (0, 0)),     # input slab
                pl.BlockSpec((9, Cin, Cp), lambda g: (0, 0, 0)),  # conv weights
                pl.BlockSpec((1, Cp), lambda g: (0, 0)),          # conv bias
                pl.BlockSpec((B, M), lambda g: (0, 0)),           # pool matrix
                pl.BlockSpec((Cp, Np), lambda g: (0, 0)),         # fc weight
                pl.BlockSpec((1, Np), lambda g: (0, 0)),          # fc bias
            ],
            out_specs=pl.BlockSpec((B, Np), lambda g: (0, 0)),
        ),
        compiler_params=pltpu.CompilerParams(
            dimension_semantics=("arbitrary",)),
        cost_estimate=pl.CostEstimate(flops=flops, transcendentals=0,
                                      bytes_accessed=bytes_accessed),
    )(xf, wc, bc, pool, wf, bf)

    # NOTE(perf): at ResNet-scale H*W this single-step kernel must grow a
    # spatial grid axis (tile M, accumulate the pool matmul into a VMEM
    # scratch finalized under pl.when) to stay inside v7x's 64 MiB VMEM; at
    # the current size every block together is <1 MiB, so one step is optimal.
    return out[:, :NC]


def doc_classification_rest_forward(params, batch_holistic, batch_header,
                                    batch_footer, batch_left_body,
                                    batch_right_body):
    """Matches DocClassificationRest.forward: only batch_footer is consumed."""
    del batch_holistic, batch_header, batch_left_body, batch_right_body
    return holistic_forward(batch_footer, *params)


# ----------------------------------------------------------------------------
# Pure-JAX reference (for correctness check)
# ----------------------------------------------------------------------------
def _reference(x_nchw, conv_w, conv_b, fc_w, fc_b):
    y = jax.lax.conv_general_dilated(
        x_nchw, conv_w, window_strides=(1, 1), padding=((1, 1), (1, 1)),
        dimension_numbers=("NCHW", "OIHW", "NCHW"))
    y = jax.nn.relu(y + conv_b[None, :, None, None])
    pooled = jnp.mean(y, axis=(2, 3))                 # (B, Cout)
    return pooled @ fc_w.T + fc_b[None, :]


if __name__ == "__main__":
    key = jax.random.PRNGKey(0)
    B, Cin, H, W = 2, 4, 16, 16
    Cout, NC = 32, 10

    ks = jax.random.split(key, 8)
    # the five stream inputs the module receives (only batch_footer matters)
    batch_holistic = jax.random.normal(ks[0], (B, Cin, H, W), jnp.float32)
    batch_header = jax.random.normal(ks[1], (B, Cin, H, W), jnp.float32)
    batch_footer = jax.random.normal(ks[2], (B, Cin, H, W), jnp.float32)
    batch_left_body = jax.random.normal(ks[3], (B, Cin, H, W), jnp.float32)
    batch_right_body = jax.random.normal(ks[4], (B, Cin, H, W), jnp.float32)

    # deterministic synthetic parameters for the "pretrained holistic" backbone
    conv_w = jax.random.normal(ks[5], (Cout, Cin, 3, 3), jnp.float32) * 0.1
    conv_b = jnp.linspace(-0.1, 0.1, Cout, dtype=jnp.float32)
    fc_w = jax.random.normal(ks[6], (NC, Cout), jnp.float32) * 0.1
    fc_b = jnp.linspace(-0.05, 0.05, NC, dtype=jnp.float32)
    params = (conv_w, conv_b, fc_w, fc_b)

    out = doc_classification_rest_forward(
        params, batch_holistic, batch_header, batch_footer,
        batch_left_body, batch_right_body)
    out = jax.block_until_ready(out)

    ref = _reference(batch_footer, *params)
    assert out.shape == (B, NC), out.shape
    # bf16 MXU operands -> loosened tolerance vs the f32 reference
    assert jnp.allclose(out, ref, rtol=2e-2, atol=2e-2), (out, ref)

    print("KERNEL_OK")
</pallas_src>

<mosaic_0001>
module attributes {stable_mosaic.version = 11 : i64} {
  func.func @_holistic_kernel(%arg0: i32, %arg1: memref<648x4xf32, #tpu.memory_space<vmem>>, %arg2: memref<9x4x128xbf16, #tpu.memory_space<vmem>>, %arg3: memref<1x128xf32, #tpu.memory_space<vmem>>, %arg4: memref<2x610xf32, #tpu.memory_space<vmem>>, %arg5: memref<128x128xbf16, #tpu.memory_space<vmem>>, %arg6: memref<1x128xf32, #tpu.memory_space<vmem>>, %arg7: memref<2x128xf32, #tpu.memory_space<vmem>>) attributes {dimension_semantics = [#tpu.dimension_semantics<arbitrary>], iteration_bounds = array<i64: 1>, scalar_prefetch = 0 : i64, scratch_operands = 0 : i64, tpu.core_type = #tpu.core_type<tc>, window_params = [{pipeline_mode = #tpu.pipeline_mode<synchronous>, transform_indices = @transform_0, window_bounds = array<i64: 648, 4>}, {pipeline_mode = #tpu.pipeline_mode<synchronous>, transform_indices = @transform_1, window_bounds = array<i64: 9, 4, 128>}, {pipeline_mode = #tpu.pipeline_mode<synchronous>, transform_indices = @transform_2, window_bounds = array<i64: 1, 128>}, {pipeline_mode = #tpu.pipeline_mode<synchronous>, transform_indices = @transform_3, window_bounds = array<i64: 2, 610>}, {pipeline_mode = #tpu.pipeline_mode<synchronous>, transform_indices = @transform_4, window_bounds = array<i64: 128, 128>}, {pipeline_mode = #tpu.pipeline_mode<synchronous>, transform_indices = @transform_5, window_bounds = array<i64: 1, 128>}, {pipeline_mode = #tpu.pipeline_mode<synchronous>, transform_indices = @transform_6, window_bounds = array<i64: 2, 128>}]} {
    %cst = arith.constant 0.000000e+00 : f32
    %0 = vector.broadcast %cst : f32 to vector<610x128xf32>
    %c0 = arith.constant 0 : index
    %c0_0 = arith.constant 0 : index
    %1 = vector.load %arg1[%c0, %c0_0] : memref<648x4xf32, #tpu.memory_space<vmem>>, vector<610x4xf32>
    %2 = arith.truncf %1 : vector<610x4xf32> to vector<610x4xbf16>
    %c0_1 = arith.constant 0 : index
    %c0_2 = arith.constant 0 : index
    %c0_3 = arith.constant 0 : index
    %3 = vector.load %arg2[%c0_1, %c0_2, %c0_3] : memref<9x4x128xbf16, #tpu.memory_space<vmem>>, vector<1x4x128xbf16>
    %4 = vector.shape_cast %3 : vector<1x4x128xbf16> to vector<4x128xbf16>
    %cst_4 = arith.constant dense<0.000000e+00> : vector<610x128xf32>
    %5 = tpu.matmul %2, %4, %cst_4 {dimension_numbers = #tpu.dot_dimension_numbers<[1], [0], [0], [1], [0, 0, 1, 1], [], []>} : vector<610x4xbf16>, vector<4x128xbf16>, vector<610x128xf32> -> vector<610x128xf32>
    %6 = arith.addf %0, %5 : vector<610x128xf32>
    %c1 = arith.constant 1 : index
    %c0_5 = arith.constant 0 : index
    %7 = vector.load %arg1[%c1, %c0_5] : memref<648x4xf32, #tpu.memory_space<vmem>>, vector<610x4xf32>
    %8 = arith.truncf %7 : vector<610x4xf32> to vector<610x4xbf16>
    %c1_6 = arith.constant 1 : index
    %c0_7 = arith.constant 0 : index
    %c0_8 = arith.constant 0 : index
    %9 = vector.load %arg2[%c1_6, %c0_7, %c0_8] : memref<9x4x128xbf16, #tpu.memory_space<vmem>>, vector<1x4x128xbf16>
    %10 = vector.shape_cast %9 : vector<1x4x128xbf16> to vector<4x128xbf16>
    %cst_9 = arith.constant dense<0.000000e+00> : vector<610x128xf32>
    %11 = tpu.matmul %8, %10, %cst_9 {dimension_numbers = #tpu.dot_dimension_numbers<[1], [0], [0], [1], [0, 0, 1, 1], [], []>} : vector<610x4xbf16>, vector<4x128xbf16>, vector<610x128xf32> -> vector<610x128xf32>
    %12 = arith.addf %6, %11 : vector<610x128xf32>
    %c2 = arith.constant 2 : index
    %c0_10 = arith.constant 0 : index
    %13 = vector.load %arg1[%c2, %c0_10] : memref<648x4xf32, #tpu.memory_space<vmem>>, vector<610x4xf32>
    %14 = arith.truncf %13 : vector<610x4xf32> to vector<610x4xbf16>
    %c2_11 = arith.constant 2 : index
    %c0_12 = arith.constant 0 : index
    %c0_13 = arith.constant 0 : index
    %15 = vector.load %arg2[%c2_11, %c0_12, %c0_13] : memref<9x4x128xbf16, #tpu.memory_space<vmem>>, vector<1x4x128xbf16>
    %16 = vector.shape_cast %15 : vector<1x4x128xbf16> to vector<4x128xbf16>
    %cst_14 = arith.constant dense<0.000000e+00> : vector<610x128xf32>
    %17 = tpu.matmul %14, %16, %cst_14 {dimension_numbers = #tpu.dot_dimension_numbers<[1], [0], [0], [1], [0, 0, 1, 1], [], []>} : vector<610x4xbf16>, vector<4x128xbf16>, vector<610x128xf32> -> vector<610x128xf32>
    %18 = arith.addf %12, %17 : vector<610x128xf32>
    %c18 = arith.constant 18 : index
    %c0_15 = arith.constant 0 : index
    %19 = vector.load %arg1[%c18, %c0_15] : memref<648x4xf32, #tpu.memory_space<vmem>>, vector<610x4xf32>
    %20 = arith.truncf %19 : vector<610x4xf32> to vector<610x4xbf16>
    %c3 = arith.constant 3 : index
    %c0_16 = arith.constant 0 : index
    %c0_17 = arith.constant 0 : index
    %21 = vector.load %arg2[%c3, %c0_16, %c0_17] : memref<9x4x128xbf16, #tpu.memory_space<vmem>>, vector<1x4x128xbf16>
    %22 = vector.shape_cast %21 : vector<1x4x128xbf16> to vector<4x128xbf16>
    %cst_18 = arith.constant dense<0.000000e+00> : vector<610x128xf32>
    %23 = tpu.matmul %20, %22, %cst_18 {dimension_numbers = #tpu.dot_dimension_numbers<[1], [0], [0], [1], [0, 0, 1, 1], [], []>} : vector<610x4xbf16>, vector<4x128xbf16>, vector<610x128xf32> -> vector<610x128xf32>
    %24 = arith.addf %18, %23 : vector<610x128xf32>
    %c19 = arith.constant 19 : index
    %c0_19 = arith.constant 0 : index
    %25 = vector.load %arg1[%c19, %c0_19] : memref<648x4xf32, #tpu.memory_space<vmem>>, vector<610x4xf32>
    %26 = arith.truncf %25 : vector<610x4xf32> to vector<610x4xbf16>
    %c4 = arith.constant 4 : index
    %c0_20 = arith.constant 0 : index
    %c0_21 = arith.constant 0 : index
    %27 = vector.load %arg2[%c4, %c0_20, %c0_21] : memref<9x4x128xbf16, #tpu.memory_space<vmem>>, vector<1x4x128xbf16>
    %28 = vector.shape_cast %27 : vector<1x4x128xbf16> to vector<4x128xbf16>
    %cst_22 = arith.constant dense<0.000000e+00> : vector<610x128xf32>
    %29 = tpu.matmul %26, %28, %cst_22 {dimension_numbers = #tpu.dot_dimension_numbers<[1], [0], [0], [1], [0, 0, 1, 1], [], []>} : vector<610x4xbf16>, vector<4x128xbf16>, vector<610x128xf32> -> vector<610x128xf32>
    %30 = arith.addf %24, %29 : vector<610x128xf32>
    %c20 = arith.constant 20 : index
    %c0_23 = arith.constant 0 : index
    %31 = vector.load %arg1[%c20, %c0_23] : memref<648x4xf32, #tpu.memory_space<vmem>>, vector<610x4xf32>
    %32 = arith.truncf %31 : vector<610x4xf32> to vector<610x4xbf16>
    %c5 = arith.constant 5 : index
    %c0_24 = arith.constant 0 : index
    %c0_25 = arith.constant 0 : index
    %33 = vector.load %arg2[%c5, %c0_24, %c0_25] : memref<9x4x128xbf16, #tpu.memory_space<vmem>>, vector<1x4x128xbf16>
    %34 = vector.shape_cast %33 : vector<1x4x128xbf16> to vector<4x128xbf16>
    %cst_26 = arith.constant dense<0.000000e+00> : vector<610x128xf32>
    %35 = tpu.matmul %32, %34, %cst_26 {dimension_numbers = #tpu.dot_dimension_numbers<[1], [0], [0], [1], [0, 0, 1, 1], [], []>} : vector<610x4xbf16>, vector<4x128xbf16>, vector<610x128xf32> -> vector<610x128xf32>
    %36 = arith.addf %30, %35 : vector<610x128xf32>
    %c36 = arith.constant 36 : index
    %c0_27 = arith.constant 0 : index
    %37 = vector.load %arg1[%c36, %c0_27] : memref<648x4xf32, #tpu.memory_space<vmem>>, vector<610x4xf32>
    %38 = arith.truncf %37 : vector<610x4xf32> to vector<610x4xbf16>
    %c6 = arith.constant 6 : index
    %c0_28 = arith.constant 0 : index
    %c0_29 = arith.constant 0 : index
    %39 = vector.load %arg2[%c6, %c0_28, %c0_29] : memref<9x4x128xbf16, #tpu.memory_space<vmem>>, vector<1x4x128xbf16>
    %40 = vector.shape_cast %39 : vector<1x4x128xbf16> to vector<4x128xbf16>
    %cst_30 = arith.constant dense<0.000000e+00> : vector<610x128xf32>
    %41 = tpu.matmul %38, %40, %cst_30 {dimension_numbers = #tpu.dot_dimension_numbers<[1], [0], [0], [1], [0, 0, 1, 1], [], []>} : vector<610x4xbf16>, vector<4x128xbf16>, vector<610x128xf32> -> vector<610x128xf32>
    %42 = arith.addf %36, %41 : vector<610x128xf32>
    %c37 = arith.constant 37 : index
    %c0_31 = arith.constant 0 : index
    %43 = vector.load %arg1[%c37, %c0_31] : memref<648x4xf32, #tpu.memory_space<vmem>>, vector<610x4xf32>
    %44 = arith.truncf %43 : vector<610x4xf32> to vector<610x4xbf16>
    %c7 = arith.constant 7 : index
    %c0_32 = arith.constant 0 : index
    %c0_33 = arith.constant 0 : index
    %45 = vector.load %arg2[%c7, %c0_32, %c0_33] : memref<9x4x128xbf16, #tpu.memory_space<vmem>>, vector<1x4x128xbf16>
    %46 = vector.shape_cast %45 : vector<1x4x128xbf16> to vector<4x128xbf16>
    %cst_34 = arith.constant dense<0.000000e+00> : vector<610x128xf32>
    %47 = tpu.matmul %44, %46, %cst_34 {dimension_numbers = #tpu.dot_dimension_numbers<[1], [0], [0], [1], [0, 0, 1, 1], [], []>} : vector<610x4xbf16>, vector<4x128xbf16>, vector<610x128xf32> -> vector<610x128xf32>
    %48 = arith.addf %42, %47 : vector<610x128xf32>
    %c38 = arith.constant 38 : index
    %c0_35 = arith.constant 0 : index
    %49 = vector.load %arg1[%c38, %c0_35] : memref<648x4xf32, #tpu.memory_space<vmem>>, vector<610x4xf32>
    %50 = arith.truncf %49 : vector<610x4xf32> to vector<610x4xbf16>
    %c8 = arith.constant 8 : index
    %c0_36 = arith.constant 0 : index
    %c0_37 = arith.constant 0 : index
    %51 = vector.load %arg2[%c8, %c0_36, %c0_37] : memref<9x4x128xbf16, #tpu.memory_space<vmem>>, vector<1x4x128xbf16>
    %52 = vector.shape_cast %51 : vector<1x4x128xbf16> to vector<4x128xbf16>
    %cst_38 = arith.constant dense<0.000000e+00> : vector<610x128xf32>
    %53 = tpu.matmul %50, %52, %cst_38 {dimension_numbers = #tpu.dot_dimension_numbers<[1], [0], [0], [1], [0, 0, 1, 1], [], []>} : vector<610x4xbf16>, vector<4x128xbf16>, vector<610x128xf32> -> vector<610x128xf32>
    %54 = arith.addf %48, %53 : vector<610x128xf32>
    %c0_39 = arith.constant 0 : index
    %c0_40 = arith.constant 0 : index
    %55 = vector.load %arg3[%c0_39, %c0_40] : memref<1x128xf32, #tpu.memory_space<vmem>>, vector<1x128xf32>
    %56 = vector.broadcast %55 : vector<1x128xf32> to vector<610x128xf32>
    %57 = arith.addf %54, %56 : vector<610x128xf32>
    %cst_41 = arith.constant 0.000000e+00 : f32
    %58 = vector.broadcast %cst_41 : f32 to vector<610x128xf32>
    %59 = arith.maximumf %57, %58 : vector<610x128xf32>
    %c0_42 = arith.constant 0 : index
    %c0_43 = arith.constant 0 : index
    %60 = vector.load %arg4[%c0_42, %c0_43] : memref<2x610xf32, #tpu.memory_space<vmem>>, vector<2x610xf32>
    %cst_44 = arith.constant dense<0.000000e+00> : vector<2x128xf32>
    %61 = tpu.matmul %60, %59, %cst_44 {dimension_numbers = #tpu.dot_dimension_numbers<[1], [0], [0], [1], [0, 0, 1, 1], [], []>} : vector<2x610xf32>, vector<610x128xf32>, vector<2x128xf32> -> vector<2x128xf32>
    %62 = arith.truncf %61 : vector<2x128xf32> to vector<2x128xbf16>
    %c0_45 = arith.constant 0 : index
    %c0_46 = arith.constant 0 : index
    %63 = vector.load %arg5[%c0_45, %c0_46] : memref<128x128xbf16, #tpu.memory_space<vmem>>, vector<128x128xbf16>
    %cst_47 = arith.constant dense<0.000000e+00> : vector<2x128xf32>
    %64 = tpu.matmul %62, %63, %cst_47 {dimension_numbers = #tpu.dot_dimension_numbers<[1], [0], [0], [1], [0, 0, 1, 1], [], []>} : vector<2x128xbf16>, vector<128x128xbf16>, vector<2x128xf32> -> vector<2x128xf32>
    %c0_48 = arith.constant 0 : index
    %c0_49 = arith.constant 0 : index
    %65 = vector.load %arg6[%c0_48, %c0_49] : memref<1x128xf32, #tpu.memory_space<vmem>>, vector<1x128xf32>
    %66 = vector.broadcast %65 : vector<1x128xf32> to vector<2x128xf32>
    %67 = arith.addf %64, %66 : vector<2x128xf32>
    %c0_50 = arith.constant 0 : index
    %c0_51 = arith.constant 0 : index
    %68 = vector.load %arg7[%c0_50, %c0_51] : memref<2x128xf32, #tpu.memory_space<vmem>>, vector<2x128xf32>
    tpu.vector_store %arg7[%c0_50, %c0_51], %67 {strides = array<i32>} : memref<2x128xf32, #tpu.memory_space<vmem>>, vector<2x128xf32>,
    return
  }
  func.func @transform_0(%arg0: i32) -> (i32, i32) {
    %c0_i32 = arith.constant 0 : i32
    %c0_i32_0 = arith.constant 0 : i32
    %c0_i32_1 = arith.constant 0 : i32
    return %c0_i32, %c0_i32_0 : i32, i32
  }
  func.func @transform_1(%arg0: i32) -> (i32, i32, i32) {
    %c0_i32 = arith.constant 0 : i32
    %c0_i32_0 = arith.constant 0 : i32
    %c0_i32_1 = arith.constant 0 : i32
    %c0_i32_2 = arith.constant 0 : i32
    return %c0_i32, %c0_i32_0, %c0_i32_1 : i32, i32, i32
  }
  func.func @transform_2(%arg0: i32) -> (i32, i32) {
    %c0_i32 = arith.constant 0 : i32
    %c0_i32_0 = arith.constant 0 : i32
    %c0_i32_1 = arith.constant 0 : i32
    return %c0_i32, %c0_i32_0 : i32, i32
  }
  func.func @transform_3(%arg0: i32) -> (i32, i32) {
    %c0_i32 = arith.constant 0 : i32
    %c0_i32_0 = arith.constant 0 : i32
    %c0_i32_1 = arith.constant 0 : i32
    return %c0_i32, %c0_i32_0 : i32, i32
  }
  func.func @transform_4(%arg0: i32) -> (i32, i32) {
    %c0_i32 = arith.constant 0 : i32
    %c0_i32_0 = arith.constant 0 : i32
    %c0_i32_1 = arith.constant 0 : i32
    return %c0_i32, %c0_i32_0 : i32, i32
  }
  func.func @transform_5(%arg0: i32) -> (i32, i32) {
    %c0_i32 = arith.constant 0 : i32
    %c0_i32_0 = arith.constant 0 : i32
    %c0_i32_1 = arith.constant 0 : i32
    return %c0_i32, %c0_i32_0 : i32, i32
  }
  func.func @transform_6(%arg0: i32) -> (i32, i32) {
    %c0_i32 = arith.constant 0 : i32
    %c0_i32_0 = arith.constant 0 : i32
    %c0_i32_1 = arith.constant 0 : i32
    return %c0_i32, %c0_i32_0 : i32, i32
  }
}

</mosaic_0001>

<llo_original>
// kernel: holistic_forward.1
$region0: #{holistic_forward.1}
  #allocation0 [shape = 'u32[]', space=smem, size = 0x4, offset = 0x4, fixed_abs, tag = 'smem constant byte address 0x4 - core index']
  #allocation1 [shape = 'u32[144,128]{1,0:T(1,128)}', space=vmem, size = 0x12000, scoped, tag = 'internal scratch']
  %s0 = inlined_call_operand.vmem [shape: f32[648,4], index: 0, kind: input, shape index: {}]
  %s1 = inlined_call_operand.vmem [shape: bf16[9,4,128], index: 1, kind: input, shape index: {}]
  %s2 = inlined_call_operand.vmem [shape: f32[1,128], index: 2, kind: input, shape index: {}]
  %s3 = inlined_call_operand.vmem [shape: f32[2,610], index: 3, kind: input, shape index: {}]
  %s4 = inlined_call_operand.vmem [shape: bf16[128,128], index: 4, kind: input, shape index: {}]
  %s5 = inlined_call_operand.vmem [shape: f32[1,128], index: 5, kind: input, shape index: {}]
  %s6 = inlined_call_operand.hbm [shape: f32[2,128], index: 6, kind: output, shape index: {}]
  %s7 = sld [smem:[#allocation0]]
  $region34: #{holistic_forward.1} parent=0
    _
  %s9 = ssub.s32 1, %s7
  %s10 = scalar_select 0, %s9, %s7
  $region1: #{holistic_forward.1} parent=0
    #allocation2 [shape = 'u8[1024]{0}', space=vmem, size = 0x400, scoped, tag = 'output window, operand 0, single buffered']
    #allocation3 [shape = 's32[1]{0}', space=sflag, size = 0x4, scoped, tag = 'scoped memory for holistic_forward.1']
    %11 = vsyncpa [#allocation3], 0
    // Predicated region
    $region2: #{holistic_forward.1} parent=1 // pred_check
      _
    $region3: #{holistic_forward.1} parent=1 // pred_check_branch
      %13 = sbr.rel (0) target = $region5
    $region4: #{holistic_forward.1} parent=1 // pred_region
      _
    $region5: #{holistic_forward.1} parent=1 // pred_fallthru
      _
    // Predicated region
    $region6: #{holistic_forward.1} parent=1 // pred_check
      _
    $region7: #{holistic_forward.1} parent=1 // pred_check_branch
      %15 = sbr.rel (0) target = $region9
    $region8: #{holistic_forward.1} parent=1 // pred_region
      _
    $region9: #{holistic_forward.1} parent=1 // pred_fallthru
      _
    // Predicated region
    $region10: #{holistic_forward.1} parent=1 // pred_check
      _
    $region11: #{holistic_forward.1} parent=1 // pred_check_branch
      %17 = sbr.rel (0) target = $region13
    $region12: #{holistic_forward.1} parent=1 // pred_region
      _
    $region13: #{holistic_forward.1} parent=1 // pred_fallthru
      _
    // Predicated region
    $region14: #{holistic_forward.1} parent=1 // pred_check
      _
    $region15: #{holistic_forward.1} parent=1 // pred_check_branch
      %19 = sbr.rel (0) target = $region17
    $region16: #{holistic_forward.1} parent=1 // pred_region
      _
    $region17: #{holistic_forward.1} parent=1 // pred_fallthru
      _
    // Predicated region
    $region18: #{holistic_forward.1} parent=1 // pred_check
      _
    $region19: #{holistic_forward.1} parent=1 // pred_check_branch
      %21 = sbr.rel (0) target = $region21
    $region20: #{holistic_forward.1} parent=1 // pred_region
      _
    $region21: #{holistic_forward.1} parent=1 // pred_fallthru
      _
    // Predicated region
    $region22: #{holistic_forward.1} parent=1 // pred_check
      _
    $region23: #{holistic_forward.1} parent=1 // pred_check_branch
      %23 = sbr.rel (0) target = $region25
    $region24: #{holistic_forward.1} parent=1 // pred_region
      _
    $region25: #{holistic_forward.1} parent=1 // pred_fallthru
      _
    %v25 = vld [vmem:[%s0] sm:$0xff]
    %v26 = vld [vmem:[%s0 + $0x8] sm:$0xff]
    %v27 = vld [vmem:[%s0 + $0x10] sm:$0xff]
    %v28 = vld [vmem:[%s0 + $0x18] sm:$0xff]
    %v29 = vld [vmem:[%s0 + $0x20] sm:$0xff]
    %v30 = vld [vmem:[%s0 + $0x28] sm:$0xff]
    %v31 = vld [vmem:[%s0 + $0x30] sm:$0xff]
    %v32 = vld [vmem:[%s0 + $0x38] sm:$0xff]
    %v33 = vld [vmem:[%s0 + $0x40] sm:$0xff]
    %v34 = vld [vmem:[%s0 + $0x48] sm:$0xff]
    %v35 = vld [vmem:[%s0 + $0x50] sm:$0xff]
    %v36 = vld [vmem:[%s0 + $0x58] sm:$0xff]
    %v37 = vld [vmem:[%s0 + $0x60] sm:$0xff]
    %v38 = vld [vmem:[%s0 + $0x68] sm:$0xff]
    %v39 = vld [vmem:[%s0 + $0x70] sm:$0xff]
    %v40 = vld [vmem:[%s0 + $0x78] sm:$0xff]
    %v41 = vld [vmem:[%s0 + $0x80] sm:$0xff]
    %v42 = vld [vmem:[%s0 + $0x88] sm:$0xff]
    %v43 = vld [vmem:[%s0 + $0x90] sm:$0xff]
    %v44 = vld [vmem:[%s0 + $0x98] sm:$0xff]
    %v45 = vld [vmem:[%s0 + $0xa0] sm:$0xff]
    %v46 = vld [vmem:[%s0 + $0xa8] sm:$0xff]
    %v47 = vld [vmem:[%s0 + $0xb0] sm:$0xff]
    %v48 = vld [vmem:[%s0 + $0xb8] sm:$0xff]
    %v49 = vld [vmem:[%s0 + $0xc0] sm:$0xff]
    %v50 = vld [vmem:[%s0 + $0xc8] sm:$0xff]
    %v51 = vld [vmem:[%s0 + $0xd0] sm:$0xff]
    %v52 = vld [vmem:[%s0 + $0xd8] sm:$0xff]
    %v53 = vld [vmem:[%s0 + $0xe0] sm:$0xff]
    %v54 = vld [vmem:[%s0 + $0xe8] sm:$0xff]
    %v55 = vld [vmem:[%s0 + $0xf0] sm:$0xff]
    %v56 = vld [vmem:[%s0 + $0xf8] sm:$0xff]
    %v57 = vld [vmem:[%s0 + $0x100] sm:$0xff]
    %v58 = vld [vmem:[%s0 + $0x108] sm:$0xff]
    %v59 = vld [vmem:[%s0 + $0x110] sm:$0xff]
    %v60 = vld [vmem:[%s0 + $0x118] sm:$0xff]
    %v61 = vld [vmem:[%s0 + $0x120] sm:$0xff]
    %v62 = vld [vmem:[%s0 + $0x128] sm:$0xff]
    %v63 = vld [vmem:[%s0 + $0x130] sm:$0xff]
    %v64 = vld [vmem:[%s0 + $0x138] sm:$0xff]
    %v65 = vld [vmem:[%s0 + $0x140] sm:$0xff]
    %v66 = vld [vmem:[%s0 + $0x148] sm:$0xff]
    %v67 = vld [vmem:[%s0 + $0x150] sm:$0xff]
    %v68 = vld [vmem:[%s0 + $0x158] sm:$0xff]
    %v69 = vld [vmem:[%s0 + $0x160] sm:$0xff]
    %v70 = vld [vmem:[%s0 + $0x168] sm:$0xff]
    %v71 = vld [vmem:[%s0 + $0x170] sm:$0xff]
    %v72 = vld [vmem:[%s0 + $0x178] sm:$0xff]
    %v73 = vld [vmem:[%s0 + $0x180] sm:$0xff]
    %v74 = vld [vmem:[%s0 + $0x188] sm:$0xff]
    %v75 = vld [vmem:[%s0 + $0x190] sm:$0xff]
    %v76 = vld [vmem:[%s0 + $0x198] sm:$0xff]
    %v77 = vld [vmem:[%s0 + $0x1a0] sm:$0xff]
    %v78 = vld [vmem:[%s0 + $0x1a8] sm:$0xff]
    %v79 = vld [vmem:[%s0 + $0x1b0] sm:$0xff]
    %v80 = vld [vmem:[%s0 + $0x1b8] sm:$0xff]
    %v81 = vld [vmem:[%s0 + $0x1c0] sm:$0xff]
    %v82 = vld [vmem:[%s0 + $0x1c8] sm:$0xff]
    %v83 = vld [vmem:[%s0 + $0x1d0] sm:$0xff]
    %v84 = vld [vmem:[%s0 + $0x1d8] sm:$0xff]
    %v85 = vld [vmem:[%s0 + $0x1e0] sm:$0xff]
    %v86 = vld [vmem:[%s0 + $0x1e8] sm:$0xff]
    %v87 = vld [vmem:[%s0 + $0x1f0] sm:$0xff]
    %v88 = vld [vmem:[%s0 + $0x1f8] sm:$0xff]
    %v89 = vld [vmem:[%s0 + $0x200] sm:$0xff]
    %v90 = vld [vmem:[%s0 + $0x208] sm:$0xff]
    %v91 = vld [vmem:[%s0 + $0x210] sm:$0xff]
    %v92 = vld [vmem:[%s0 + $0x218] sm:$0xff]
    %v93 = vld [vmem:[%s0 + $0x220] sm:$0xff]
    %v94 = vld [vmem:[%s0 + $0x228] sm:$0xff]
    %v95 = vld [vmem:[%s0 + $0x230] sm:$0xff]
    %v96 = vld [vmem:[%s0 + $0x238] sm:$0xff]
    %v97 = vld [vmem:[%s0 + $0x240] sm:$0xff]
    %v98 = vld [vmem:[%s0 + $0x248] sm:$0xff]
    %v99 = vld [vmem:[%s0 + $0x250] sm:$0xff]
    %v100 = vld [vmem:[%s0 + $0x258] sm:$0xff]
    %v101 = vld [vmem:[%s0 + $0x260] sm:$0x3]
    %v102 = vpack.c.bf16 %v26, %v25
    %v103 = vpack.c.bf16 %v28, %v27
    %v104 = vpack.c.bf16 %v30, %v29
    %v105 = vpack.c.bf16 %v32, %v31
    %v106 = vpack.c.bf16 %v34, %v33
    %v107 = vpack.c.bf16 %v36, %v35
    %v108 = vpack.c.bf16 %v38, %v37
    %v109 = vpack.c.bf16 %v40, %v39
    %v110 = vpack.c.bf16 %v42, %v41
    %v111 = vpack.c.bf16 %v44, %v43
    %v112 = vpack.c.bf16 %v46, %v45
    %v113 = vpack.c.bf16 %v48, %v47
    %v114 = vpack.c.bf16 %v50, %v49
    %v115 = vpack.c.bf16 %v52, %v51
    %v116 = vpack.c.bf16 %v54, %v53
    %v117 = vpack.c.bf16 %v56, %v55
    %v118 = vpack.c.bf16 %v58, %v57
    %v119 = vpack.c.bf16 %v60, %v59
    %v120 = vpack.c.bf16 %v62, %v61
    %v121 = vpack.c.bf16 %v64, %v63
    %v122 = vpack.c.bf16 %v66, %v65
    %v123 = vpack.c.bf16 %v68, %v67
    %v124 = vpack.c.bf16 %v70, %v69
    %v125 = vpack.c.bf16 %v72, %v71
    %v126 = vpack.c.bf16 %v74, %v73
    %v127 = vpack.c.bf16 %v76, %v75
    %v128 = vpack.c.bf16 %v78, %v77
    %v129 = vpack.c.bf16 %v80, %v79
    %v130 = vpack.c.bf16 %v82, %v81
    %v131 = vpack.c.bf16 %v84, %v83
    %v132 = vpack.c.bf16 %v86, %v85
    %v133 = vpack.c.bf16 %v88, %v87
    %v134 = vpack.c.bf16 %v90, %v89
    %v135 = vpack.c.bf16 %v92, %v91
    %v136 = vpack.c.bf16 %v94, %v93
    %v137 = vpack.c.bf16 %v96, %v95
    %v138 = vpack.c.bf16 %v98, %v97
    %v139 = vpack.c.bf16 %v100, %v99
    %v140 = vpack.c.bf16 %v101, %v101
    %v141 = vld [vmem:[%s1] sm:$0x3]
    %v142 = vld [vmem:[%s0 + $0x1] sm:$0xff]
    %v143 = vld [vmem:[%s0 + $0x9] sm:$0xff]
    %v144 = vld [vmem:[%s0 + $0x11] sm:$0xff]
    %v145 = vld [vmem:[%s0 + $0x19] sm:$0xff]
    %v146 = vld [vmem:[%s0 + $0x21] sm:$0xff]
    %v147 = vld [vmem:[%s0 + $0x29] sm:$0xff]
    %v148 = vld [vmem:[%s0 + $0x31] sm:$0xff]
    %v149 = vld [vmem:[%s0 + $0x39] sm:$0xff]
    %v150 = vld [vmem:[%s0 + $0x41] sm:$0xff]
    %v151 = vld [vmem:[%s0 + $0x49] sm:$0xff]
    %v152 = vld [vmem:[%s0 + $0x51] sm:$0xff]
    %v153 = vld [vmem:[%s0 + $0x59] sm:$0xff]
    %v154 = vld [vmem:[%s0 + $0x61] sm:$0xff]
    %v155 = vld [vmem:[%s0 + $0x69] sm:$0xff]
    %v156 = vld [vmem:[%s0 + $0x71] sm:$0xff]
    %v157 = vld [vmem:[%s0 + $0x79] sm:$0xff]
    %v158 = vld [vmem:[%s0 + $0x81] sm:$0xff]
    %v159 = vld [vmem:[%s0 + $0x89] sm:$0xff]
    %v160 = vld [vmem:[%s0 + $0x91] sm:$0xff]
    %v161 = vld [vmem:[%s0 + $0x99] sm:$0xff]
    %v162 = vld [vmem:[%s0 + $0xa1] sm:$0xff]
    %v163 = vld [vmem:[%s0 + $0xa9] sm:$0xff]
    %v164 = vld [vmem:[%s0 + $0xb1] sm:$0xff]
    %v165 = vld [vmem:[%s0 + $0xb9] sm:$0xff]
    %v166 = vld [vmem:[%s0 + $0xc1] sm:$0xff]
    %v167 = vld [vmem:[%s0 + $0xc9] sm:$0xff]
    %v168 = vld [vmem:[%s0 + $0xd1] sm:$0xff]
    %v169 = vld [vmem:[%s0 + $0xd9] sm:$0xff]
    %v170 = vld [vmem:[%s0 + $0xe1] sm:$0xff]
    %v171 = vld [vmem:[%s0 + $0xe9] sm:$0xff]
    %v172 = vld [vmem:[%s0 + $0xf1] sm:$0xff]
    %v173 = vld [vmem:[%s0 + $0xf9] sm:$0xff]
    %v174 = vld [vmem:[%s0 + $0x101] sm:$0xff]
    %v175 = vld [vmem:[%s0 + $0x109] sm:$0xff]
    %v176 = vld [vmem:[%s0 + $0x111] sm:$0xff]
    %v177 = vld [vmem:[%s0 + $0x119] sm:$0xff]
    %v178 = vld [vmem:[%s0 + $0x121] sm:$0xff]
    %v179 = vld [vmem:[%s0 + $0x129] sm:$0xff]
    %v180 = vld [vmem:[%s0 + $0x131] sm:$0xff]
    %v181 = vld [vmem:[%s0 + $0x139] sm:$0xff]
    %v182 = vld [vmem:[%s0 + $0x141] sm:$0xff]
    %v183 = vld [vmem:[%s0 + $0x149] sm:$0xff]
    %v184 = vld [vmem:[%s0 + $0x151] sm:$0xff]
    %v185 = vld [vmem:[%s0 + $0x159] sm:$0xff]
    %v186 = vld [vmem:[%s0 + $0x161] sm:$0xff]
    %v187 = vld [vmem:[%s0 + $0x169] sm:$0xff]
    %v188 = vld [vmem:[%s0 + $0x171] sm:$0xff]
    %v189 = vld [vmem:[%s0 + $0x179] sm:$0xff]
    %v190 = vld [vmem:[%s0 + $0x181] sm:$0xff]
    %v191 = vld [vmem:[%s0 + $0x189] sm:$0xff]
    %v192 = vld [vmem:[%s0 + $0x191] sm:$0xff]
    %v193 = vld [vmem:[%s0 + $0x199] sm:$0xff]
    %v194 = vld [vmem:[%s0 + $0x1a1] sm:$0xff]
    %v195 = vld [vmem:[%s0 + $0x1a9] sm:$0xff]
    %v196 = vld [vmem:[%s0 + $0x1b1] sm:$0xff]
    %v197 = vld [vmem:[%s0 + $0x1b9] sm:$0xff]
    %v198 = vld [vmem:[%s0 + $0x1c1] sm:$0xff]
    %v199 = vld [vmem:[%s0 + $0x1c9] sm:$0xff]
    %v200 = vld [vmem:[%s0 + $0x1d1] sm:$0xff]
    %v201 = vld [vmem:[%s0 + $0x1d9] sm:$0xff]
    %v202 = vld [vmem:[%s0 + $0x1e1] sm:$0xff]
    %v203 = vld [vmem:[%s0 + $0x1e9] sm:$0xff]
    %v204 = vld [vmem:[%s0 + $0x1f1] sm:$0xff]
    %v205 = vld [vmem:[%s0 + $0x1f9] sm:$0xff]
    %v206 = vld [vmem:[%s0 + $0x201] sm:$0xff]
    %v207 = vld [vmem:[%s0 + $0x209] sm:$0xff]
    %v208 = vld [vmem:[%s0 + $0x211] sm:$0xff]
    %v209 = vld [vmem:[%s0 + $0x219] sm:$0xff]
    %v210 = vld [vmem:[%s0 + $0x221] sm:$0xff]
    %v211 = vld [vmem:[%s0 + $0x229] sm:$0xff]
    %v212 = vld [vmem:[%s0 + $0x231] sm:$0xff]
    %v213 = vld [vmem:[%s0 + $0x239] sm:$0xff]
    %v214 = vld [vmem:[%s0 + $0x241] sm:$0xff]
    %v215 = vld [vmem:[%s0 + $0x249] sm:$0xff]
    %v216 = vld [vmem:[%s0 + $0x251] sm:$0xff]
    %v217 = vld [vmem:[%s0 + $0x259] sm:$0xff]
    %v218 = vld [vmem:[%s0 + $0x261] sm:$0x3]
    %v219 = vpack.c.bf16 %v143, %v142
    %v220 = vpack.c.bf16 %v145, %v144
    %v221 = vpack.c.bf16 %v147, %v146
    %v222 = vpack.c.bf16 %v149, %v148
    %v223 = vpack.c.bf16 %v151, %v150
    %v224 = vpack.c.bf16 %v153, %v152
    %v225 = vpack.c.bf16 %v155, %v154
    %v226 = vpack.c.bf16 %v157, %v156
    %v227 = vpack.c.bf16 %v159, %v158
    %v228 = vpack.c.bf16 %v161, %v160
    %v229 = vpack.c.bf16 %v163, %v162
    %v230 = vpack.c.bf16 %v165, %v164
    %v231 = vpack.c.bf16 %v167, %v166
    %v232 = vpack.c.bf16 %v169, %v168
    %v233 = vpack.c.bf16 %v171, %v170
    %v234 = vpack.c.bf16 %v173, %v172
    %v235 = vpack.c.bf16 %v175, %v174
    %v236 = vpack.c.bf16 %v177, %v176
    %v237 = vpack.c.bf16 %v179, %v178
    %v238 = vpack.c.bf16 %v181, %v180
    %v239 = vpack.c.bf16 %v183, %v182
    %v240 = vpack.c.bf16 %v185, %v184
    %v241 = vpack.c.bf16 %v187, %v186
    %v242 = vpack.c.bf16 %v189, %v188
    %v243 = vpack.c.bf16 %v191, %v190
    %v244 = vpack.c.bf16 %v193, %v192
    %v245 = vpack.c.bf16 %v195, %v194
    %v246 = vpack.c.bf16 %v197, %v196
    %v247 = vpack.c.bf16 %v199, %v198
    %v248 = vpack.c.bf16 %v201, %v200
    %v249 = vpack.c.bf16 %v203, %v202
    %v250 = vpack.c.bf16 %v205, %v204
    %v251 = vpack.c.bf16 %v207, %v206
    %v252 = vpack.c.bf16 %v209, %v208
    %v253 = vpack.c.bf16 %v211, %v210
    %v254 = vpack.c.bf16 %v213, %v212
    %v255 = vpack.c.bf16 %v215, %v214
    %v256 = vpack.c.bf16 %v217, %v216
    %v257 = vpack.c.bf16 %v218, %v218
    %s258 = scalar_lea.vmem %s1, 2
    %v259 = vld [vmem:[%s258] sm:$0x3]
    %vm260 = vcmask 31744
    %v262 = vsel %vm260, %v219, 0
    %v265 = vsel %vm260, %v220, 0
    %v268 = vsel %vm260, %v221, 0
    %v271 = vsel %vm260, %v222, 0
    %v274 = vsel %vm260, %v223, 0
    %v277 = vsel %vm260, %v224, 0
    %v280 = vsel %vm260, %v225, 0
    %v283 = vsel %vm260, %v226, 0
    %v286 = vsel %vm260, %v227, 0
    %v289 = vsel %vm260, %v228, 0
    %v292 = vsel %vm260, %v229, 0
    %v295 = vsel %vm260, %v230, 0
    %v298 = vsel %vm260, %v231, 0
    %v301 = vsel %vm260, %v232, 0
    %v304 = vsel %vm260, %v233, 0
    %v307 = vsel %vm260, %v234, 0
    %v310 = vsel %vm260, %v235, 0
    %v313 = vsel %vm260, %v236, 0
    %v316 = vsel %vm260, %v237, 0
    %v319 = vsel %vm260, %v238, 0
    %v322 = vsel %vm260, %v239, 0
    %v325 = vsel %vm260, %v240, 0
    %v328 = vsel %vm260, %v241, 0
    %v331 = vsel %vm260, %v242, 0
    %v334 = vsel %vm260, %v243, 0
    %v337 = vsel %vm260, %v244, 0
    %v340 = vsel %vm260, %v245, 0
    %v343 = vsel %vm260, %v246, 0
    %v346 = vsel %vm260, %v247, 0
    %v349 = vsel %vm260, %v248, 0
    %v352 = vsel %vm260, %v249, 0
    %v355 = vsel %vm260, %v250, 0
    %v358 = vsel %vm260, %v251, 0
    %v361 = vsel %vm260, %v252, 0
    %v364 = vsel %vm260, %v253, 0
    %v367 = vsel %vm260, %v254, 0
    %v370 = vsel %vm260, %v255, 0
    %v373 = vsel %vm260, %v256, 0
    %v376 = vsel %vm260, %v257, 0
    %vm378 = vcmask 1041408
    %v380 = vsel %vm378, %v259, 0
    %382 = vmatprep.subr.bf16.mxu0 0
    %383 = vmatpush1.bf16.msra.mxu0 %v380
    %384 = vmatprep.subr.bf16.mxu0 0
    %385 = vmatpush1.bf16.msra.mxu0 0
    %386 = vmatprep.subr.bf16.mxu0 0
    %387 = vmatpush1.bf16.msra.mxu0 0
    %388 = vmatprep.subr.bf16.mxu0 0
    %389 = vmatpush1.bf16.msra.mxu0 0
    %390 = vmatprep.subr.bf16.mxu0 0
    %391 = vmatpush1.bf16.msra.mxu0 0
    %392 = vmatprep.subr.bf16.mxu0 0
    %393 = vmatpush1.bf16.msra.mxu0 0
    %394 = vmatprep.subr.bf16.mxu0 0
    %395 = vmatpush1.bf16.msra.mxu0 0
    %396 = vmatprep.subr.bf16.mxu0 0
    %397 = vmatpush1.bf16.msra.mxu0 0
    %398 = vmatprep.subr.bf16.mxu0 0
    %399 = vmatpush1.bf16.msra.mxu0 0
    %400 = vmatprep.subr.bf16.mxu0 0
    %401 = vmatpush1.bf16.msra.mxu0 0
    %402 = vmatprep.subr.bf16.mxu0 0
    %403 = vmatpush1.bf16.msra.mxu0 0
    %404 = vmatprep.subr.bf16.mxu0 0
    %405 = vmatpush1.bf16.msra.mxu0 0
    %406 = vmatprep.subr.bf16.mxu0 0
    %407 = vmatpush1.bf16.msra.mxu0 0
    %408 = vmatprep.subr.bf16.mxu0 0
    %409 = vmatpush1.bf16.msra.mxu0 0
    %410 = vmatprep.subr.bf16.mxu0 0
    %411 = vmatpush1.bf16.msra.mxu0 0
    %412 = vmatprep.subr.bf16.mxu0 0
    %413 = vmatpush1.bf16.msra.mxu0 0
    %414 = vmatprep.mubr.bf16.mxu0 0
    %415 = vmatmul.mubr.bf16.gmra.mrb[0].mxu0 %v262
    %v416 = vpop.f32.mrb[0].mxu0
    %v417 = vadd.f32 0.0, %v416
    %v418 = vpop.f32.mrb[0].mxu0
    %v419 = vpop.f32.mrb[0].mxu0
    %v420 = vadd.f32 0.0, %v419
    %v421 = vpop.f32.mrb[0].mxu0
    %422 = vmatprep.mubr.bf16.mxu0 0
    %423 = vmatmul.mubr.bf16.gmra.mrb[0].mxu0 %v265
    %v424 = vpop.f32.mrb[0].mxu0
    %v425 = vadd.f32 0.0, %v424
    %v426 = vpop.f32.mrb[0].mxu0
    %v427 = vpop.f32.mrb[0].mxu0
    %v428 = vadd.f32 0.0, %v427
    %v429 = vpop.f32.mrb[0].mxu0
    %430 = vmatprep.mubr.bf16.mxu0 0
    %431 = vmatmul.mubr.bf16.gmra.mrb[0].mxu0 %v268
    %v432 = vpop.f32.mrb[0].mxu0
    %v433 = vadd.f32 0.0, %v432
    %v434 = vpop.f32.mrb[0].mxu0
    %v435 = vpop.f32.mrb[0].mxu0
    %v436 = vadd.f32 0.0, %v435
    %v437 = vpop.f32.mrb[0].mxu0
    %438 = vmatprep.mubr.bf16.mxu0 0
    %439 = vmatmul.mubr.bf16.gmra.mrb[0].mxu0 %v271
    %v440 = vpop.f32.mrb[0].mxu0
    %v441 = vadd.f32 0.0, %v440
    %v442 = vpop.f32.mrb[0].mxu0
    %v443 = vpop.f32.mrb[0].mxu0
    %v444 = vadd.f32 0.0, %v443
    %v445 = vpop.f32.mrb[0].mxu0
    %446 = vmatprep.mubr.bf16.mxu0 0
    %447 = vmatmul.mubr.bf16.gmra.mrb[0].mxu0 %v274
    %v448 = vpop.f32.mrb[0].mxu0
    %v449 = vadd.f32 0.0, %v448
    %v450 = vpop.f32.mrb[0].mxu0
    %v451 = vpop.f32.mrb[0].mxu0
    %v452 = vadd.f32 0.0, %v451
    %v453 = vpop.f32.mrb[0].mxu0
    %454 = vmatprep.mubr.bf16.mxu0 0
    %455 = vmatmul.mubr.bf16.gmra.mrb[0].mxu0 %v277
    %v456 = vpop.f32.mrb[0].mxu0
    %v457 = vadd.f32 0.0, %v456
    %v458 = vpop.f32.mrb[0].mxu0
    %v459 = vpop.f32.mrb[0].mxu0
    %v460 = vadd.f32 0.0, %v459
    %v461 = vpop.f32.mrb[0].mxu0
    %462 = vmatprep.mubr.bf16.mxu0 0
    %463 = vmatmul.mubr.bf16.gmra.mrb[0].mxu0 %v280
    %v464 = vpop.f32.mrb[0].mxu0
    %v465 = vadd.f32 0.0, %v464
    %v466 = vpop.f32.mrb[0].mxu0
    %v467 = vpop.f32.mrb[0].mxu0
    %v468 = vadd.f32 0.0, %v467
    %v469 = vpop.f32.mrb[0].mxu0
    %470 = vmatprep.mubr.bf16.mxu0 0
    %471 = vmatmul.mubr.bf16.gmra.mrb[0].mxu0 %v283
    %v472 = vpop.f32.mrb[0].mxu0
    %v473 = vadd.f32 0.0, %v472
    %v474 = vpop.f32.mrb[0].mxu0
    %v475 = vpop.f32.mrb[0].mxu0
    %v476 = vadd.f32 0.0, %v475
    %v477 = vpop.f32.mrb[0].mxu0
    %478 = vmatprep.mubr.bf16.mxu0 0
    %479 = vmatmul.mubr.bf16.gmra.mrb[0].mxu0 %v286
    %v480 = vpop.f32.mrb[0].mxu0
    %v481 = vadd.f32 0.0, %v480
    %v482 = vpop.f32.mrb[0].mxu0
    %v483 = vpop.f32.mrb[0].mxu0
    %v484 = vadd.f32 0.0, %v483
    %v485 = vpop.f32.mrb[0].mxu0
    %486 = vmatprep.mubr.bf16.mxu0 0
    %487 = vmatmul.mubr.bf16.gmra.mrb[0].mxu0 %v289
    %v488 = vpop.f32.mrb[0].mxu0
    %v489 = vadd.f32 0.0, %v488
    %v490 = vpop.f32.mrb[0].mxu0
    %v491 = vpop.f32.mrb[0].mxu0
    %v492 = vadd.f32 0.0, %v491
    %v493 = vpop.f32.mrb[0].mxu0
    %494 = vmatprep.mubr.bf16.mxu0 0
    %495 = vmatmul.mubr.bf16.gmra.mrb[0].mxu0 %v292
    %v496 = vpop.f32.mrb[0].mxu0
    %v497 = vadd.f32 0.0, %v496
    %v498 = vpop.f32.mrb[0].mxu0
    %v499 = vpop.f32.mrb[0].mxu0
    %v500 = vadd.f32 0.0, %v499
    %v501 = vpop.f32.mrb[0].mxu0
    %502 = vmatprep.mubr.bf16.mxu0 0
    %503 = vmatmul.mubr.bf16.gmra.mrb[0].mxu0 %v295
    %v504 = vpop.f32.mrb[0].mxu0
    %v505 = vadd.f32 0.0, %v504
    %v506 = vpop.f32.mrb[0].mxu0
    %v507 = vpop.f32.mrb[0].mxu0
    %v508 = vadd.f32 0.0, %v507
    %v509 = vpop.f32.mrb[0].mxu0
    %510 = vmatprep.mubr.bf16.mxu0 0
    %511 = vmatmul.mubr.bf16.gmra.mrb[0].mxu0 %v298
    %v512 = vpop.f32.mrb[0].mxu0
    %v513 = vadd.f32 0.0, %v512
    %v514 = vpop.f32.mrb[0].mxu0
    %v515 = vpop.f32.mrb[0].mxu0
    %v516 = vadd.f32 0.0, %v515
    %v517 = vpop.f32.mrb[0].mxu0
    %518 = vmatprep.mubr.bf16.mxu0 0
    %519 = vmatmul.mubr.bf16.gmra.mrb[0].mxu0 %v301
    %v520 = vpop.f32.mrb[0].mxu0
    %v521 = vadd.f32 0.0, %v520
    %v522 = vpop.f32.mrb[0].mxu0
    %v523 = vpop.f32.mrb[0].mxu0
    %v524 = vadd.f32 0.0, %v523
    %v525 = vpop.f32.mrb[0].mxu0
    %526 = vmatprep.mubr.bf16.mxu0 0
    %527 = vmatmul.mubr.bf16.gmra.mrb[0].mxu0 %v304
    %v528 = vpop.f32.mrb[0].mxu0
    %v529 = vadd.f32 0.0, %v528
    %v530 = vpop.f32.mrb[0].mxu0
    %v531 = vpop.f32.mrb[0].mxu0
    %v532 = vadd.f32 0.0, %v531
    %v533 = vpop.f32.mrb[0].mxu0
    %534 = vmatprep.mubr.bf16.mxu0 0
    %535 = vmatmul.mubr.bf16.gmra.mrb[0].mxu0 %v307
    %v536 = vpop.f32.mrb[0].mxu0
    %v537 = vadd.f32 0.0, %v536
    %v538 = vpop.f32.mrb[0].mxu0
    %v539 = vpop.f32.mrb[0].mxu0
    %v540 = vadd.f32 0.0, %v539
    %v541 = vpop.f32.mrb[0].mxu0
    %542 = vmatprep.mubr.bf16.mxu0 0
    %543 = vmatmul.mubr.bf16.gmra.mrb[0].mxu0 %v310
    %v544 = vpop.f32.mrb[0].mxu0
    %v545 = vadd.f32 0.0, %v544
    %v546 = vpop.f32.mrb[0].mxu0
    %v547 = vpop.f32.mrb[0].mxu0
    %v548 = vadd.f32 0.0, %v547
    %v549 = vpop.f32.mrb[0].mxu0
    %550 = vmatprep.mubr.bf16.mxu0 0
    %551 = vmatmul.mubr.bf16.gmra.mrb[0].mxu0 %v313
    %v552 = vpop.f32.mrb[0].mxu0
    %v553 = vadd.f32 0.0, %v552
    %v554 = vpop.f32.mrb[0].mxu0
    %v555 = vpop.f32.mrb[0].mxu0
    %v556 = vadd.f32 0.0, %v555
    %v557 = vpop.f32.mrb[0].mxu0
    %558 = vmatprep.mubr.bf16.mxu0 0
    %559 = vmatmul.mubr.bf16.gmra.mrb[0].mxu0 %v316
    %v560 = vpop.f32.mrb[0].mxu0
    %v561 = vadd.f32 0.0, %v560
    %v562 = vpop.f32.mrb[0].mxu0
    %v563 = vpop.f32.mrb[0].mxu0
    %v564 = vadd.f32 0.0, %v563
    %v565 = vpop.f32.mrb[0].mxu0
    %566 = vmatprep.mubr.bf16.mxu0 0
    %567 = vmatmul.mubr.bf16.gmra.mrb[0].mxu0 %v319
    %v568 = vpop.f32.mrb[0].mxu0
    %v569 = vadd.f32 0.0, %v568
    %v570 = vpop.f32.mrb[0].mxu0
    %v571 = vpop.f32.mrb[0].mxu0
    %v572 = vadd.f32 0.0, %v571
    %v573 = vpop.f32.mrb[0].mxu0
    %574 = vmatprep.mubr.bf16.mxu0 0
    %575 = vmatmul.mubr.bf16.gmra.mrb[0].mxu0 %v322
    %v576 = vpop.f32.mrb[0].mxu0
    %v577 = vadd.f32 0.0, %v576
    %v578 = vpop.f32.mrb[0].mxu0
    %v579 = vpop.f32.mrb[0].mxu0
    %v580 = vadd.f32 0.0, %v579
    %v581 = vpop.f32.mrb[0].mxu0
    %582 = vmatprep.mubr.bf16.mxu0 0
    %583 = vmatmul.mubr.bf16.gmra.mrb[0].mxu0 %v325
    %v584 = vpop.f32.mrb[0].mxu0
    %v585 = vadd.f32 0.0, %v584
    %v586 = vpop.f32.mrb[0].mxu0
    %v587 = vpop.f32.mrb[0].mxu0
    %v588 = vadd.f32 0.0, %v587
    %v589 = vpop.f32.mrb[0].mxu0
    %590 = vmatprep.mubr.bf16.mxu0 0
    %591 = vmatmul.mubr.bf16.gmra.mrb[0].mxu0 %v328
    %v592 = vpop.f32.mrb[0].mxu0
    %v593 = vadd.f32 0.0, %v592
    %v594 = vpop.f32.mrb[0].mxu0
    %v595 = vpop.f32.mrb[0].mxu0
    %v596 = vadd.f32 0.0, %v595
    %v597 = vpop.f32.mrb[0].mxu0
    %598 = vmatprep.mubr.bf16.mxu0 0
    %599 = vmatmul.mubr.bf16.gmra.mrb[0].mxu0 %v331
    %v600 = vpop.f32.mrb[0].mxu0
    %v601 = vadd.f32 0.0, %v600
    %v602 = vpop.f32.mrb[0].mxu0
    %v603 = vpop.f32.mrb[0].mxu0
    %v604 = vadd.f32 0.0, %v603
    %v605 = vpop.f32.mrb[0].mxu0
    %606 = vmatprep.mubr.bf16.mxu0 0
    %607 = vmatmul.mubr.bf16.gmra.mrb[0].mxu0 %v334
    %v608 = vpop.f32.mrb[0].mxu0
    %v609 = vadd.f32 0.0, %v608
    %v610 = vpop.f32.mrb[0].mxu0
    %v611 = vpop.f32.mrb[0].mxu0
    %v612 = vadd.f32 0.0, %v611
    %v613 = vpop.f32.mrb[0].mxu0
    %614 = vmatprep.mubr.bf16.mxu0 0
    %615 = vmatmul.mubr.bf16.gmra.mrb[0].mxu0 %v337
    %v616 = vpop.f32.mrb[0].mxu0
    %v617 = vadd.f32 0.0, %v616
    %v618 = vpop.f32.mrb[0].mxu0
    %v619 = vpop.f32.mrb[0].mxu0
    %v620 = vadd.f32 0.0, %v619
    %v621 = vpop.f32.mrb[0].mxu0
    %622 = vmatprep.mubr.bf16.mxu0 0
    %623 = vmatmul.mubr.bf16.gmra.mrb[0].mxu0 %v340
    %v624 = vpop.f32.mrb[0].mxu0
    %v625 = vadd.f32 0.0, %v624
    %v626 = vpop.f32.mrb[0].mxu0
    %v627 = vpop.f32.mrb[0].mxu0
    %v628 = vadd.f32 0.0, %v627
    %v629 = vpop.f32.mrb[0].mxu0
    %630 = vmatprep.mubr.bf16.mxu0 0
    %631 = vmatmul.mubr.bf16.gmra.mrb[0].mxu0 %v343
    %v632 = vpop.f32.mrb[0].mxu0
    %v633 = vadd.f32 0.0, %v632
    %v634 = vpop.f32.mrb[0].mxu0
    %v635 = vpop.f32.mrb[0].mxu0
    %v636 = vadd.f32 0.0, %v635
    %v637 = vpop.f32.mrb[0].mxu0
    %638 = vmatprep.mubr.bf16.mxu0 0
    %639 = vmatmul.mubr.bf16.gmra.mrb[0].mxu0 %v346
    %v640 = vpop.f32.mrb[0].mxu0
    %v641 = vadd.f32 0.0, %v640
    %v642 = vpop.f32.mrb[0].mxu0
    %v643 = vpop.f32.mrb[0].mxu0
    %v644 = vadd.f32 0.0, %v643
    %v645 = vpop.f32.mrb[0].mxu0
    %646 = vmatprep.mubr.bf16.mxu0 0
    %647 = vmatmul.mubr.bf16.gmra.mrb[0].mxu0 %v349
    %v648 = vpop.f32.mrb[0].mxu0
    %v649 = vadd.f32 0.0, %v648
    %v650 = vpop.f32.mrb[0].mxu0
    %v651 = vpop.f32.mrb[0].mxu0
    %v652 = vadd.f32 0.0, %v651
    %v653 = vpop.f32.mrb[0].mxu0
    %654 = vmatprep.mubr.bf16.mxu0 0
    %655 = vmatmul.mubr.bf16.gmra.mrb[0].mxu0 %v352
    %v656 = vpop.f32.mrb[0].mxu0
    %v657 = vadd.f32 0.0, %v656
    %v658 = vpop.f32.mrb[0].mxu0
    %v659 = vpop.f32.mrb[0].mxu0
    %v660 = vadd.f32 0.0, %v659
    %v661 = vpop.f32.mrb[0].mxu0
    %662 = vmatprep.mubr.bf16.mxu0 0
    %663 = vmatmul.mubr.bf16.gmra.mrb[0].mxu0 %v355
    %v664 = vpop.f32.mrb[0].mxu0
    %v665 = vadd.f32 0.0, %v664
    %v666 = vpop.f32.mrb[0].mxu0
    %v667 = vpop.f32.mrb[0].mxu0
    %v668 = vadd.f32 0.0, %v667
    %v669 = vpop.f32.mrb[0].mxu0
    %670 = vmatprep.mubr.bf16.mxu0 0
    %671 = vmatmul.mubr.bf16.gmra.mrb[0].mxu0 %v358
    %v672 = vpop.f32.mrb[0].mxu0
    %v673 = vadd.f32 0.0, %v672
    %v674 = vpop.f32.mrb[0].mxu0
    %v675 = vpop.f32.mrb[0].mxu0
    %v676 = vadd.f32 0.0, %v675
    %v677 = vpop.f32.mrb[0].mxu0
    %678 = vmatprep.mubr.bf16.mxu0 0
    %679 = vmatmul.mubr.bf16.gmra.mrb[0].mxu0 %v361
    %v680 = vpop.f32.mrb[0].mxu0
    %v681 = vadd.f32 0.0, %v680
    %v682 = vpop.f32.mrb[0].mxu0
    %v683 = vpop.f32.mrb[0].mxu0
    %v684 = vadd.f32 0.0, %v683
    %v685 = vpop.f32.mrb[0].mxu0
    %686 = vmatprep.mubr.bf16.mxu0 0
    %687 = vmatmul.mubr.bf16.gmra.mrb[0].mxu0 %v364
    %v688 = vpop.f32.mrb[0].mxu0
    %v689 = vadd.f32 0.0, %v688
    %v690 = vpop.f32.mrb[0].mxu0
    %v691 = vpop.f32.mrb[0].mxu0
    %v692 = vadd.f32 0.0, %v691
    %v693 = vpop.f32.mrb[0].mxu0
    %694 = vmatprep.mubr.bf16.mxu0 0
    %695 = vmatmul.mubr.bf16.gmra.mrb[0].mxu0 %v367
    %v696 = vpop.f32.mrb[0].mxu0
    %v697 = vadd.f32 0.0, %v696
    %v698 = vpop.f32.mrb[0].mxu0
    %v699 = vpop.f32.mrb[0].mxu0
    %v700 = vadd.f32 0.0, %v699
    %v701 = vpop.f32.mrb[0].mxu0
    %702 = vmatprep.mubr.bf16.mxu0 0
    %703 = vmatmul.mubr.bf16.gmra.mrb[0].mxu0 %v370
    %v704 = vpop.f32.mrb[0].mxu0
    %v705 = vadd.f32 0.0, %v704
    %v706 = vpop.f32.mrb[0].mxu0
    %v707 = vpop.f32.mrb[0].mxu0
    %v708 = vadd.f32 0.0, %v707
    %v709 = vpop.f32.mrb[0].mxu0
    %710 = vmatprep.mubr.bf16.mxu0 0
    %711 = vmatmul.mubr.bf16.gmra.mrb[0].mxu0 %v373
    %v712 = vpop.f32.mrb[0].mxu0
    %v713 = vadd.f32 0.0, %v712
    %v714 = vpop.f32.mrb[0].mxu0
    %v715 = vpop.f32.mrb[0].mxu0
    %v716 = vadd.f32 0.0, %v715
    %v717 = vpop.f32.mrb[0].mxu0
    %718 = vmatprep.mubr.bf16.mxu0 0
    %719 = vmatmul.mubr.bf16.gmra.mrb[0].mxu0 %v376
    %v720 = vpop.f32.mrb[0].mxu0
    %v721 = vadd.f32 0.0, %v720
    %v722 = vpop.f32.mrb[0].mxu0
    %v723 = vpop.f32.mrb[0].mxu0
    %v724 = vpop.f32.mrb[0].mxu0
    %725 = vdwg.mxu0
    %v727 = vsel %vm260, %v102, 0
    %v730 = vsel %vm260, %v103, 0
    %v733 = vsel %vm260, %v104, 0
    %v736 = vsel %vm260, %v105, 0
    %v739 = vsel %vm260, %v106, 0
    %v742 = vsel %vm260, %v107, 0
    %v745 = vsel %vm260, %v108, 0
    %v748 = vsel %vm260, %v109, 0
    %v751 = vsel %vm260, %v110, 0
    %v754 = vsel %vm260, %v111, 0
    %v757 = vsel %vm260, %v112, 0
    %v760 = vsel %vm260, %v113, 0
    %v763 = vsel %vm260, %v114, 0
    %v766 = vsel %vm260, %v115, 0
    %v769 = vsel %vm260, %v116, 0
    %v772 = vsel %vm260, %v117, 0
    %v775 = vsel %vm260, %v118, 0
    %v778 = vsel %vm260, %v119, 0
    %v781 = vsel %vm260, %v120, 0
    %v784 = vsel %vm260, %v121, 0
    %v787 = vsel %vm260, %v122, 0
    %v790 = vsel %vm260, %v123, 0
    %v793 = vsel %vm260, %v124, 0
    %v796 = vsel %vm260, %v125, 0
    %v799 = vsel %vm260, %v126, 0
    %v802 = vsel %vm260, %v127, 0
    %v805 = vsel %vm260, %v128, 0
    %v808 = vsel %vm260, %v129, 0
    %v811 = vsel %vm260, %v130, 0
    %v814 = vsel %vm260, %v131, 0
    %v817 = vsel %vm260, %v132, 0
    %v820 = vsel %vm260, %v133, 0
    %v823 = vsel %vm260, %v134, 0
    %v826 = vsel %vm260, %v135, 0
    %v829 = vsel %vm260, %v136, 0
    %v832 = vsel %vm260, %v137, 0
    %v835 = vsel %vm260, %v138, 0
    %v838 = vsel %vm260, %v139, 0
    %v841 = vsel %vm260, %v140, 0
    %v844 = vsel %vm378, %v141, 0
    %846 = vmatprep.subr.bf16.mxu0 0
    %847 = vmatpush1.bf16.msra.mxu0 %v844
    %848 = vmatprep.subr.bf16.mxu0 0
    %849 = vmatpush1.bf16.msra.mxu0 0
    %850 = vmatprep.subr.bf16.mxu0 0
    %851 = vmatpush1.bf16.msra.mxu0 0
    %852 = vmatprep.subr.bf16.mxu0 0
    %853 = vmatpush1.bf16.msra.mxu0 0
    %854 = vmatprep.subr.bf16.mxu0 0
    %855 = vmatpush1.bf16.msra.mxu0 0
    %856 = vmatprep.subr.bf16.mxu0 0
    %857 = vmatpush1.bf16.msra.mxu0 0
    %858 = vmatprep.subr.bf16.mxu0 0
    %859 = vmatpush1.bf16.msra.mxu0 0
    %860 = vmatprep.subr.bf16.mxu0 0
    %861 = vmatpush1.bf16.msra.mxu0 0
    %862 = vmatprep.subr.bf16.mxu0 0
    %863 = vmatpush1.bf16.msra.mxu0 0
    %864 = vmatprep.subr.bf16.mxu0 0
    %865 = vmatpush1.bf16.msra.mxu0 0
    %866 = vmatprep.subr.bf16.mxu0 0
    %867 = vmatpush1.bf16.msra.mxu0 0
    %868 = vmatprep.subr.bf16.mxu0 0
    %869 = vmatpush1.bf16.msra.mxu0 0
    %870 = vmatprep.subr.bf16.mxu0 0
    %871 = vmatpush1.bf16.msra.mxu0 0
    %872 = vmatprep.subr.bf16.mxu0 0
    %873 = vmatpush1.bf16.msra.mxu0 0
    %874 = vmatprep.subr.bf16.mxu0 0
    %875 = vmatpush1.bf16.msra.mxu0 0
    %876 = vmatprep.subr.bf16.mxu0 0
    %877 = vmatpush1.bf16.msra.mxu0 0
    %878 = vmatprep.mubr.bf16.mxu0 0
    %879 = vmatmul.mubr.bf16.gmra.mrb[0].mxu0 %v727
    %v880 = vpop.f32.mrb[0].mxu0
    %v881 = vadd.f32 %v417, %v880
    %v882 = vpop.f32.mrb[0].mxu0
    %v883 = vpop.f32.mrb[0].mxu0
    %v884 = vadd.f32 %v420, %v883
    %v885 = vpop.f32.mrb[0].mxu0
    %886 = vmatprep.mubr.bf16.mxu0 0
    %887 = vmatmul.mubr.bf16.gmra.mrb[0].mxu0 %v730
    %v888 = vpop.f32.mrb[0].mxu0
    %v889 = vadd.f32 %v425, %v888
    %v890 = vpop.f32.mrb[0].mxu0
    %v891 = vpop.f32.mrb[0].mxu0
    %v892 = vadd.f32 %v428, %v891
    %v893 = vpop.f32.mrb[0].mxu0
    %894 = vmatprep.mubr.bf16.mxu0 0
    %895 = vmatmul.mubr.bf16.gmra.mrb[0].mxu0 %v733
    %v896 = vpop.f32.mrb[0].mxu0
    %v897 = vadd.f32 %v433, %v896
    %v898 = vpop.f32.mrb[0].mxu0
    %v899 = vpop.f32.mrb[0].mxu0
    %v900 = vadd.f32 %v436, %v899
    %v901 = vpop.f32.mrb[0].mxu0
    %902 = vmatprep.mubr.bf16.mxu0 0
    %903 = vmatmul.mubr.bf16.gmra.mrb[0].mxu0 %v736
    %v904 = vpop.f32.mrb[0].mxu0
    %v905 = vadd.f32 %v441, %v904
    %v906 = vpop.f32.mrb[0].mxu0
    %v907 = vpop.f32.mrb[0].mxu0
    %v908 = vadd.f32 %v444, %v907
    %v909 = vpop.f32.mrb[0].mxu0
    %910 = vmatprep.mubr.bf16.mxu0 0
    %911 = vmatmul.mubr.bf16.gmra.mrb[0].mxu0 %v739
    %v912 = vpop.f32.mrb[0].mxu0
    %v913 = vadd.f32 %v449, %v912
    %v914 = vpop.f32.mrb[0].mxu0
    %v915 = vpop.f32.mrb[0].mxu0
    %v916 = vadd.f32 %v452, %v915
    %v917 = vpop.f32.mrb[0].mxu0
    %918 = vmatprep.mubr.bf16.mxu0 0
    %919 = vmatmul.mubr.bf16.gmra.mrb[0].mxu0 %v742
    %v920 = vpop.f32.mrb[0].mxu0
    %v921 = vadd.f32 %v457, %v920
    %v922 = vpop.f32.mrb[0].mxu0
    %v923 = vpop.f32.mrb[0].mxu0
    %v924 = vadd.f32 %v460, %v923
    %v925 = vpop.f32.mrb[0].mxu0
    %926 = vmatprep.mubr.bf16.mxu0 0
    %927 = vmatmul.mubr.bf16.gmra.mrb[0].mxu0 %v745
    %v928 = vpop.f32.mrb[0].mxu0
    %v929 = vadd.f32 %v465, %v928
    %v930 = vpop.f32.mrb[0].mxu0
    %v931 = vpop.f32.mrb[0].mxu0
    %v932 = vadd.f32 %v468, %v931
    %v933 = vpop.f32.mrb[0].mxu0
    %934 = vmatprep.mubr.bf16.mxu0 0
    %935 = vmatmul.mubr.bf16.gmra.mrb[0].mxu0 %v748
    %v936 = vpop.f32.mrb[0].mxu0
    %v937 = vadd.f32 %v473, %v936
    %v938 = vpop.f32.mrb[0].mxu0
    %v939 = vpop.f32.mrb[0].mxu0
    %v940 = vadd.f32 %v476, %v939
    %v941 = vpop.f32.mrb[0].mxu0
    %942 = vmatprep.mubr.bf16.mxu0 0
    %943 = vmatmul.mubr.bf16.gmra.mrb[0].mxu0 %v751
    %v944 = vpop.f32.mrb[0].mxu0
    %v945 = vadd.f32 %v481, %v944
    %v946 = vpop.f32.mrb[0].mxu0
    %v947 = vpop.f32.mrb[0].mxu0
    %v948 = vadd.f32 %v484, %v947
    %v949 = vpop.f32.mrb[0].mxu0
    %950 = vmatprep.mubr.bf16.mxu0 0
    %951 = vmatmul.mubr.bf16.gmra.mrb[0].mxu0 %v754
    %v952 = vpop.f32.mrb[0].mxu0
    %v953 = vadd.f32 %v489, %v952
    %v954 = vpop.f32.mrb[0].mxu0
    %v955 = vpop.f32.mrb[0].mxu0
    %v956 = vadd.f32 %v492, %v955
    %v957 = vpop.f32.mrb[0].mxu0
    %958 = vmatprep.mubr.bf16.mxu0 0
    %959 = vmatmul.mubr.bf16.gmra.mrb[0].mxu0 %v757
    %v960 = vpop.f32.mrb[0].mxu0
    %v961 = vadd.f32 %v497, %v960
    %v962 = vpop.f32.mrb[0].mxu0
    %v963 = vpop.f32.mrb[0].mxu0
    %v964 = vadd.f32 %v500, %v963
    %v965 = vpop.f32.mrb[0].mxu0
    %966 = vmatprep.mubr.bf16.mxu0 0
    %967 = vmatmul.mubr.bf16.gmra.mrb[0].mxu0 %v760
    %v968 = vpop.f32.mrb[0].mxu0
    %v969 = vadd.f32 %v505, %v968
    %v970 = vpop.f32.mrb[0].mxu0
    %v971 = vpop.f32.mrb[0].mxu0
    %v972 = vadd.f32 %v508, %v971
    %v973 = vpop.f32.mrb[0].mxu0
    %974 = vmatprep.mubr.bf16.mxu0 0
    %975 = vmatmul.mubr.bf16.gmra.mrb[0].mxu0 %v763
    %v976 = vpop.f32.mrb[0].mxu0
    %v977 = vadd.f32 %v513, %v976
    %v978 = vpop.f32.mrb[0].mxu0
    %v979 = vpop.f32.mrb[0].mxu0
    %v980 = vadd.f32 %v516, %v979
    %v981 = vpop.f32.mrb[0].mxu0
    %982 = vmatprep.mubr.bf16.mxu0 0
    %983 = vmatmul.mubr.bf16.gmra.mrb[0].mxu0 %v766
    %v984 = vpop.f32.mrb[0].mxu0
    %v985 = vadd.f32 %v521, %v984
    %v986 = vpop.f32.mrb[0].mxu0
    %v987 = vpop.f32.mrb[0].mxu0
    %v988 = vadd.f32 %v524, %v987
    %v989 = vpop.f32.mrb[0].mxu0
    %990 = vmatprep.mubr.bf16.mxu0 0
    %991 = vmatmul.mubr.bf16.gmra.mrb[0].mxu0 %v769
    %v992 = vpop.f32.mrb[0].mxu0
    %v993 = vadd.f32 %v529, %v992
    %v994 = vpop.f32.mrb[0].mxu0
    %v995 = vpop.f32.mrb[0].mxu0
    %v996 = vadd.f32 %v532, %v995
    %v997 = vpop.f32.mrb[0].mxu0
    %998 = vmatprep.mubr.bf16.mxu0 0
    %999 = vmatmul.mubr.bf16.gmra.mrb[0].mxu0 %v772
    %v1000 = vpop.f32.mrb[0].mxu0
    %v1001 = vadd.f32 %v537, %v1000
    %v1002 = vpop.f32.mrb[0].mxu0
    %v1003 = vpop.f32.mrb[0].mxu0
    %v1004 = vadd.f32 %v540, %v1003
    %v1005 = vpop.f32.mrb[0].mxu0
    %1006 = vmatprep.mubr.bf16.mxu0 0
    %1007 = vmatmul.mubr.bf16.gmra.mrb[0].mxu0 %v775
    %v1008 = vpop.f32.mrb[0].mxu0
    %v1009 = vadd.f32 %v545, %v1008
    %v1010 = vpop.f32.mrb[0].mxu0
    %v1011 = vpop.f32.mrb[0].mxu0
    %v1012 = vadd.f32 %v548, %v1011
    %v1013 = vpop.f32.mrb[0].mxu0
    %1014 = vmatprep.mubr.bf16.mxu0 0
    %1015 = vmatmul.mubr.bf16.gmra.mrb[0].mxu0 %v778
    %v1016 = vpop.f32.mrb[0].mxu0
    %v1017 = vadd.f32 %v553, %v1016
    %v1018 = vpop.f32.mrb[0].mxu0
    %v1019 = vpop.f32.mrb[0].mxu0
    %v1020 = vadd.f32 %v556, %v1019
    %v1021 = vpop.f32.mrb[0].mxu0
    %1022 = vmatprep.mubr.bf16.mxu0 0
    %1023 = vmatmul.mubr.bf16.gmra.mrb[0].mxu0 %v781
    %v1024 = vpop.f32.mrb[0].mxu0
    %v1025 = vadd.f32 %v561, %v1024
    %v1026 = vpop.f32.mrb[0].mxu0
    %v1027 = vpop.f32.mrb[0].mxu0
    %v1028 = vadd.f32 %v564, %v1027
    %v1029 = vpop.f32.mrb[0].mxu0
    %1030 = vmatprep.mubr.bf16.mxu0 0
    %1031 = vmatmul.mubr.bf16.gmra.mrb[0].mxu0 %v784
    %v1032 = vpop.f32.mrb[0].mxu0
    %v1033 = vadd.f32 %v569, %v1032
    %v1034 = vpop.f32.mrb[0].mxu0
    %v1035 = vpop.f32.mrb[0].mxu0
    %v1036 = vadd.f32 %v572, %v1035
    %v1037 = vpop.f32.mrb[0].mxu0
    %1038 = vmatprep.mubr.bf16.mxu0 0
    %1039 = vmatmul.mubr.bf16.gmra.mrb[0].mxu0 %v787
    %v1040 = vpop.f32.mrb[0].mxu0
    %v1041 = vadd.f32 %v577, %v1040
    %v1042 = vpop.f32.mrb[0].mxu0
    %v1043 = vpop.f32.mrb[0].mxu0
    %v1044 = vadd.f32 %v580, %v1043
    %v1045 = vpop.f32.mrb[0].mxu0
    %1046 = vmatprep.mubr.bf16.mxu0 0
    %1047 = vmatmul.mubr.bf16.gmra.mrb[0].mxu0 %v790
    %v1048 = vpop.f32.mrb[0].mxu0
    %v1049 = vadd.f32 %v585, %v1048
    %v1050 = vpop.f32.mrb[0].mxu0
    %v1051 = vpop.f32.mrb[0].mxu0
    %v1052 = vadd.f32 %v588, %v1051
    %v1053 = vpop.f32.mrb[0].mxu0
    %1054 = vmatprep.mubr.bf16.mxu0 0
    %1055 = vmatmul.mubr.bf16.gmra.mrb[0].mxu0 %v793
    %v1056 = vpop.f32.mrb[0].mxu0
    %v1057 = vadd.f32 %v593, %v1056
    %v1058 = vpop.f32.mrb[0].mxu0
    %v1059 = vpop.f32.mrb[0].mxu0
    %v1060 = vadd.f32 %v596, %v1059
    %v1061 = vpop.f32.mrb[0].mxu0
    %1062 = vmatprep.mubr.bf16.mxu0 0
    %1063 = vmatmul.mubr.bf16.gmra.mrb[0].mxu0 %v796
    %v1064 = vpop.f32.mrb[0].mxu0
    %v1065 = vadd.f32 %v601, %v1064
    %v1066 = vpop.f32.mrb[0].mxu0
    %v1067 = vpop.f32.mrb[0].mxu0
    %v1068 = vadd.f32 %v604, %v1067
    %v1069 = vpop.f32.mrb[0].mxu0
    %1070 = vmatprep.mubr.bf16.mxu0 0
    %1071 = vmatmul.mubr.bf16.gmra.mrb[0].mxu0 %v799
    %v1072 = vpop.f32.mrb[0].mxu0
    %v1073 = vadd.f32 %v609, %v1072
    %v1074 = vpop.f32.mrb[0].mxu0
    %v1075 = vpop.f32.mrb[0].mxu0
    %v1076 = vadd.f32 %v612, %v1075
    %v1077 = vpop.f32.mrb[0].mxu0
    %1078 = vmatprep.mubr.bf16.mxu0 0
    %1079 = vmatmul.mubr.bf16.gmra.mrb[0].mxu0 %v802
    %v1080 = vpop.f32.mrb[0].mxu0
    %v1081 = vadd.f32 %v617, %v1080
    %v1082 = vpop.f32.mrb[0].mxu0
    %v1083 = vpop.f32.mrb[0].mxu0
    %v1084 = vadd.f32 %v620, %v1083
    %v1085 = vpop.f32.mrb[0].mxu0
    %1086 = vmatprep.mubr.bf16.mxu0 0
    %1087 = vmatmul.mubr.bf16.gmra.mrb[0].mxu0 %v805
    %v1088 = vpop.f32.mrb[0].mxu0
    %v1089 = vadd.f32 %v625, %v1088
    %v1090 = vpop.f32.mrb[0].mxu0
    %v1091 = vpop.f32.mrb[0].mxu0
    %v1092 = vadd.f32 %v628, %v1091
    %v1093 = vpop.f32.mrb[0].mxu0
    %1094 = vmatprep.mubr.bf16.mxu0 0
    %1095 = vmatmul.mubr.bf16.gmra.mrb[0].mxu0 %v808
    %v1096 = vpop.f32.mrb[0].mxu0
    %v1097 = vadd.f32 %v633, %v1096
    %v1098 = vpop.f32.mrb[0].mxu0
    %v1099 = vpop.f32.mrb[0].mxu0
    %v1100 = vadd.f32 %v636, %v1099
    %v1101 = vpop.f32.mrb[0].mxu0
    %1102 = vmatprep.mubr.bf16.mxu0 0
    %1103 = vmatmul.mubr.bf16.gmra.mrb[0].mxu0 %v811
    %v1104 = vpop.f32.mrb[0].mxu0
    %v1105 = vadd.f32 %v641, %v1104
    %v1106 = vpop.f32.mrb[0].mxu0
    %v1107 = vpop.f32.mrb[0].mxu0
    %v1108 = vadd.f32 %v644, %v1107
    %v1109 = vpop.f32.mrb[0].mxu0
    %1110 = vmatprep.mubr.bf16.mxu0 0
    %1111 = vmatmul.mubr.bf16.gmra.mrb[0].mxu0 %v814
    %v1112 = vpop.f32.mrb[0].mxu0
    %v1113 = vadd.f32 %v649, %v1112
    %v1114 = vpop.f32.mrb[0].mxu0
    %v1115 = vpop.f32.mrb[0].mxu0
    %v1116 = vadd.f32 %v652, %v1115
    %v1117 = vpop.f32.mrb[0].mxu0
    %1118 = vmatprep.mubr.bf16.mxu0 0
    %1119 = vmatmul.mubr.bf16.gmra.mrb[0].mxu0 %v817
    %v1120 = vpop.f32.mrb[0].mxu0
    %v1121 = vadd.f32 %v657, %v1120
    %v1122 = vpop.f32.mrb[0].mxu0
    %v1123 = vpop.f32.mrb[0].mxu0
    %v1124 = vadd.f32 %v660, %v1123
    %v1125 = vpop.f32.mrb[0].mxu0
    %1126 = vmatprep.mubr.bf16.mxu0 0
    %1127 = vmatmul.mubr.bf16.gmra.mrb[0].mxu0 %v820
    %v1128 = vpop.f32.mrb[0].mxu0
    %v1129 = vadd.f32 %v665, %v1128
    %v1130 = vpop.f32.mrb[0].mxu0
    %v1131 = vpop.f32.mrb[0].mxu0
    %v1132 = vadd.f32 %v668, %v1131
    %v1133 = vpop.f32.mrb[0].mxu0
    %1134 = vmatprep.mubr.bf16.mxu0 0
    %1135 = vmatmul.mubr.bf16.gmra.mrb[0].mxu0 %v823
    %v1136 = vpop.f32.mrb[0].mxu0
    %v1137 = vadd.f32 %v673, %v1136
    %v1138 = vpop.f32.mrb[0].mxu0
    %v1139 = vpop.f32.mrb[0].mxu0
    %v1140 = vadd.f32 %v676, %v1139
    %v1141 = vpop.f32.mrb[0].mxu0
    %1142 = vmatprep.mubr.bf16.mxu0 0
    %1143 = vmatmul.mubr.bf16.gmra.mrb[0].mxu0 %v826
    %v1144 = vpop.f32.mrb[0].mxu0
    %v1145 = vadd.f32 %v681, %v1144
    %v1146 = vpop.f32.mrb[0].mxu0
    %v1147 = vpop.f32.mrb[0].mxu0
    %v1148 = vadd.f32 %v684, %v1147
    %v1149 = vpop.f32.mrb[0].mxu0
    %1150 = vmatprep.mubr.bf16.mxu0 0
    %1151 = vmatmul.mubr.bf16.gmra.mrb[0].mxu0 %v829
    %v1152 = vpop.f32.mrb[0].mxu0
    %v1153 = vadd.f32 %v689, %v1152
    %v1154 = vpop.f32.mrb[0].mxu0
    %v1155 = vpop.f32.mrb[0].mxu0
    %v1156 = vadd.f32 %v692, %v1155
    %v1157 = vpop.f32.mrb[0].mxu0
    %1158 = vmatprep.mubr.bf16.mxu0 0
    %1159 = vmatmul.mubr.bf16.gmra.mrb[0].mxu0 %v832
    %v1160 = vpop.f32.mrb[0].mxu0
    %v1161 = vadd.f32 %v697, %v1160
    %v1162 = vpop.f32.mrb[0].mxu0
    %v1163 = vpop.f32.mrb[0].mxu0
    %v1164 = vadd.f32 %v700, %v1163
    %v1165 = vpop.f32.mrb[0].mxu0
    %1166 = vmatprep.mubr.bf16.mxu0 0
    %1167 = vmatmul.mubr.bf16.gmra.mrb[0].mxu0 %v835
    %v1168 = vpop.f32.mrb[0].mxu0
    %v1169 = vadd.f32 %v705, %v1168
    %v1170 = vpop.f32.mrb[0].mxu0
    %v1171 = vpop.f32.mrb[0].mxu0
    %v1172 = vadd.f32 %v708, %v1171
    %v1173 = vpop.f32.mrb[0].mxu0
    %1174 = vmatprep.mubr.bf16.mxu0 0
    %1175 = vmatmul.mubr.bf16.gmra.mrb[0].mxu0 %v838
    %v1176 = vpop.f32.mrb[0].mxu0
    %v1177 = vadd.f32 %v713, %v1176
    %v1178 = vpop.f32.mrb[0].mxu0
    %v1179 = vpop.f32.mrb[0].mxu0
    %v1180 = vadd.f32 %v716, %v1179
    %v1181 = vpop.f32.mrb[0].mxu0
    %1182 = vmatprep.mubr.bf16.mxu0 0
    %1183 = vmatmul.mubr.bf16.gmra.mrb[0].mxu0 %v841
    %v1184 = vpop.f32.mrb[0].mxu0
    %v1185 = vadd.f32 %v721, %v1184
    %v1186 = vpop.f32.mrb[0].mxu0
    %v1187 = vpop.f32.mrb[0].mxu0
    %v1188 = vpop.f32.mrb[0].mxu0
    %1189 = vdwg.mxu0
    %v1190 = vld [vmem:[%s0 + $0x2] sm:$0xff]
    %v1191 = vld [vmem:[%s0 + $0xa] sm:$0xff]
    %v1192 = vld [vmem:[%s0 + $0x12] sm:$0xff]
    %v1193 = vld [vmem:[%s0 + $0x1a] sm:$0xff]
    %v1194 = vld [vmem:[%s0 + $0x22] sm:$0xff]
    %v1195 = vld [vmem:[%s0 + $0x2a] sm:$0xff]
    %v1196 = vld [vmem:[%s0 + $0x32] sm:$0xff]
    %v1197 = vld [vmem:[%s0 + $0x3a] sm:$0xff]
    %v1198 = vld [vmem:[%s0 + $0x42] sm:$0xff]
    %v1199 = vld [vmem:[%s0 + $0x4a] sm:$0xff]
    %v1200 = vld [vmem:[%s0 + $0x52] sm:$0xff]
    %v1201 = vld [vmem:[%s0 + $0x5a] sm:$0xff]
    %v1202 = vld [vmem:[%s0 + $0x62] sm:$0xff]
    %v1203 = vld [vmem:[%s0 + $0x6a] sm:$0xff]
    %v1204 = vld [vmem:[%s0 + $0x72] sm:$0xff]
    %v1205 = vld [vmem:[%s0 + $0x7a] sm:$0xff]
    %v1206 = vld [vmem:[%s0 + $0x82] sm:$0xff]
    %v1207 = vld [vmem:[%s0 + $0x8a] sm:$0xff]
    %v1208 = vld [vmem:[%s0 + $0x92] sm:$0xff]
    %v1209 = vld [vmem:[%s0 + $0x9a] sm:$0xff]
    %v1210 = vld [vmem:[%s0 + $0xa2] sm:$0xff]
    %v1211 = vld [vmem:[%s0 + $0xaa] sm:$0xff]
    %v1212 = vld [vmem:[%s0 + $0xb2] sm:$0xff]
    %v1213 = vld [vmem:[%s0 + $0xba] sm:$0xff]
    %v1214 = vld [vmem:[%s0 + $0xc2] sm:$0xff]
    %v1215 = vld [vmem:[%s0 + $0xca] sm:$0xff]
    %v1216 = vld [vmem:[%s0 + $0xd2] sm:$0xff]
    %v1217 = vld [vmem:[%s0 + $0xda] sm:$0xff]
    %v1218 = vld [vmem:[%s0 + $0xe2] sm:$0xff]
    %v1219 = vld [vmem:[%s0 + $0xea] sm:$0xff]
    %v1220 = vld [vmem:[%s0 + $0xf2] sm:$0xff]
    %v1221 = vld [vmem:[%s0 + $0xfa] sm:$0xff]
    %v1222 = vld [vmem:[%s0 + $0x102] sm:$0xff]
    %v1223 = vld [vmem:[%s0 + $0x10a] sm:$0xff]
    %v1224 = vld [vmem:[%s0 + $0x112] sm:$0xff]
    %v1225 = vld [vmem:[%s0 + $0x11a] sm:$0xff]
    %v1226 = vld [vmem:[%s0 + $0x122] sm:$0xff]
    %v1227 = vld [vmem:[%s0 + $0x12a] sm:$0xff]
    %v1228 = vld [vmem:[%s0 + $0x132] sm:$0xff]
    %v1229 = vld [vmem:[%s0 + $0x13a] sm:$0xff]
    %v1230 = vld [vmem:[%s0 + $0x142] sm:$0xff]
    %v1231 = vld [vmem:[%s0 + $0x14a] sm:$0xff]
    %v1232 = vld [vmem:[%s0 + $0x152] sm:$0xff]
    %v1233 = vld [vmem:[%s0 + $0x15a] sm:$0xff]
    %v1234 = vld [vmem:[%s0 + $0x162] sm:$0xff]
    %v1235 = vld [vmem:[%s0 + $0x16a] sm:$0xff]
    %v1236 = vld [vmem:[%s0 + $0x172] sm:$0xff]
    %v1237 = vld [vmem:[%s0 + $0x17a] sm:$0xff]
    %v1238 = vld [vmem:[%s0 + $0x182] sm:$0xff]
    %v1239 = vld [vmem:[%s0 + $0x18a] sm:$0xff]
    %v1240 = vld [vmem:[%s0 + $0x192] sm:$0xff]
    %v1241 = vld [vmem:[%s0 + $0x19a] sm:$0xff]
    %v1242 = vld [vmem:[%s0 + $0x1a2] sm:$0xff]
    %v1243 = vld [vmem:[%s0 + $0x1aa] sm:$0xff]
    %v1244 = vld [vmem:[%s0 + $0x1b2] sm:$0xff]
    %v1245 = vld [vmem:[%s0 + $0x1ba] sm:$0xff]
    %v1246 = vld [vmem:[%s0 + $0x1c2] sm:$0xff]
    %v1247 = vld [vmem:[%s0 + $0x1ca] sm:$0xff]
    %v1248 = vld [vmem:[%s0 + $0x1d2] sm:$0xff]
    %v1249 = vld [vmem:[%s0 + $0x1da] sm:$0xff]
    %v1250 = vld [vmem:[%s0 + $0x1e2] sm:$0xff]
    %v1251 = vld [vmem:[%s0 + $0x1ea] sm:$0xff]
    %v1252 = vld [vmem:[%s0 + $0x1f2] sm:$0xff]
    %v1253 = vld [vmem:[%s0 + $0x1fa] sm:$0xff]
    %v1254 = vld [vmem:[%s0 + $0x202] sm:$0xff]
    %v1255 = vld [vmem:[%s0 + $0x20a] sm:$0xff]
    %v1256 = vld [vmem:[%s0 + $0x212] sm:$0xff]
    %v1257 = vld [vmem:[%s0 + $0x21a] sm:$0xff]
    %v1258 = vld [vmem:[%s0 + $0x222] sm:$0xff]
    %v1259 = vld [vmem:[%s0 + $0x22a] sm:$0xff]
    %v1260 = vld [vmem:[%s0 + $0x232] sm:$0xff]
    %v1261 = vld [vmem:[%s0 + $0x23a] sm:$0xff]
    %v1262 = vld [vmem:[%s0 + $0x242] sm:$0xff]
    %v1263 = vld [vmem:[%s0 + $0x24a] sm:$0xff]
    %v1264 = vld [vmem:[%s0 + $0x252] sm:$0xff]
    %v1265 = vld [vmem:[%s0 + $0x25a] sm:$0xff]
    %v1266 = vld [vmem:[%s0 + $0x262] sm:$0x3]
    %v1267 = vpack.c.bf16 %v1191, %v1190
    %v1268 = vpack.c.bf16 %v1193, %v1192
    %v1269 = vpack.c.bf16 %v1195, %v1194
    %v1270 = vpack.c.bf16 %v1197, %v1196
    %v1271 = vpack.c.bf16 %v1199, %v1198
    %v1272 = vpack.c.bf16 %v1201, %v1200
    %v1273 = vpack.c.bf16 %v1203, %v1202
    %v1274 = vpack.c.bf16 %v1205, %v1204
    %v1275 = vpack.c.bf16 %v1207, %v1206
    %v1276 = vpack.c.bf16 %v1209, %v1208
    %v1277 = vpack.c.bf16 %v1211, %v1210
    %v1278 = vpack.c.bf16 %v1213, %v1212
    %v1279 = vpack.c.bf16 %v1215, %v1214
    %v1280 = vpack.c.bf16 %v1217, %v1216
    %v1281 = vpack.c.bf16 %v1219, %v1218
    %v1282 = vpack.c.bf16 %v1221, %v1220
    %v1283 = vpack.c.bf16 %v1223, %v1222
    %v1284 = vpack.c.bf16 %v1225, %v1224
    %v1285 = vpack.c.bf16 %v1227, %v1226
    %v1286 = vpack.c.bf16 %v1229, %v1228
    %v1287 = vpack.c.bf16 %v1231, %v1230
    %v1288 = vpack.c.bf16 %v1233, %v1232
    %v1289 = vpack.c.bf16 %v1235, %v1234
    %v1290 = vpack.c.bf16 %v1237, %v1236
    %v1291 = vpack.c.bf16 %v1239, %v1238
    %v1292 = vpack.c.bf16 %v1241, %v1240
    %v1293 = vpack.c.bf16 %v1243, %v1242
    %v1294 = vpack.c.bf16 %v1245, %v1244
    %v1295 = vpack.c.bf16 %v1247, %v1246
    %v1296 = vpack.c.bf16 %v1249, %v1248
    %v1297 = vpack.c.bf16 %v1251, %v1250
    %v1298 = vpack.c.bf16 %v1253, %v1252
    %v1299 = vpack.c.bf16 %v1255, %v1254
    %v1300 = vpack.c.bf16 %v1257, %v1256
    %v1301 = vpack.c.bf16 %v1259, %v1258
    %v1302 = vpack.c.bf16 %v1261, %v1260
    %v1303 = vpack.c.bf16 %v1263, %v1262
    %v1304 = vpack.c.bf16 %v1265, %v1264
    %v1305 = vpack.c.bf16 %v1266, %v1266
    %s1306 = scalar_lea.vmem %s1, 4
    %v1307 = vld [vmem:[%s1306] sm:$0x3]
    %v1309 = vsel %vm260, %v1267, 0
    %v1312 = vsel %vm260, %v1268, 0
    %v1315 = vsel %vm260, %v1269, 0
    %v1318 = vsel %vm260, %v1270, 0
    %v1321 = vsel %vm260, %v1271, 0
    %v1324 = vsel %vm260, %v1272, 0
    %v1327 = vsel %vm260, %v1273, 0
    %v1330 = vsel %vm260, %v1274, 0
    %v1333 = vsel %vm260, %v1275, 0
    %v1336 = vsel %vm260, %v1276, 0
    %v1339 = vsel %vm260, %v1277, 0
    %v1342 = vsel %vm260, %v1278, 0
    %v1345 = vsel %vm260, %v1279, 0
    %v1348 = vsel %vm260, %v1280, 0
    %v1351 = vsel %vm260, %v1281, 0
    %v1354 = vsel %vm260, %v1282, 0
    %v1357 = vsel %vm260, %v1283, 0
    %v1360 = vsel %vm260, %v1284, 0
    %v1363 = vsel %vm260, %v1285, 0
    %v1366 = vsel %vm260, %v1286, 0
    %v1369 = vsel %vm260, %v1287, 0
    %v1372 = vsel %vm260, %v1288, 0
    %v1375 = vsel %vm260, %v1289, 0
    %v1378 = vsel %vm260, %v1290, 0
    %v1381 = vsel %vm260, %v1291, 0
    %v1384 = vsel %vm260, %v1292, 0
    %v1387 = vsel %vm260, %v1293, 0
    %v1390 = vsel %vm260, %v1294, 0
    %v1393 = vsel %vm260, %v1295, 0
    %v1396 = vsel %vm260, %v1296, 0
    %v1399 = vsel %vm260, %v1297, 0
    %v1402 = vsel %vm260, %v1298, 0
    %v1405 = vsel %vm260, %v1299, 0
    %v1408 = vsel %vm260, %v1300, 0
    %v1411 = vsel %vm260, %v1301, 0
    %v1414 = vsel %vm260, %v1302, 0
    %v1417 = vsel %vm260, %v1303, 0
    %v1420 = vsel %vm260, %v1304, 0
    %v1423 = vsel %vm260, %v1305, 0
    %v1426 = vsel %vm378, %v1307, 0
    %1428 = vmatprep.subr.bf16.mxu0 0
    %1429 = vmatpush1.bf16.msra.mxu0 %v1426
    %1430 = vmatprep.subr.bf16.mxu0 0
    %1431 = vmatpush1.bf16.msra.mxu0 0
    %1432 = vmatprep.subr.bf16.mxu0 0
    %1433 = vmatpush1.bf16.msra.mxu0 0
    %1434 = vmatprep.subr.bf16.mxu0 0
    %1435 = vmatpush1.bf16.msra.mxu0 0
    %1436 = vmatprep.subr.bf16.mxu0 0
    %1437 = vmatpush1.bf16.msra.mxu0 0
    %1438 = vmatprep.subr.bf16.mxu0 0
    %1439 = vmatpush1.bf16.msra.mxu0 0
    %1440 = vmatprep.subr.bf16.mxu0 0
    %1441 = vmatpush1.bf16.msra.mxu0 0
    %1442 = vmatprep.subr.bf16.mxu0 0
    %1443 = vmatpush1.bf16.msra.mxu0 0
    %1444 = vmatprep.subr.bf16.mxu0 0
    %1445 = vmatpush1.bf16.msra.mxu0 0
    %1446 = vmatprep.subr.bf16.mxu0 0
    %1447 = vmatpush1.bf16.msra.mxu0 0
    %1448 = vmatprep.subr.bf16.mxu0 0
    %1449 = vmatpush1.bf16.msra.mxu0 0
    %1450 = vmatprep.subr.bf16.mxu0 0
    %1451 = vmatpush1.bf16.msra.mxu0 0
    %1452 = vmatprep.subr.bf16.mxu0 0
    %1453 = vmatpush1.bf16.msra.mxu0 0
    %1454 = vmatprep.subr.bf16.mxu0 0
    %1455 = vmatpush1.bf16.msra.mxu0 0
    %1456 = vmatprep.subr.bf16.mxu0 0
    %1457 = vmatpush1.bf16.msra.mxu0 0
    %1458 = vmatprep.subr.bf16.mxu0 0
    %1459 = vmatpush1.bf16.msra.mxu0 0
    %1460 = vmatprep.mubr.bf16.mxu0 0
    %1461 = vmatmul.mubr.bf16.gmra.mrb[0].mxu0 %v1309
    %v1462 = vpop.f32.mrb[0].mxu0
    %v1463 = vadd.f32 0.0, %v1462
    %v1464 = vpop.f32.mrb[0].mxu0
    %v1465 = vpop.f32.mrb[0].mxu0
    %v1466 = vadd.f32 0.0, %v1465
    %v1467 = vpop.f32.mrb[0].mxu0
    %1468 = vmatprep.mubr.bf16.mxu0 0
    %1469 = vmatmul.mubr.bf16.gmra.mrb[0].mxu0 %v1312
    %v1470 = vpop.f32.mrb[0].mxu0
    %v1471 = vadd.f32 0.0, %v1470
    %v1472 = vpop.f32.mrb[0].mxu0
    %v1473 = vpop.f32.mrb[0].mxu0
    %v1474 = vadd.f32 0.0, %v1473
    %v1475 = vpop.f32.mrb[0].mxu0
    %1476 = vmatprep.mubr.bf16.mxu0 0
    %1477 = vmatmul.mubr.bf16.gmra.mrb[0].mxu0 %v1315
    %v1478 = vpop.f32.mrb[0].mxu0
    %v1479 = vadd.f32 0.0, %v1478
    %v1480 = vpop.f32.mrb[0].mxu0
    %v1481 = vpop.f32.mrb[0].mxu0
    %v1482 = vadd.f32 0.0, %v1481
    %v1483 = vpop.f32.mrb[0].mxu0
    %1484 = vmatprep.mubr.bf16.mxu0 0
    %1485 = vmatmul.mubr.bf16.gmra.mrb[0].mxu0 %v1318
    %v1486 = vpop.f32.mrb[0].mxu0
    %v1487 = vadd.f32 0.0, %v1486
    %v1488 = vpop.f32.mrb[0].mxu0
    %v1489 = vpop.f32.mrb[0].mxu0
    %v1490 = vadd.f32 0.0, %v1489
    %v1491 = vpop.f32.mrb[0].mxu0
    %1492 = vmatprep.mubr.bf16.mxu0 0
    %1493 = vmatmul.mubr.bf16.gmra.mrb[0].mxu0 %v1321
    %v1494 = vpop.f32.mrb[0].mxu0
    %v1495 = vadd.f32 0.0, %v1494
    %v1496 = vpop.f32.mrb[0].mxu0
    %v1497 = vpop.f32.mrb[0].mxu0
    %v1498 = vadd.f32 0.0, %v1497
    %v1499 = vpop.f32.mrb[0].mxu0
    %1500 = vmatprep.mubr.bf16.mxu0 0
    %1501 = vmatmul.mubr.bf16.gmra.mrb[0].mxu0 %v1324
    %v1502 = vpop.f32.mrb[0].mxu0
    %v1503 = vadd.f32 0.0, %v1502
    %v1504 = vpop.f32.mrb[0].mxu0
    %v1505 = vpop.f32.mrb[0].mxu0
    %v1506 = vadd.f32 0.0, %v1505
    %v1507 = vpop.f32.mrb[0].mxu0
    %1508 = vmatprep.mubr.bf16.mxu0 0
    %1509 = vmatmul.mubr.bf16.gmra.mrb[0].mxu0 %v1327
    %v1510 = vpop.f32.mrb[0].mxu0
    %v1511 = vadd.f32 0.0, %v1510
    %v1512 = vpop.f32.mrb[0].mxu0
    %v1513 = vpop.f32.mrb[0].mxu0
    %v1514 = vadd.f32 0.0, %v1513
    %v1515 = vpop.f32.mrb[0].mxu0
    %1516 = vmatprep.mubr.bf16.mxu0 0
    %1517 = vmatmul.mubr.bf16.gmra.mrb[0].mxu0 %v1330
    %v1518 = vpop.f32.mrb[0].mxu0
    %v1519 = vadd.f32 0.0, %v1518
    %v1520 = vpop.f32.mrb[0].mxu0
    %v1521 = vpop.f32.mrb[0].mxu0
    %v1522 = vadd.f32 0.0, %v1521
    %v1523 = vpop.f32.mrb[0].mxu0
    %1524 = vmatprep.mubr.bf16.mxu0 0
    %1525 = vmatmul.mubr.bf16.gmra.mrb[0].mxu0 %v1333
    %v1526 = vpop.f32.mrb[0].mxu0
    %v1527 = vadd.f32 0.0, %v1526
    %v1528 = vpop.f32.mrb[0].mxu0
    %v1529 = vpop.f32.mrb[0].mxu0
    %v1530 = vadd.f32 0.0, %v1529
    %v1531 = vpop.f32.mrb[0].mxu0
    %1532 = vmatprep.mubr.bf16.mxu0 0
    %1533 = vmatmul.mubr.bf16.gmra.mrb[0].mxu0 %v1336
    %v1534 = vpop.f32.mrb[0].mxu0
    %v1535 = vadd.f32 0.0, %v1534
    %v1536 = vpop.f32.mrb[0].mxu0
    %v1537 = vpop.f32.mrb[0].mxu0
    %v1538 = vadd.f32 0.0, %v1537
    %v1539 = vpop.f32.mrb[0].mxu0
    %1540 = vmatprep.mubr.bf16.mxu0 0
    %1541 = vmatmul.mubr.bf16.gmra.mrb[0].mxu0 %v1339
    %v1542 = vpop.f32.mrb[0].mxu0
    %v1543 = vadd.f32 0.0, %v1542
    %v1544 = vpop.f32.mrb[0].mxu0
    %v1545 = vpop.f32.mrb[0].mxu0
    %v1546 = vadd.f32 0.0, %v1545
    %v1547 = vpop.f32.mrb[0].mxu0
    %1548 = vmatprep.mubr.bf16.mxu0 0
    %1549 = vmatmul.mubr.bf16.gmra.mrb[0].mxu0 %v1342
    %v1550 = vpop.f32.mrb[0].mxu0
    %v1551 = vadd.f32 0.0, %v1550
    %v1552 = vpop.f32.mrb[0].mxu0
    %v1553 = vpop.f32.mrb[0].mxu0
    %v1554 = vadd.f32 0.0, %v1553
    %v1555 = vpop.f32.mrb[0].mxu0
    %1556 = vmatprep.mubr.bf16.mxu0 0
    %1557 = vmatmul.mubr.bf16.gmra.mrb[0].mxu0 %v1345
    %v1558 = vpop.f32.mrb[0].mxu0
    %v1559 = vadd.f32 0.0, %v1558
    %v1560 = vpop.f32.mrb[0].mxu0
    %v1561 = vpop.f32.mrb[0].mxu0
    %v1562 = vadd.f32 0.0, %v1561
    %v1563 = vpop.f32.mrb[0].mxu0
    %1564 = vmatprep.mubr.bf16.mxu0 0
    %1565 = vmatmul.mubr.bf16.gmra.mrb[0].mxu0 %v1348
    %v1566 = vpop.f32.mrb[0].mxu0
    %v1567 = vadd.f32 0.0, %v1566
    %v1568 = vpop.f32.mrb[0].mxu0
    %v1569 = vpop.f32.mrb[0].mxu0
    %v1570 = vadd.f32 0.0, %v1569
    %v1571 = vpop.f32.mrb[0].mxu0
    %1572 = vmatprep.mubr.bf16.mxu0 0
    %1573 = vmatmul.mubr.bf16.gmra.mrb[0].mxu0 %v1351
    %v1574 = vpop.f32.mrb[0].mxu0
    %v1575 = vadd.f32 0.0, %v1574
    %v1576 = vpop.f32.mrb[0].mxu0
    %v1577 = vpop.f32.mrb[0].mxu0
    %v1578 = vadd.f32 0.0, %v1577
    %v1579 = vpop.f32.mrb[0].mxu0
    %1580 = vmatprep.mubr.bf16.mxu0 0
    %1581 = vmatmul.mubr.bf16.gmra.mrb[0].mxu0 %v1354
    %v1582 = vpop.f32.mrb[0].mxu0
    %v1583 = vadd.f32 0.0, %v1582
    %v1584 = vpop.f32.mrb[0].mxu0
    %v1585 = vpop.f32.mrb[0].mxu0
    %v1586 = vadd.f32 0.0, %v1585
    %v1587 = vpop.f32.mrb[0].mxu0
    %1588 = vmatprep.mubr.bf16.mxu0 0
    %1589 = vmatmul.mubr.bf16.gmra.mrb[0].mxu0 %v1357
    %v1590 = vpop.f32.mrb[0].mxu0
    %v1591 = vadd.f32 0.0, %v1590
    %v1592 = vpop.f32.mrb[0].mxu0
    %v1593 = vpop.f32.mrb[0].mxu0
    %v1594 = vadd.f32 0.0, %v1593
    %v1595 = vpop.f32.mrb[0].mxu0
    %1596 = vmatprep.mubr.bf16.mxu0 0
    %1597 = vmatmul.mubr.bf16.gmra.mrb[0].mxu0 %v1360
    %v1598 = vpop.f32.mrb[0].mxu0
    %v1599 = vadd.f32 0.0, %v1598
    %v1600 = vpop.f32.mrb[0].mxu0
    %v1601 = vpop.f32.mrb[0].mxu0
    %v1602 = vadd.f32 0.0, %v1601
    %v1603 = vpop.f32.mrb[0].mxu0
    %1604 = vmatprep.mubr.bf16.mxu0 0
    %1605 = vmatmul.mubr.bf16.gmra.mrb[0].mxu0 %v1363
    %v1606 = vpop.f32.mrb[0].mxu0
    %v1607 = vadd.f32 0.0, %v1606
    %v1608 = vpop.f32.mrb[0].mxu0
    %v1609 = vpop.f32.mrb[0].mxu0
    %v1610 = vadd.f32 0.0, %v1609
    %v1611 = vpop.f32.mrb[0].mxu0
    %1612 = vmatprep.mubr.bf16.mxu0 0
    %1613 = vmatmul.mubr.bf16.gmra.mrb[0].mxu0 %v1366
    %v1614 = vpop.f32.mrb[0].mxu0
    %v1615 = vadd.f32 0.0, %v1614
    %v1616 = vpop.f32.mrb[0].mxu0
    %v1617 = vpop.f32.mrb[0].mxu0
    %v1618 = vadd.f32 0.0, %v1617
    %v1619 = vpop.f32.mrb[0].mxu0
    %1620 = vmatprep.mubr.bf16.mxu0 0
    %1621 = vmatmul.mubr.bf16.gmra.mrb[0].mxu0 %v1369
    %v1622 = vpop.f32.mrb[0].mxu0
    %v1623 = vadd.f32 0.0, %v1622
    %v1624 = vpop.f32.mrb[0].mxu0
    %v1625 = vpop.f32.mrb[0].mxu0
    %v1626 = vadd.f32 0.0, %v1625
    %v1627 = vpop.f32.mrb[0].mxu0
    %1628 = vmatprep.mubr.bf16.mxu0 0
    %1629 = vmatmul.mubr.bf16.gmra.mrb[0].mxu0 %v1372
    %v1630 = vpop.f32.mrb[0].mxu0
    %v1631 = vadd.f32 0.0, %v1630
    %v1632 = vpop.f32.mrb[0].mxu0
    %v1633 = vpop.f32.mrb[0].mxu0
    %v1634 = vadd.f32 0.0, %v1633
    %v1635 = vpop.f32.mrb[0].mxu0
    %1636 = vmatprep.mubr.bf16.mxu0 0
    %1637 = vmatmul.mubr.bf16.gmra.mrb[0].mxu0 %v1375
    %v1638 = vpop.f32.mrb[0].mxu0
    %v1639 = vadd.f32 0.0, %v1638
    %v1640 = vpop.f32.mrb[0].mxu0
    %v1641 = vpop.f32.mrb[0].mxu0
    %v1642 = vadd.f32 0.0, %v1641
    %v1643 = vpop.f32.mrb[0].mxu0
    %1644 = vmatprep.mubr.bf16.mxu0 0
    %1645 = vmatmul.mubr.bf16.gmra.mrb[0].mxu0 %v1378
    %v1646 = vpop.f32.mrb[0].mxu0
    %v1647 = vadd.f32 0.0, %v1646
    %v1648 = vpop.f32.mrb[0].mxu0
    %v1649 = vpop.f32.mrb[0].mxu0
    %v1650 = vadd.f32 0.0, %v1649
    %v1651 = vpop.f32.mrb[0].mxu0
    %1652 = vmatprep.mubr.bf16.mxu0 0
    %1653 = vmatmul.mubr.bf16.gmra.mrb[0].mxu0 %v1381
    %v1654 = vpop.f32.mrb[0].mxu0
    %v1655 = vadd.f32 0.0, %v1654
    %v1656 = vpop.f32.mrb[0].mxu0
    %v1657 = vpop.f32.mrb[0].mxu0
    %v1658 = vadd.f32 0.0, %v1657
    %v1659 = vpop.f32.mrb[0].mxu0
    %1660 = vmatprep.mubr.bf16.mxu0 0
    %1661 = vmatmul.mubr.bf16.gmra.mrb[0].mxu0 %v1384
    %v1662 = vpop.f32.mrb[0].mxu0
    %v1663 = vadd.f32 0.0, %v1662
    %v1664 = vpop.f32.mrb[0].mxu0
    %v1665 = vpop.f32.mrb[0].mxu0
    %v1666 = vadd.f32 0.0, %v1665
    %v1667 = vpop.f32.mrb[0].mxu0
    %1668 = vmatprep.mubr.bf16.mxu0 0
    %1669 = vmatmul.mubr.bf16.gmra.mrb[0].mxu0 %v1387
    %v1670 = vpop.f32.mrb[0].mxu0
    %v1671 = vadd.f32 0.0, %v1670
    %v1672 = vpop.f32.mrb[0].mxu0
    %v1673 = vpop.f32.mrb[0].mxu0
    %v1674 = vadd.f32 0.0, %v1673
    %v1675 = vpop.f32.mrb[0].mxu0
    %1676 = vmatprep.mubr.bf16.mxu0 0
    %1677 = vmatmul.mubr.bf16.gmra.mrb[0].mxu0 %v1390
    %v1678 = vpop.f32.mrb[0].mxu0
    %v1679 = vadd.f32 0.0, %v1678
    %v1680 = vpop.f32.mrb[0].mxu0
    %v1681 = vpop.f32.mrb[0].mxu0
    %v1682 = vadd.f32 0.0, %v1681
    %v1683 = vpop.f32.mrb[0].mxu0
    %1684 = vmatprep.mubr.bf16.mxu0 0
    %1685 = vmatmul.mubr.bf16.gmra.mrb[0].mxu0 %v1393
    %v1686 = vpop.f32.mrb[0].mxu0
    %v1687 = vadd.f32 0.0, %v1686
    %v1688 = vpop.f32.mrb[0].mxu0
    %v1689 = vpop.f32.mrb[0].mxu0
    %v1690 = vadd.f32 0.0, %v1689
    %v1691 = vpop.f32.mrb[0].mxu0
    %1692 = vmatprep.mubr.bf16.mxu0 0
    %1693 = vmatmul.mubr.bf16.gmra.mrb[0].mxu0 %v1396
    %v1694 = vpop.f32.mrb[0].mxu0
    %v1695 = vadd.f32 0.0, %v1694
    %v1696 = vpop.f32.mrb[0].mxu0
    %v1697 = vpop.f32.mrb[0].mxu0
    %v1698 = vadd.f32 0.0, %v1697
    %v1699 = vpop.f32.mrb[0].mxu0
    %1700 = vmatprep.mubr.bf16.mxu0 0
    %1701 = vmatmul.mubr.bf16.gmra.mrb[0].mxu0 %v1399
    %v1702 = vpop.f32.mrb[0].mxu0
    %v1703 = vadd.f32 0.0, %v1702
    %v1704 = vpop.f32.mrb[0].mxu0
    %v1705 = vpop.f32.mrb[0].mxu0
    %v1706 = vadd.f32 0.0, %v1705
    %v1707 = vpop.f32.mrb[0].mxu0
    %1708 = vmatprep.mubr.bf16.mxu0 0
    %1709 = vmatmul.mubr.bf16.gmra.mrb[0].mxu0 %v1402
    %v1710 = vpop.f32.mrb[0].mxu0
    %v1711 = vadd.f32 0.0, %v1710
    %v1712 = vpop.f32.mrb[0].mxu0
    %v1713 = vpop.f32.mrb[0].mxu0
    %v1714 = vadd.f32 0.0, %v1713
    %v1715 = vpop.f32.mrb[0].mxu0
    %1716 = vmatprep.mubr.bf16.mxu0 0
    %1717 = vmatmul.mubr.bf16.gmra.mrb[0].mxu0 %v1405
    %v1718 = vpop.f32.mrb[0].mxu0
    %v1719 = vadd.f32 0.0, %v1718
    %v1720 = vpop.f32.mrb[0].mxu0
    %v1721 = vpop.f32.mrb[0].mxu0
    %v1722 = vadd.f32 0.0, %v1721
    %v1723 = vpop.f32.mrb[0].mxu0
    %1724 = vmatprep.mubr.bf16.mxu0 0
    %1725 = vmatmul.mubr.bf16.gmra.mrb[0].mxu0 %v1408
    %v1726 = vpop.f32.mrb[0].mxu0
    %v1727 = vadd.f32 0.0, %v1726
    %v1728 = vpop.f32.mrb[0].mxu0
    %v1729 = vpop.f32.mrb[0].mxu0
    %v1730 = vadd.f32 0.0, %v1729
    %v1731 = vpop.f32.mrb[0].mxu0
    %1732 = vmatprep.mubr.bf16.mxu0 0
    %1733 = vmatmul.mubr.bf16.gmra.mrb[0].mxu0 %v1411
    %v1734 = vpop.f32.mrb[0].mxu0
    %v1735 = vadd.f32 0.0, %v1734
    %v1736 = vpop.f32.mrb[0].mxu0
    %v1737 = vpop.f32.mrb[0].mxu0
    %v1738 = vadd.f32 0.0, %v1737
    %v1739 = vpop.f32.mrb[0].mxu0
    %1740 = vmatprep.mubr.bf16.mxu0 0
    %1741 = vmatmul.mubr.bf16.gmra.mrb[0].mxu0 %v1414
    %v1742 = vpop.f32.mrb[0].mxu0
    %v1743 = vadd.f32 0.0, %v1742
    %v1744 = vpop.f32.mrb[0].mxu0
    %v1745 = vpop.f32.mrb[0].mxu0
    %v1746 = vadd.f32 0.0, %v1745
    %v1747 = vpop.f32.mrb[0].mxu0
    %1748 = vmatprep.mubr.bf16.mxu0 0
    %1749 = vmatmul.mubr.bf16.gmra.mrb[0].mxu0 %v1417
    %v1750 = vpop.f32.mrb[0].mxu0
    %v1751 = vadd.f32 0.0, %v1750
    %v1752 = vpop.f32.mrb[0].mxu0
    %v1753 = vpop.f32.mrb[0].mxu0
    %v1754 = vadd.f32 0.0, %v1753
    %v1755 = vpop.f32.mrb[0].mxu0
    %1756 = vmatprep.mubr.bf16.mxu0 0
    %1757 = vmatmul.mubr.bf16.gmra.mrb[0].mxu0 %v1420
    %v1758 = vpop.f32.mrb[0].mxu0
    %v1759 = vadd.f32 0.0, %v1758
    %v1760 = vpop.f32.mrb[0].mxu0
    %v1761 = vpop.f32.mrb[0].mxu0
    %v1762 = vadd.f32 0.0, %v1761
    %v1763 = vpop.f32.mrb[0].mxu0
    %1764 = vmatprep.mubr.bf16.mxu0 0
    %1765 = vmatmul.mubr.bf16.gmra.mrb[0].mxu0 %v1423
    %v1766 = vpop.f32.mrb[0].mxu0
    %v1767 = vadd.f32 0.0, %v1766
    %v1768 = vpop.f32.mrb[0].mxu0
    %v1769 = vpop.f32.mrb[0].mxu0
    %v1770 = vpop.f32.mrb[0].mxu0
    %1771 = vdwg.mxu0
    %v1772 = vadd.f32 %v881, %v1463
    %v1773 = vadd.f32 %v884, %v1466
    %v1774 = vadd.f32 %v889, %v1471
    %v1775 = vadd.f32 %v892, %v1474
    %v1776 = vadd.f32 %v897, %v1479
    %v1777 = vadd.f32 %v900, %v1482
    %v1778 = vadd.f32 %v905, %v1487
    %v1779 = vadd.f32 %v908, %v1490
    %v1780 = vadd.f32 %v913, %v1495
    %v1781 = vadd.f32 %v916, %v1498
    %v1782 = vadd.f32 %v921, %v1503
    %v1783 = vadd.f32 %v924, %v1506
    %v1784 = vadd.f32 %v929, %v1511
    %v1785 = vadd.f32 %v932, %v1514
    %v1786 = vadd.f32 %v937, %v1519
    %v1787 = vadd.f32 %v940, %v1522
    %v1788 = vadd.f32 %v945, %v1527
    %v1789 = vadd.f32 %v948, %v1530
    %v1790 = vadd.f32 %v953, %v1535
    %v1791 = vadd.f32 %v956, %v1538
    %v1792 = vadd.f32 %v961, %v1543
    %v1793 = vadd.f32 %v964, %v1546
    %v1794 = vadd.f32 %v969, %v1551
    %v1795 = vadd.f32 %v972, %v1554
    %v1796 = vadd.f32 %v977, %v1559
    %v1797 = vadd.f32 %v980, %v1562
    %v1798 = vadd.f32 %v985, %v1567
    %v1799 = vadd.f32 %v988, %v1570
    %v1800 = vadd.f32 %v993, %v1575
    %v1801 = vadd.f32 %v996, %v1578
    %v1802 = vadd.f32 %v1001, %v1583
    %v1803 = vadd.f32 %v1004, %v1586
    %v1804 = vadd.f32 %v1009, %v1591
    %v1805 = vadd.f32 %v1012, %v1594
    %v1806 = vadd.f32 %v1017, %v1599
    %v1807 = vadd.f32 %v1020, %v1602
    %v1808 = vadd.f32 %v1025, %v1607
    %v1809 = vadd.f32 %v1028, %v1610
    %v1810 = vadd.f32 %v1033, %v1615
    %v1811 = vadd.f32 %v1036, %v1618
    %v1812 = vadd.f32 %v1041, %v1623
    %v1813 = vadd.f32 %v1044, %v1626
    %v1814 = vadd.f32 %v1049, %v1631
    %v1815 = vadd.f32 %v1052, %v1634
    %v1816 = vadd.f32 %v1057, %v1639
    %v1817 = vadd.f32 %v1060, %v1642
    %v1818 = vadd.f32 %v1065, %v1647
    %v1819 = vadd.f32 %v1068, %v1650
    %v1820 = vadd.f32 %v1073, %v1655
    %v1821 = vadd.f32 %v1076, %v1658
    %v1822 = vadd.f32 %v1081, %v1663
    %v1823 = vadd.f32 %v1084, %v1666
    %v1824 = vadd.f32 %v1089, %v1671
    %v1825 = vadd.f32 %v1092, %v1674
    %v1826 = vadd.f32 %v1097, %v1679
    %v1827 = vadd.f32 %v1100, %v1682
    %v1828 = vadd.f32 %v1105, %v1687
    %v1829 = vadd.f32 %v1108, %v1690
    %v1830 = vadd.f32 %v1113, %v1695
    %v1831 = vadd.f32 %v1116, %v1698
    %v1832 = vadd.f32 %v1121, %v1703
    %v1833 = vadd.f32 %v1124, %v1706
    %v1834 = vadd.f32 %v1129, %v1711
    %v1835 = vadd.f32 %v1132, %v1714
    %v1836 = vadd.f32 %v1137, %v1719
    %v1837 = vadd.f32 %v1140, %v1722
    %v1838 = vadd.f32 %v1145, %v1727
    %v1839 = vadd.f32 %v1148, %v1730
    %v1840 = vadd.f32 %v1153, %v1735
    %v1841 = vadd.f32 %v1156, %v1738
    %v1842 = vadd.f32 %v1161, %v1743
    %v1843 = vadd.f32 %v1164, %v1746
    %v1844 = vadd.f32 %v1169, %v1751
    %v1845 = vadd.f32 %v1172, %v1754
    %v1846 = vadd.f32 %v1177, %v1759
    %v1847 = vadd.f32 %v1180, %v1762
    %v1848 = vadd.f32 %v1185, %v1767
    %v1849 = vld [vmem:[%s0 + $0x12] sm:$0xff]
    %v1850 = vld [vmem:[%s0 + $0x1a] sm:$0xff]
    %v1851 = vld [vmem:[%s0 + $0x22] sm:$0xff]
    %v1852 = vld [vmem:[%s0 + $0x2a] sm:$0xff]
    %v1853 = vld [vmem:[%s0 + $0x32] sm:$0xff]
    %v1854 = vld [vmem:[%s0 + $0x3a] sm:$0xff]
    %v1855 = vld [vmem:[%s0 + $0x42] sm:$0xff]
    %v1856 = vld [vmem:[%s0 + $0x4a] sm:$0xff]
    %v1857 = vld [vmem:[%s0 + $0x52] sm:$0xff]
    %v1858 = vld [vmem:[%s0 + $0x5a] sm:$0xff]
    %v1859 = vld [vmem:[%s0 + $0x62] sm:$0xff]
    %v1860 = vld [vmem:[%s0 + $0x6a] sm:$0xff]
    %v1861 = vld [vmem:[%s0 + $0x72] sm:$0xff]
    %v1862 = vld [vmem:[%s0 + $0x7a] sm:$0xff]
    %v1863 = vld [vmem:[%s0 + $0x82] sm:$0xff]
    %v1864 = vld [vmem:[%s0 + $0x8a] sm:$0xff]
    %v1865 = vld [vmem:[%s0 + $0x92] sm:$0xff]
    %v1866 = vld [vmem:[%s0 + $0x9a] sm:$0xff]
    %v1867 = vld [vmem:[%s0 + $0xa2] sm:$0xff]
    %v1868 = vld [vmem:[%s0 + $0xaa] sm:$0xff]
    %v1869 = vld [vmem:[%s0 + $0xb2] sm:$0xff]
    %v1870 = vld [vmem:[%s0 + $0xba] sm:$0xff]
    %v1871 = vld [vmem:[%s0 + $0xc2] sm:$0xff]
    %v1872 = vld [vmem:[%s0 + $0xca] sm:$0xff]
    %v1873 = vld [vmem:[%s0 + $0xd2] sm:$0xff]
    %v1874 = vld [vmem:[%s0 + $0xda] sm:$0xff]
    %v1875 = vld [vmem:[%s0 + $0xe2] sm:$0xff]
    %v1876 = vld [vmem:[%s0 + $0xea] sm:$0xff]
    %v1877 = vld [vmem:[%s0 + $0xf2] sm:$0xff]
    %v1878 = vld [vmem:[%s0 + $0xfa] sm:$0xff]
    %v1879 = vld [vmem:[%s0 + $0x102] sm:$0xff]
    %v1880 = vld [vmem:[%s0 + $0x10a] sm:$0xff]
    %v1881 = vld [vmem:[%s0 + $0x112] sm:$0xff]
    %v1882 = vld [vmem:[%s0 + $0x11a] sm:$0xff]
    %v1883 = vld [vmem:[%s0 + $0x122] sm:$0xff]
    %v1884 = vld [vmem:[%s0 + $0x12a] sm:$0xff]
    %v1885 = vld [vmem:[%s0 + $0x132] sm:$0xff]
    %v1886 = vld [vmem:[%s0 + $0x13a] sm:$0xff]
    %v1887 = vld [vmem:[%s0 + $0x142] sm:$0xff]
    %v1888 = vld [vmem:[%s0 + $0x14a] sm:$0xff]
    %v1889 = vld [vmem:[%s0 + $0x152] sm:$0xff]
    %v1890 = vld [vmem:[%s0 + $0x15a] sm:$0xff]
    %v1891 = vld [vmem:[%s0 + $0x162] sm:$0xff]
    %v1892 = vld [vmem:[%s0 + $0x16a] sm:$0xff]
    %v1893 = vld [vmem:[%s0 + $0x172] sm:$0xff]
    %v1894 = vld [vmem:[%s0 + $0x17a] sm:$0xff]
    %v1895 = vld [vmem:[%s0 + $0x182] sm:$0xff]
    %v1896 = vld [vmem:[%s0 + $0x18a] sm:$0xff]
    %v1897 = vld [vmem:[%s0 + $0x192] sm:$0xff]
    %v1898 = vld [vmem:[%s0 + $0x19a] sm:$0xff]
    %v1899 = vld [vmem:[%s0 + $0x1a2] sm:$0xff]
    %v1900 = vld [vmem:[%s0 + $0x1aa] sm:$0xff]
    %v1901 = vld [vmem:[%s0 + $0x1b2] sm:$0xff]
    %v1902 = vld [vmem:[%s0 + $0x1ba] sm:$0xff]
    %v1903 = vld [vmem:[%s0 + $0x1c2] sm:$0xff]
    %v1904 = vld [vmem:[%s0 + $0x1ca] sm:$0xff]
    %v1905 = vld [vmem:[%s0 + $0x1d2] sm:$0xff]
    %v1906 = vld [vmem:[%s0 + $0x1da] sm:$0xff]
    %v1907 = vld [vmem:[%s0 + $0x1e2] sm:$0xff]
    %v1908 = vld [vmem:[%s0 + $0x1ea] sm:$0xff]
    %v1909 = vld [vmem:[%s0 + $0x1f2] sm:$0xff]
    %v1910 = vld [vmem:[%s0 + $0x1fa] sm:$0xff]
    %v1911 = vld [vmem:[%s0 + $0x202] sm:$0xff]
    %v1912 = vld [vmem:[%s0 + $0x20a] sm:$0xff]
    %v1913 = vld [vmem:[%s0 + $0x212] sm:$0xff]
    %v1914 = vld [vmem:[%s0 + $0x21a] sm:$0xff]
    %v1915 = vld [vmem:[%s0 + $0x222] sm:$0xff]
    %v1916 = vld [vmem:[%s0 + $0x22a] sm:$0xff]
    %v1917 = vld [vmem:[%s0 + $0x232] sm:$0xff]
    %v1918 = vld [vmem:[%s0 + $0x23a] sm:$0xff]
    %v1919 = vld [vmem:[%s0 + $0x242] sm:$0xff]
    %v1920 = vld [vmem:[%s0 + $0x24a] sm:$0xff]
    %v1921 = vld [vmem:[%s0 + $0x252] sm:$0xff]
    %v1922 = vld [vmem:[%s0 + $0x25a] sm:$0xff]
    %v1923 = vld [vmem:[%s0 + $0x262] sm:$0xff]
    %v1924 = vld [vmem:[%s0 + $0x26a] sm:$0xff]
    %v1925 = vld [vmem:[%s0 + $0x272] sm:$0x3]
    %v1926 = vpack.c.bf16 %v1850, %v1849
    %v1927 = vpack.c.bf16 %v1852, %v1851
    %v1928 = vpack.c.bf16 %v1854, %v1853
    %v1929 = vpack.c.bf16 %v1856, %v1855
    %v1930 = vpack.c.bf16 %v1858, %v1857
    %v1931 = vpack.c.bf16 %v1860, %v1859
    %v1932 = vpack.c.bf16 %v1862, %v1861
    %v1933 = vpack.c.bf16 %v1864, %v1863
    %v1934 = vpack.c.bf16 %v1866, %v1865
    %v1935 = vpack.c.bf16 %v1868, %v1867
    %v1936 = vpack.c.bf16 %v1870, %v1869
    %v1937 = vpack.c.bf16 %v1872, %v1871
    %v1938 = vpack.c.bf16 %v1874, %v1873
    %v1939 = vpack.c.bf16 %v1876, %v1875
    %v1940 = vpack.c.bf16 %v1878, %v1877
    %v1941 = vpack.c.bf16 %v1880, %v1879
    %v1942 = vpack.c.bf16 %v1882, %v1881
    %v1943 = vpack.c.bf16 %v1884, %v1883
    %v1944 = vpack.c.bf16 %v1886, %v1885
    %v1945 = vpack.c.bf16 %v1888, %v1887
    %v1946 = vpack.c.bf16 %v1890, %v1889
    %v1947 = vpack.c.bf16 %v1892, %v1891
    %v1948 = vpack.c.bf16 %v1894, %v1893
    %v1949 = vpack.c.bf16 %v1896, %v1895
    %v1950 = vpack.c.bf16 %v1898, %v1897
    %v1951 = vpack.c.bf16 %v1900, %v1899
    %v1952 = vpack.c.bf16 %v1902, %v1901
    %v1953 = vpack.c.bf16 %v1904, %v1903
    %v1954 = vpack.c.bf16 %v1906, %v1905
    %v1955 = vpack.c.bf16 %v1908, %v1907
    %v1956 = vpack.c.bf16 %v1910, %v1909
    %v1957 = vpack.c.bf16 %v1912, %v1911
    %v1958 = vpack.c.bf16 %v1914, %v1913
    %v1959 = vpack.c.bf16 %v1916, %v1915
    %v1960 = vpack.c.bf16 %v1918, %v1917
    %v1961 = vpack.c.bf16 %v1920, %v1919
    %v1962 = vpack.c.bf16 %v1922, %v1921
    %v1963 = vpack.c.bf16 %v1924, %v1923
    %v1964 = vpack.c.bf16 %v1925, %v1925
    %s1965 = scalar_lea.vmem %s1, 6
    %v1966 = vld [vmem:[%s1965] sm:$0x3]
    %v1968 = vsel %vm260, %v1926, 0
    %v1971 = vsel %vm260, %v1927, 0
    %v1974 = vsel %vm260, %v1928, 0
    %v1977 = vsel %vm260, %v1929, 0
    %v1980 = vsel %vm260, %v1930, 0
    %v1983 = vsel %vm260, %v1931, 0
    %v1986 = vsel %vm260, %v1932, 0
    %v1989 = vsel %vm260, %v1933, 0
    %v1992 = vsel %vm260, %v1934, 0
    %v1995 = vsel %vm260, %v1935, 0
    %v1998 = vsel %vm260, %v1936, 0
    %v2001 = vsel %vm260, %v1937, 0
    %v2004 = vsel %vm260, %v1938, 0
    %v2007 = vsel %vm260, %v1939, 0
    %v2010 = vsel %vm260, %v1940, 0
    %v2013 = vsel %vm260, %v1941, 0
    %v2016 = vsel %vm260, %v1942, 0
    %v2019 = vsel %vm260, %v1943, 0
    %v2022 = vsel %vm260, %v1944, 0
    %v2025 = vsel %vm260, %v1945, 0
    %v2028 = vsel %vm260, %v1946, 0
    %v2031 = vsel %vm260, %v1947, 0
    %v2034 = vsel %vm260, %v1948, 0
    %v2037 = vsel %vm260, %v1949, 0
    %v2040 = vsel %vm260, %v1950, 0
    %v2043 = vsel %vm260, %v1951, 0
    %v2046 = vsel %vm260, %v1952, 0
    %v2049 = vsel %vm260, %v1953, 0
    %v2052 = vsel %vm260, %v1954, 0
    %v2055 = vsel %vm260, %v1955, 0
    %v2058 = vsel %vm260, %v1956, 0
    %v2061 = vsel %vm260, %v1957, 0
    %v2064 = vsel %vm260, %v1958, 0
    %v2067 = vsel %vm260, %v1959, 0
    %v2070 = vsel %vm260, %v1960, 0
    %v2073 = vsel %vm260, %v1961, 0
    %v2076 = vsel %vm260, %v1962, 0
    %v2079 = vsel %vm260, %v1963, 0
    %v2082 = vsel %vm260, %v1964, 0
    %v2085 = vsel %vm378, %v1966, 0
    %2087 = vmatprep.subr.bf16.mxu0 0
    %2088 = vmatpush1.bf16.msra.mxu0 %v2085
    %2089 = vmatprep.subr.bf16.mxu0 0
    %2090 = vmatpush1.bf16.msra.mxu0 0
    %2091 = vmatprep.subr.bf16.mxu0 0
    %2092 = vmatpush1.bf16.msra.mxu0 0
    %2093 = vmatprep.subr.bf16.mxu0 0
    %2094 = vmatpush1.bf16.msra.mxu0 0
    %2095 = vmatprep.subr.bf16.mxu0 0
    %2096 = vmatpush1.bf16.msra.mxu0 0
    %2097 = vmatprep.subr.bf16.mxu0 0
    %2098 = vmatpush1.bf16.msra.mxu0 0
    %2099 = vmatprep.subr.bf16.mxu0 0
    %2100 = vmatpush1.bf16.msra.mxu0 0
    %2101 = vmatprep.subr.bf16.mxu0 0
    %2102 = vmatpush1.bf16.msra.mxu0 0
    %2103 = vmatprep.subr.bf16.mxu0 0
    %2104 = vmatpush1.bf16.msra.mxu0 0
    %2105 = vmatprep.subr.bf16.mxu0 0
    %2106 = vmatpush1.bf16.msra.mxu0 0
    %2107 = vmatprep.subr.bf16.mxu0 0
    %2108 = vmatpush1.bf16.msra.mxu0 0
    %2109 = vmatprep.subr.bf16.mxu0 0
    %2110 = vmatpush1.bf16.msra.mxu0 0
    %2111 = vmatprep.subr.bf16.mxu0 0
    %2112 = vmatpush1.bf16.msra.mxu0 0
    %2113 = vmatprep.subr.bf16.mxu0 0
    %2114 = vmatpush1.bf16.msra.mxu0 0
    %2115 = vmatprep.subr.bf16.mxu0 0
    %2116 = vmatpush1.bf16.msra.mxu0 0
    %2117 = vmatprep.subr.bf16.mxu0 0
    %2118 = vmatpush1.bf16.msra.mxu0 0
    %2119 = vmatprep.mubr.bf16.mxu0 0
    %2120 = vmatmul.mubr.bf16.gmra.mrb[0].mxu0 %v1968
    %v2121 = vpop.f32.mrb[0].mxu0
    %v2122 = vadd.f32 0.0, %v2121
    %v2123 = vpop.f32.mrb[0].mxu0
    %v2124 = vpop.f32.mrb[0].mxu0
    %v2125 = vadd.f32 0.0, %v2124
    %v2126 = vpop.f32.mrb[0].mxu0
    %2127 = vmatprep.mubr.bf16.mxu0 0
    %2128 = vmatmul.mubr.bf16.gmra.mrb[0].mxu0 %v1971
    %v2129 = vpop.f32.mrb[0].mxu0
    %v2130 = vadd.f32 0.0, %v2129
    %v2131 = vpop.f32.mrb[0].mxu0
    %v2132 = vpop.f32.mrb[0].mxu0
    %v2133 = vadd.f32 0.0, %v2132
    %v2134 = vpop.f32.mrb[0].mxu0
    %2135 = vmatprep.mubr.bf16.mxu0 0
    %2136 = vmatmul.mubr.bf16.gmra.mrb[0].mxu0 %v1974
    %v2137 = vpop.f32.mrb[0].mxu0
    %v2138 = vadd.f32 0.0, %v2137
    %v2139 = vpop.f32.mrb[0].mxu0
    %v2140 = vpop.f32.mrb[0].mxu0
    %v2141 = vadd.f32 0.0, %v2140
    %v2142 = vpop.f32.mrb[0].mxu0
    %2143 = vmatprep.mubr.bf16.mxu0 0
    %2144 = vmatmul.mubr.bf16.gmra.mrb[0].mxu0 %v1977
    %v2145 = vpop.f32.mrb[0].mxu0
    %v2146 = vadd.f32 0.0, %v2145
    %v2147 = vpop.f32.mrb[0].mxu0
    %v2148 = vpop.f32.mrb[0].mxu0
    %v2149 = vadd.f32 0.0, %v2148
    %v2150 = vpop.f32.mrb[0].mxu0
    %2151 = vmatprep.mubr.bf16.mxu0 0
    %2152 = vmatmul.mubr.bf16.gmra.mrb[0].mxu0 %v1980
    %v2153 = vpop.f32.mrb[0].mxu0
    %v2154 = vadd.f32 0.0, %v2153
    %v2155 = vpop.f32.mrb[0].mxu0
    %v2156 = vpop.f32.mrb[0].mxu0
    %v2157 = vadd.f32 0.0, %v2156
    %v2158 = vpop.f32.mrb[0].mxu0
    %2159 = vmatprep.mubr.bf16.mxu0 0
    %2160 = vmatmul.mubr.bf16.gmra.mrb[0].mxu0 %v1983
    %v2161 = vpop.f32.mrb[0].mxu0
    %v2162 = vadd.f32 0.0, %v2161
    %v2163 = vpop.f32.mrb[0].mxu0
    %v2164 = vpop.f32.mrb[0].mxu0
    %v2165 = vadd.f32 0.0, %v2164
    %v2166 = vpop.f32.mrb[0].mxu0
    %2167 = vmatprep.mubr.bf16.mxu0 0
    %2168 = vmatmul.mubr.bf16.gmra.mrb[0].mxu0 %v1986
    %v2169 = vpop.f32.mrb[0].mxu0
    %v2170 = vadd.f32 0.0, %v2169
    %v2171 = vpop.f32.mrb[0].mxu0
    %v2172 = vpop.f32.mrb[0].mxu0
    %v2173 = vadd.f32 0.0, %v2172
    %v2174 = vpop.f32.mrb[0].mxu0
    %2175 = vmatprep.mubr.bf16.mxu0 0
    %2176 = vmatmul.mubr.bf16.gmra.mrb[0].mxu0 %v1989
    %v2177 = vpop.f32.mrb[0].mxu0
    %v2178 = vadd.f32 0.0, %v2177
    %v2179 = vpop.f32.mrb[0].mxu0
    %v2180 = vpop.f32.mrb[0].mxu0
    %v2181 = vadd.f32 0.0, %v2180
    %v2182 = vpop.f32.mrb[0].mxu0
    %2183 = vmatprep.mubr.bf16.mxu0 0
    %2184 = vmatmul.mubr.bf16.gmra.mrb[0].mxu0 %v1992
    %v2185 = vpop.f32.mrb[0].mxu0
    %v2186 = vadd.f32 0.0, %v2185
    %v2187 = vpop.f32.mrb[0].mxu0
    %v2188 = vpop.f32.mrb[0].mxu0
    %v2189 = vadd.f32 0.0, %v2188
    %v2190 = vpop.f32.mrb[0].mxu0
    %2191 = vmatprep.mubr.bf16.mxu0 0
    %2192 = vmatmul.mubr.bf16.gmra.mrb[0].mxu0 %v1995
    %v2193 = vpop.f32.mrb[0].mxu0
    %v2194 = vadd.f32 0.0, %v2193
    %v2195 = vpop.f32.mrb[0].mxu0
    %v2196 = vpop.f32.mrb[0].mxu0
    %v2197 = vadd.f32 0.0, %v2196
    %v2198 = vpop.f32.mrb[0].mxu0
    %2199 = vmatprep.mubr.bf16.mxu0 0
    %2200 = vmatmul.mubr.bf16.gmra.mrb[0].mxu0 %v1998
    %v2201 = vpop.f32.mrb[0].mxu0
    %v2202 = vadd.f32 0.0, %v2201
    %v2203 = vpop.f32.mrb[0].mxu0
    %v2204 = vpop.f32.mrb[0].mxu0
    %v2205 = vadd.f32 0.0, %v2204
    %v2206 = vpop.f32.mrb[0].mxu0
    %2207 = vmatprep.mubr.bf16.mxu0 0
    %2208 = vmatmul.mubr.bf16.gmra.mrb[0].mxu0 %v2001
    %v2209 = vpop.f32.mrb[0].mxu0
    %v2210 = vadd.f32 0.0, %v2209
    %v2211 = vpop.f32.mrb[0].mxu0
    %v2212 = vpop.f32.mrb[0].mxu0
    %v2213 = vadd.f32 0.0, %v2212
    %v2214 = vpop.f32.mrb[0].mxu0
    %2215 = vmatprep.mubr.bf16.mxu0 0
    %2216 = vmatmul.mubr.bf16.gmra.mrb[0].mxu0 %v2004
    %v2217 = vpop.f32.mrb[0].mxu0
    %v2218 = vadd.f32 0.0, %v2217
    %v2219 = vpop.f32.mrb[0].mxu0
    %v2220 = vpop.f32.mrb[0].mxu0
    %v2221 = vadd.f32 0.0, %v2220
    %v2222 = vpop.f32.mrb[0].mxu0
    %2223 = vmatprep.mubr.bf16.mxu0 0
    %2224 = vmatmul.mubr.bf16.gmra.mrb[0].mxu0 %v2007
    %v2225 = vpop.f32.mrb[0].mxu0
    %v2226 = vadd.f32 0.0, %v2225
    %v2227 = vpop.f32.mrb[0].mxu0
    %v2228 = vpop.f32.mrb[0].mxu0
    %v2229 = vadd.f32 0.0, %v2228
    %v2230 = vpop.f32.mrb[0].mxu0
    %2231 = vmatprep.mubr.bf16.mxu0 0
    %2232 = vmatmul.mubr.bf16.gmra.mrb[0].mxu0 %v2010
    %v2233 = vpop.f32.mrb[0].mxu0
    %v2234 = vadd.f32 0.0, %v2233
    %v2235 = vpop.f32.mrb[0].mxu0
    %v2236 = vpop.f32.mrb[0].mxu0
    %v2237 = vadd.f32 0.0, %v2236
    %v2238 = vpop.f32.mrb[0].mxu0
    %2239 = vmatprep.mubr.bf16.mxu0 0
    %2240 = vmatmul.mubr.bf16.gmra.mrb[0].mxu0 %v2013
    %v2241 = vpop.f32.mrb[0].mxu0
    %v2242 = vadd.f32 0.0, %v2241
    %v2243 = vpop.f32.mrb[0].mxu0
    %v2244 = vpop.f32.mrb[0].mxu0
    %v2245 = vadd.f32 0.0, %v2244
    %v2246 = vpop.f32.mrb[0].mxu0
    %2247 = vmatprep.mubr.bf16.mxu0 0
    %2248 = vmatmul.mubr.bf16.gmra.mrb[0].mxu0 %v2016
    %v2249 = vpop.f32.mrb[0].mxu0
    %v2250 = vadd.f32 0.0, %v2249
    %v2251 = vpop.f32.mrb[0].mxu0
    %v2252 = vpop.f32.mrb[0].mxu0
    %v2253 = vadd.f32 0.0, %v2252
    %v2254 = vpop.f32.mrb[0].mxu0
    %2255 = vmatprep.mubr.bf16.mxu0 0
    %2256 = vmatmul.mubr.bf16.gmra.mrb[0].mxu0 %v2019
    %v2257 = vpop.f32.mrb[0].mxu0
    %v2258 = vadd.f32 0.0, %v2257
    %v2259 = vpop.f32.mrb[0].mxu0
    %v2260 = vpop.f32.mrb[0].mxu0
    %v2261 = vadd.f32 0.0, %v2260
    %v2262 = vpop.f32.mrb[0].mxu0
    %2263 = vmatprep.mubr.bf16.mxu0 0
    %2264 = vmatmul.mubr.bf16.gmra.mrb[0].mxu0 %v2022
    %v2265 = vpop.f32.mrb[0].mxu0
    %v2266 = vadd.f32 0.0, %v2265
    %v2267 = vpop.f32.mrb[0].mxu0
    %v2268 = vpop.f32.mrb[0].mxu0
    %v2269 = vadd.f32 0.0, %v2268
    %v2270 = vpop.f32.mrb[0].mxu0
    %2271 = vmatprep.mubr.bf16.mxu0 0
    %2272 = vmatmul.mubr.bf16.gmra.mrb[0].mxu0 %v2025
    %v2273 = vpop.f32.mrb[0].mxu0
    %v2274 = vadd.f32 0.0, %v2273
    %v2275 = vpop.f32.mrb[0].mxu0
    %v2276 = vpop.f32.mrb[0].mxu0
    %v2277 = vadd.f32 0.0, %v2276
    %v2278 = vpop.f32.mrb[0].mxu0
    %2279 = vmatprep.mubr.bf16.mxu0 0
    %2280 = vmatmul.mubr.bf16.gmra.mrb[0].mxu0 %v2028
    %v2281 = vpop.f32.mrb[0].mxu0
    %v2282 = vadd.f32 0.0, %v2281
    %v2283 = vpop.f32.mrb[0].mxu0
    %v2284 = vpop.f32.mrb[0].mxu0
    %v2285 = vadd.f32 0.0, %v2284
    %v2286 = vpop.f32.mrb[0].mxu0
    %2287 = vmatprep.mubr.bf16.mxu0 0
    %2288 = vmatmul.mubr.bf16.gmra.mrb[0].mxu0 %v2031
    %v2289 = vpop.f32.mrb[0].mxu0
    %v2290 = vadd.f32 0.0, %v2289
    %v2291 = vpop.f32.mrb[0].mxu0
    %v2292 = vpop.f32.mrb[0].mxu0
    %v2293 = vadd.f32 0.0, %v2292
    %v2294 = vpop.f32.mrb[0].mxu0
    %2295 = vmatprep.mubr.bf16.mxu0 0
    %2296 = vmatmul.mubr.bf16.gmra.mrb[0].mxu0 %v2034
    %v2297 = vpop.f32.mrb[0].mxu0
    %v2298 = vadd.f32 0.0, %v2297
    %v2299 = vpop.f32.mrb[0].mxu0
    %v2300 = vpop.f32.mrb[0].mxu0
    %v2301 = vadd.f32 0.0, %v2300
    %v2302 = vpop.f32.mrb[0].mxu0
    %2303 = vmatprep.mubr.bf16.mxu0 0
    %2304 = vmatmul.mubr.bf16.gmra.mrb[0].mxu0 %v2037
    %v2305 = vpop.f32.mrb[0].mxu0
    %v2306 = vadd.f32 0.0, %v2305
    %v2307 = vpop.f32.mrb[0].mxu0
    %v2308 = vpop.f32.mrb[0].mxu0
    %v2309 = vadd.f32 0.0, %v2308
    %v2310 = vpop.f32.mrb[0].mxu0
    %2311 = vmatprep.mubr.bf16.mxu0 0
    %2312 = vmatmul.mubr.bf16.gmra.mrb[0].mxu0 %v2040
    %v2313 = vpop.f32.mrb[0].mxu0
    %v2314 = vadd.f32 0.0, %v2313
    %v2315 = vpop.f32.mrb[0].mxu0
    %v2316 = vpop.f32.mrb[0].mxu0
    %v2317 = vadd.f32 0.0, %v2316
    %v2318 = vpop.f32.mrb[0].mxu0
    %2319 = vmatprep.mubr.bf16.mxu0 0
    %2320 = vmatmul.mubr.bf16.gmra.mrb[0].mxu0 %v2043
    %v2321 = vpop.f32.mrb[0].mxu0
    %v2322 = vadd.f32 0.0, %v2321
    %v2323 = vpop.f32.mrb[0].mxu0
    %v2324 = vpop.f32.mrb[0].mxu0
    %v2325 = vadd.f32 0.0, %v2324
    %v2326 = vpop.f32.mrb[0].mxu0
    %2327 = vmatprep.mubr.bf16.mxu0 0
    %2328 = vmatmul.mubr.bf16.gmra.mrb[0].mxu0 %v2046
    %v2329 = vpop.f32.mrb[0].mxu0
    %v2330 = vadd.f32 0.0, %v2329
    %v2331 = vpop.f32.mrb[0].mxu0
    %v2332 = vpop.f32.mrb[0].mxu0
    %v2333 = vadd.f32 0.0, %v2332
    %v2334 = vpop.f32.mrb[0].mxu0
    %2335 = vmatprep.mubr.bf16.mxu0 0
    %2336 = vmatmul.mubr.bf16.gmra.mrb[0].mxu0 %v2049
    %v2337 = vpop.f32.mrb[0].mxu0
    %v2338 = vadd.f32 0.0, %v2337
    %v2339 = vpop.f32.mrb[0].mxu0
    %v2340 = vpop.f32.mrb[0].mxu0
    %v2341 = vadd.f32 0.0, %v2340
    %v2342 = vpop.f32.mrb[0].mxu0
    %2343 = vmatprep.mubr.bf16.mxu0 0
    %2344 = vmatmul.mubr.bf16.gmra.mrb[0].mxu0 %v2052
    %v2345 = vpop.f32.mrb[0].mxu0
    %v2346 = vadd.f32 0.0, %v2345
    %v2347 = vpop.f32.mrb[0].mxu0
    %v2348 = vpop.f32.mrb[0].mxu0
    %v2349 = vadd.f32 0.0, %v2348
    %v2350 = vpop.f32.mrb[0].mxu0
    %2351 = vmatprep.mubr.bf16.mxu0 0
    %2352 = vmatmul.mubr.bf16.gmra.mrb[0].mxu0 %v2055
    %v2353 = vpop.f32.mrb[0].mxu0
    %v2354 = vadd.f32 0.0, %v2353
    %v2355 = vpop.f32.mrb[0].mxu0
    %v2356 = vpop.f32.mrb[0].mxu0
    %v2357 = vadd.f32 0.0, %v2356
    %v2358 = vpop.f32.mrb[0].mxu0
    %2359 = vmatprep.mubr.bf16.mxu0 0
    %2360 = vmatmul.mubr.bf16.gmra.mrb[0].mxu0 %v2058
    %v2361 = vpop.f32.mrb[0].mxu0
    %v2362 = vadd.f32 0.0, %v2361
    %v2363 = vpop.f32.mrb[0].mxu0
    %v2364 = vpop.f32.mrb[0].mxu0
    %v2365 = vadd.f32 0.0, %v2364
    %v2366 = vpop.f32.mrb[0].mxu0
    %2367 = vmatprep.mubr.bf16.mxu0 0
    %2368 = vmatmul.mubr.bf16.gmra.mrb[0].mxu0 %v2061
    %v2369 = vpop.f32.mrb[0].mxu0
    %v2370 = vadd.f32 0.0, %v2369
    %v2371 = vpop.f32.mrb[0].mxu0
    %v2372 = vpop.f32.mrb[0].mxu0
    %v2373 = vadd.f32 0.0, %v2372
    %v2374 = vpop.f32.mrb[0].mxu0
    %2375 = vmatprep.mubr.bf16.mxu0 0
    %2376 = vmatmul.mubr.bf16.gmra.mrb[0].mxu0 %v2064
    %v2377 = vpop.f32.mrb[0].mxu0
    %v2378 = vadd.f32 0.0, %v2377
    %v2379 = vpop.f32.mrb[0].mxu0
    %v2380 = vpop.f32.mrb[0].mxu0
    %v2381 = vadd.f32 0.0, %v2380
    %v2382 = vpop.f32.mrb[0].mxu0
    %2383 = vmatprep.mubr.bf16.mxu0 0
    %2384 = vmatmul.mubr.bf16.gmra.mrb[0].mxu0 %v2067
    %v2385 = vpop.f32.mrb[0].mxu0
    %v2386 = vadd.f32 0.0, %v2385
    %v2387 = vpop.f32.mrb[0].mxu0
    %v2388 = vpop.f32.mrb[0].mxu0
    %v2389 = vadd.f32 0.0, %v2388
    %v2390 = vpop.f32.mrb[0].mxu0
    %2391 = vmatprep.mubr.bf16.mxu0 0
    %2392 = vmatmul.mubr.bf16.gmra.mrb[0].mxu0 %v2070
    %v2393 = vpop.f32.mrb[0].mxu0
    %v2394 = vadd.f32 0.0, %v2393
    %v2395 = vpop.f32.mrb[0].mxu0
    %v2396 = vpop.f32.mrb[0].mxu0
    %v2397 = vadd.f32 0.0, %v2396
    %v2398 = vpop.f32.mrb[0].mxu0
    %2399 = vmatprep.mubr.bf16.mxu0 0
    %2400 = vmatmul.mubr.bf16.gmra.mrb[0].mxu0 %v2073
    %v2401 = vpop.f32.mrb[0].mxu0
    %v2402 = vadd.f32 0.0, %v2401
    %v2403 = vpop.f32.mrb[0].mxu0
    %v2404 = vpop.f32.mrb[0].mxu0
    %v2405 = vadd.f32 0.0, %v2404
    %v2406 = vpop.f32.mrb[0].mxu0
    %2407 = vmatprep.mubr.bf16.mxu0 0
    %2408 = vmatmul.mubr.bf16.gmra.mrb[0].mxu0 %v2076
    %v2409 = vpop.f32.mrb[0].mxu0
    %v2410 = vadd.f32 0.0, %v2409
    %v2411 = vpop.f32.mrb[0].mxu0
    %v2412 = vpop.f32.mrb[0].mxu0
    %v2413 = vadd.f32 0.0, %v2412
    %v2414 = vpop.f32.mrb[0].mxu0
    %2415 = vmatprep.mubr.bf16.mxu0 0
    %2416 = vmatmul.mubr.bf16.gmra.mrb[0].mxu0 %v2079
    %v2417 = vpop.f32.mrb[0].mxu0
    %v2418 = vadd.f32 0.0, %v2417
    %v2419 = vpop.f32.mrb[0].mxu0
    %v2420 = vpop.f32.mrb[0].mxu0
    %v2421 = vadd.f32 0.0, %v2420
    %v2422 = vpop.f32.mrb[0].mxu0
    %2423 = vmatprep.mubr.bf16.mxu0 0
    %2424 = vmatmul.mubr.bf16.gmra.mrb[0].mxu0 %v2082
    %v2425 = vpop.f32.mrb[0].mxu0
    %v2426 = vadd.f32 0.0, %v2425
    %v2427 = vpop.f32.mrb[0].mxu0
    %v2428 = vpop.f32.mrb[0].mxu0
    %v2429 = vpop.f32.mrb[0].mxu0
    %2430 = vdwg.mxu0
    %v2431 = vadd.f32 %v1772, %v2122
    %v2432 = vadd.f32 %v1773, %v2125
    %v2433 = vadd.f32 %v1774, %v2130
    %v2434 = vadd.f32 %v1775, %v2133
    %v2435 = vadd.f32 %v1776, %v2138
    %v2436 = vadd.f32 %v1777, %v2141
    %v2437 = vadd.f32 %v1778, %v2146
    %v2438 = vadd.f32 %v1779, %v2149
    %v2439 = vadd.f32 %v1780, %v2154
    %v2440 = vadd.f32 %v1781, %v2157
    %v2441 = vadd.f32 %v1782, %v2162
    %v2442 = vadd.f32 %v1783, %v2165
    %v2443 = vadd.f32 %v1784, %v2170
    %v2444 = vadd.f32 %v1785, %v2173
    %v2445 = vadd.f32 %v1786, %v2178
    %v2446 = vadd.f32 %v1787, %v2181
    %v2447 = vadd.f32 %v1788, %v2186
    %v2448 = vadd.f32 %v1789, %v2189
    %v2449 = vadd.f32 %v1790, %v2194
    %v2450 = vadd.f32 %v1791, %v2197
    %v2451 = vadd.f32 %v1792, %v2202
    %v2452 = vadd.f32 %v1793, %v2205
    %v2453 = vadd.f32 %v1794, %v2210
    %v2454 = vadd.f32 %v1795, %v2213
    %v2455 = vadd.f32 %v1796, %v2218
    %v2456 = vadd.f32 %v1797, %v2221
    %v2457 = vadd.f32 %v1798, %v2226
    %v2458 = vadd.f32 %v1799, %v2229
    %v2459 = vadd.f32 %v1800, %v2234
    %v2460 = vadd.f32 %v1801, %v2237
    %v2461 = vadd.f32 %v1802, %v2242
    %v2462 = vadd.f32 %v1803, %v2245
    %v2463 = vadd.f32 %v1804, %v2250
    %v2464 = vadd.f32 %v1805, %v2253
    %v2465 = vadd.f32 %v1806, %v2258
    %v2466 = vadd.f32 %v1807, %v2261
    %v2467 = vadd.f32 %v1808, %v2266
    %v2468 = vadd.f32 %v1809, %v2269
    %v2469 = vadd.f32 %v1810, %v2274
    %v2470 = vadd.f32 %v1811, %v2277
    %v2471 = vadd.f32 %v1812, %v2282
    %v2472 = vadd.f32 %v1813, %v2285
    %v2473 = vadd.f32 %v1814, %v2290
    %v2474 = vadd.f32 %v1815, %v2293
    %v2475 = vadd.f32 %v1816, %v2298
    %v2476 = vadd.f32 %v1817, %v2301
    %v2477 = vadd.f32 %v1818, %v2306
    %v2478 = vadd.f32 %v1819, %v2309
    %v2479 = vadd.f32 %v1820, %v2314
    %v2480 = vadd.f32 %v1821, %v2317
    %v2481 = vadd.f32 %v1822, %v2322
    %v2482 = vadd.f32 %v1823, %v2325
    %v2483 = vadd.f32 %v1824, %v2330
    %v2484 = vadd.f32 %v1825, %v2333
    %v2485 = vadd.f32 %v1826, %v2338
    %v2486 = vadd.f32 %v1827, %v2341
    %v2487 = vadd.f32 %v1828, %v2346
    %v2488 = vadd.f32 %v1829, %v2349
    %v2489 = vadd.f32 %v1830, %v2354
    %v2490 = vadd.f32 %v1831, %v2357
    %v2491 = vadd.f32 %v1832, %v2362
    %v2492 = vadd.f32 %v1833, %v2365
    %v2493 = vadd.f32 %v1834, %v2370
    %v2494 = vadd.f32 %v1835, %v2373
    %v2495 = vadd.f32 %v1836, %v2378
    %v2496 = vadd.f32 %v1837, %v2381
    %v2497 = vadd.f32 %v1838, %v2386
    %v2498 = vadd.f32 %v1839, %v2389
    %v2499 = vadd.f32 %v1840, %v2394
    %v2500 = vadd.f32 %v1841, %v2397
    %v2501 = vadd.f32 %v1842, %v2402
    %v2502 = vadd.f32 %v1843, %v2405
    %v2503 = vadd.f32 %v1844, %v2410
    %v2504 = vadd.f32 %v1845, %v2413
    %v2505 = vadd.f32 %v1846, %v2418
    %v2506 = vadd.f32 %v1847, %v2421
    %v2507 = vadd.f32 %v1848, %v2426
    %v2508 = vld [vmem:[%s0 + $0x13] sm:$0xff]
    %v2509 = vld [vmem:[%s0 + $0x1b] sm:$0xff]
    %v2510 = vld [vmem:[%s0 + $0x23] sm:$0xff]
    %v2511 = vld [vmem:[%s0 + $0x2b] sm:$0xff]
    %v2512 = vld [vmem:[%s0 + $0x33] sm:$0xff]
    %v2513 = vld [vmem:[%s0 + $0x3b] sm:$0xff]
    %v2514 = vld [vmem:[%s0 + $0x43] sm:$0xff]
    %v2515 = vld [vmem:[%s0 + $0x4b] sm:$0xff]
    %v2516 = vld [vmem:[%s0 + $0x53] sm:$0xff]
    %v2517 = vld [vmem:[%s0 + $0x5b] sm:$0xff]
    %v2518 = vld [vmem:[%s0 + $0x63] sm:$0xff]
    %v2519 = vld [vmem:[%s0 + $0x6b] sm:$0xff]
    %v2520 = vld [vmem:[%s0 + $0x73] sm:$0xff]
    %v2521 = vld [vmem:[%s0 + $0x7b] sm:$0xff]
    %v2522 = vld [vmem:[%s0 + $0x83] sm:$0xff]
    %v2523 = vld [vmem:[%s0 + $0x8b] sm:$0xff]
    %v2524 = vld [vmem:[%s0 + $0x93] sm:$0xff]
    %v2525 = vld [vmem:[%s0 + $0x9b] sm:$0xff]
    %v2526 = vld [vmem:[%s0 + $0xa3] sm:$0xff]
    %v2527 = vld [vmem:[%s0 + $0xab] sm:$0xff]
    %v2528 = vld [vmem:[%s0 + $0xb3] sm:$0xff]
    %v2529 = vld [vmem:[%s0 + $0xbb] sm:$0xff]
    %v2530 = vld [vmem:[%s0 + $0xc3] sm:$0xff]
    %v2531 = vld [vmem:[%s0 + $0xcb] sm:$0xff]
    %v2532 = vld [vmem:[%s0 + $0xd3] sm:$0xff]
    %v2533 = vld [vmem:[%s0 + $0xdb] sm:$0xff]
    %v2534 = vld [vmem:[%s0 + $0xe3] sm:$0xff]
    %v2535 = vld [vmem:[%s0 + $0xeb] sm:$0xff]
    %v2536 = vld [vmem:[%s0 + $0xf3] sm:$0xff]
    %v2537 = vld [vmem:[%s0 + $0xfb] sm:$0xff]
    %v2538 = vld [vmem:[%s0 + $0x103] sm:$0xff]
    %v2539 = vld [vmem:[%s0 + $0x10b] sm:$0xff]
    %v2540 = vld [vmem:[%s0 + $0x113] sm:$0xff]
    %v2541 = vld [vmem:[%s0 + $0x11b] sm:$0xff]
    %v2542 = vld [vmem:[%s0 + $0x123] sm:$0xff]
    %v2543 = vld [vmem:[%s0 + $0x12b] sm:$0xff]
    %v2544 = vld [vmem:[%s0 + $0x133] sm:$0xff]
    %v2545 = vld [vmem:[%s0 + $0x13b] sm:$0xff]
    %v2546 = vld [vmem:[%s0 + $0x143] sm:$0xff]
    %v2547 = vld [vmem:[%s0 + $0x14b] sm:$0xff]
    %v2548 = vld [vmem:[%s0 + $0x153] sm:$0xff]
    %v2549 = vld [vmem:[%s0 + $0x15b] sm:$0xff]
    %v2550 = vld [vmem:[%s0 + $0x163] sm:$0xff]
    %v2551 = vld [vmem:[%s0 + $0x16b] sm:$0xff]
    %v2552 = vld [vmem:[%s0 + $0x173] sm:$0xff]
    %v2553 = vld [vmem:[%s0 + $0x17b] sm:$0xff]
    %v2554 = vld [vmem:[%s0 + $0x183] sm:$0xff]
    %v2555 = vld [vmem:[%s0 + $0x18b] sm:$0xff]
    %v2556 = vld [vmem:[%s0 + $0x193] sm:$0xff]
    %v2557 = vld [vmem:[%s0 + $0x19b] sm:$0xff]
    %v2558 = vld [vmem:[%s0 + $0x1a3] sm:$0xff]
    %v2559 = vld [vmem:[%s0 + $0x1ab] sm:$0xff]
    %v2560 = vld [vmem:[%s0 + $0x1b3] sm:$0xff]
    %v2561 = vld [vmem:[%s0 + $0x1bb] sm:$0xff]
    %v2562 = vld [vmem:[%s0 + $0x1c3] sm:$0xff]
    %v2563 = vld [vmem:[%s0 + $0x1cb] sm:$0xff]
    %v2564 = vld [vmem:[%s0 + $0x1d3] sm:$0xff]
    %v2565 = vld [vmem:[%s0 + $0x1db] sm:$0xff]
    %v2566 = vld [vmem:[%s0 + $0x1e3] sm:$0xff]
    %v2567 = vld [vmem:[%s0 + $0x1eb] sm:$0xff]
    %v2568 = vld [vmem:[%s0 + $0x1f3] sm:$0xff]
    %v2569 = vld [vmem:[%s0 + $0x1fb] sm:$0xff]
    %v2570 = vld [vmem:[%s0 + $0x203] sm:$0xff]
    %v2571 = vld [vmem:[%s0 + $0x20b] sm:$0xff]
    %v2572 = vld [vmem:[%s0 + $0x213] sm:$0xff]
    %v2573 = vld [vmem:[%s0 + $0x21b] sm:$0xff]
    %v2574 = vld [vmem:[%s0 + $0x223] sm:$0xff]
    %v2575 = vld [vmem:[%s0 + $0x22b] sm:$0xff]
    %v2576 = vld [vmem:[%s0 + $0x233] sm:$0xff]
    %v2577 = vld [vmem:[%s0 + $0x23b] sm:$0xff]
    %v2578 = vld [vmem:[%s0 + $0x243] sm:$0xff]
    %v2579 = vld [vmem:[%s0 + $0x24b] sm:$0xff]
    %v2580 = vld [vmem:[%s0 + $0x253] sm:$0xff]
    %v2581 = vld [vmem:[%s0 + $0x25b] sm:$0xff]
    %v2582 = vld [vmem:[%s0 + $0x263] sm:$0xff]
    %v2583 = vld [vmem:[%s0 + $0x26b] sm:$0xff]
    %v2584 = vld [vmem:[%s0 + $0x273] sm:$0x3]
    %v2585 = vpack.c.bf16 %v2509, %v2508
    %v2586 = vpack.c.bf16 %v2511, %v2510
    %v2587 = vpack.c.bf16 %v2513, %v2512
    %v2588 = vpack.c.bf16 %v2515, %v2514
    %v2589 = vpack.c.bf16 %v2517, %v2516
    %v2590 = vpack.c.bf16 %v2519, %v2518
    %v2591 = vpack.c.bf16 %v2521, %v2520
    %v2592 = vpack.c.bf16 %v2523, %v2522
    %v2593 = vpack.c.bf16 %v2525, %v2524
    %v2594 = vpack.c.bf16 %v2527, %v2526
    %v2595 = vpack.c.bf16 %v2529, %v2528
    %v2596 = vpack.c.bf16 %v2531, %v2530
    %v2597 = vpack.c.bf16 %v2533, %v2532
    %v2598 = vpack.c.bf16 %v2535, %v2534
    %v2599 = vpack.c.bf16 %v2537, %v2536
    %v2600 = vpack.c.bf16 %v2539, %v2538
    %v2601 = vpack.c.bf16 %v2541, %v2540
    %v2602 = vpack.c.bf16 %v2543, %v2542
    %v2603 = vpack.c.bf16 %v2545, %v2544
    %v2604 = vpack.c.bf16 %v2547, %v2546
    %v2605 = vpack.c.bf16 %v2549, %v2548
    %v2606 = vpack.c.bf16 %v2551, %v2550
    %v2607 = vpack.c.bf16 %v2553, %v2552
    %v2608 = vpack.c.bf16 %v2555, %v2554
    %v2609 = vpack.c.bf16 %v2557, %v2556
    %v2610 = vpack.c.bf16 %v2559, %v2558
    %v2611 = vpack.c.bf16 %v2561, %v2560
    %v2612 = vpack.c.bf16 %v2563, %v2562
    %v2613 = vpack.c.bf16 %v2565, %v2564
    %v2614 = vpack.c.bf16 %v2567, %v2566
    %v2615 = vpack.c.bf16 %v2569, %v2568
    %v2616 = vpack.c.bf16 %v2571, %v2570
    %v2617 = vpack.c.bf16 %v2573, %v2572
    %v2618 = vpack.c.bf16 %v2575, %v2574
    %v2619 = vpack.c.bf16 %v2577, %v2576
    %v2620 = vpack.c.bf16 %v2579, %v2578
    %v2621 = vpack.c.bf16 %v2581, %v2580
    %v2622 = vpack.c.bf16 %v2583, %v2582
    %v2623 = vpack.c.bf16 %v2584, %v2584
    %s2624 = scalar_lea.vmem %s1, 8
    %v2625 = vld [vmem:[%s2624] sm:$0x3]
    %v2627 = vsel %vm260, %v2585, 0
    %v2630 = vsel %vm260, %v2586, 0
    %v2633 = vsel %vm260, %v2587, 0
    %v2636 = vsel %vm260, %v2588, 0
    %v2639 = vsel %vm260, %v2589, 0
    %v2642 = vsel %vm260, %v2590, 0
    %v2645 = vsel %vm260, %v2591, 0
    %v2648 = vsel %vm260, %v2592, 0
    %v2651 = vsel %vm260, %v2593, 0
    %v2654 = vsel %vm260, %v2594, 0
    %v2657 = vsel %vm260, %v2595, 0
    %v2660 = vsel %vm260, %v2596, 0
    %v2663 = vsel %vm260, %v2597, 0
    %v2666 = vsel %vm260, %v2598, 0
    %v2669 = vsel %vm260, %v2599, 0
    %v2672 = vsel %vm260, %v2600, 0
    %v2675 = vsel %vm260, %v2601, 0
    %v2678 = vsel %vm260, %v2602, 0
    %v2681 = vsel %vm260, %v2603, 0
    %v2684 = vsel %vm260, %v2604, 0
    %v2687 = vsel %vm260, %v2605, 0
    %v2690 = vsel %vm260, %v2606, 0
    %v2693 = vsel %vm260, %v2607, 0
    %v2696 = vsel %vm260, %v2608, 0
    %v2699 = vsel %vm260, %v2609, 0
    %v2702 = vsel %vm260, %v2610, 0
    %v2705 = vsel %vm260, %v2611, 0
    %v2708 = vsel %vm260, %v2612, 0
    %v2711 = vsel %vm260, %v2613, 0
    %v2714 = vsel %vm260, %v2614, 0
    %v2717 = vsel %vm260, %v2615, 0
    %v2720 = vsel %vm260, %v2616, 0
    %v2723 = vsel %vm260, %v2617, 0
    %v2726 = vsel %vm260, %v2618, 0
    %v2729 = vsel %vm260, %v2619, 0
    %v2732 = vsel %vm260, %v2620, 0
    %v2735 = vsel %vm260, %v2621, 0
    %v2738 = vsel %vm260, %v2622, 0
    %v2741 = vsel %vm260, %v2623, 0
    %v2744 = vsel %vm378, %v2625, 0
    %2746 = vmatprep.subr.bf16.mxu0 0
    %2747 = vmatpush1.bf16.msra.mxu0 %v2744
    %2748 = vmatprep.subr.bf16.mxu0 0
    %2749 = vmatpush1.bf16.msra.mxu0 0
    %2750 = vmatprep.subr.bf16.mxu0 0
    %2751 = vmatpush1.bf16.msra.mxu0 0
    %2752 = vmatprep.subr.bf16.mxu0 0
    %2753 = vmatpush1.bf16.msra.mxu0 0
    %2754 = vmatprep.subr.bf16.mxu0 0
    %2755 = vmatpush1.bf16.msra.mxu0 0
    %2756 = vmatprep.subr.bf16.mxu0 0
    %2757 = vmatpush1.bf16.msra.mxu0 0
    %2758 = vmatprep.subr.bf16.mxu0 0
    %2759 = vmatpush1.bf16.msra.mxu0 0
    %2760 = vmatprep.subr.bf16.mxu0 0
    %2761 = vmatpush1.bf16.msra.mxu0 0
    %2762 = vmatprep.subr.bf16.mxu0 0
    %2763 = vmatpush1.bf16.msra.mxu0 0
    %2764 = vmatprep.subr.bf16.mxu0 0
    %2765 = vmatpush1.bf16.msra.mxu0 0
    %2766 = vmatprep.subr.bf16.mxu0 0
    %2767 = vmatpush1.bf16.msra.mxu0 0
    %2768 = vmatprep.subr.bf16.mxu0 0
    %2769 = vmatpush1.bf16.msra.mxu0 0
    %2770 = vmatprep.subr.bf16.mxu0 0
    %2771 = vmatpush1.bf16.msra.mxu0 0
    %2772 = vmatprep.subr.bf16.mxu0 0
    %2773 = vmatpush1.bf16.msra.mxu0 0
    %2774 = vmatprep.subr.bf16.mxu0 0
    %2775 = vmatpush1.bf16.msra.mxu0 0
    %2776 = vmatprep.subr.bf16.mxu0 0
    %2777 = vmatpush1.bf16.msra.mxu0 0
    %2778 = vmatprep.mubr.bf16.mxu0 0
    %2779 = vmatmul.mubr.bf16.gmra.mrb[0].mxu0 %v2627
    %v2780 = vpop.f32.mrb[0].mxu0
    %v2781 = vadd.f32 0.0, %v2780
    %v2782 = vpop.f32.mrb[0].mxu0
    %v2783 = vpop.f32.mrb[0].mxu0
    %v2784 = vadd.f32 0.0, %v2783
    %v2785 = vpop.f32.mrb[0].mxu0
    %2786 = vmatprep.mubr.bf16.mxu0 0
    %2787 = vmatmul.mubr.bf16.gmra.mrb[0].mxu0 %v2630
    %v2788 = vpop.f32.mrb[0].mxu0
    %v2789 = vadd.f32 0.0, %v2788
    %v2790 = vpop.f32.mrb[0].mxu0
    %v2791 = vpop.f32.mrb[0].mxu0
    %v2792 = vadd.f32 0.0, %v2791
    %v2793 = vpop.f32.mrb[0].mxu0
    %2794 = vmatprep.mubr.bf16.mxu0 0
    %2795 = vmatmul.mubr.bf16.gmra.mrb[0].mxu0 %v2633
    %v2796 = vpop.f32.mrb[0].mxu0
    %v2797 = vadd.f32 0.0, %v2796
    %v2798 = vpop.f32.mrb[0].mxu0
    %v2799 = vpop.f32.mrb[0].mxu0
    %v2800 = vadd.f32 0.0, %v2799
    %v2801 = vpop.f32.mrb[0].mxu0
    %2802 = vmatprep.mubr.bf16.mxu0 0
    %2803 = vmatmul.mubr.bf16.gmra.mrb[0].mxu0 %v2636
    %v2804 = vpop.f32.mrb[0].mxu0
    %v2805 = vadd.f32 0.0, %v2804
    %v2806 = vpop.f32.mrb[0].mxu0
    %v2807 = vpop.f32.mrb[0].mxu0
    %v2808 = vadd.f32 0.0, %v2807
    %v2809 = vpop.f32.mrb[0].mxu0
    %2810 = vmatprep.mubr.bf16.mxu0 0
    %2811 = vmatmul.mubr.bf16.gmra.mrb[0].mxu0 %v2639
    %v2812 = vpop.f32.mrb[0].mxu0
    %v2813 = vadd.f32 0.0, %v2812
    %v2814 = vpop.f32.mrb[0].mxu0
    %v2815 = vpop.f32.mrb[0].mxu0
    %v2816 = vadd.f32 0.0, %v2815
    %v2817 = vpop.f32.mrb[0].mxu0
    %2818 = vmatprep.mubr.bf16.mxu0 0
    %2819 = vmatmul.mubr.bf16.gmra.mrb[0].mxu0 %v2642
    %v2820 = vpop.f32.mrb[0].mxu0
    %v2821 = vadd.f32 0.0, %v2820
    %v2822 = vpop.f32.mrb[0].mxu0
    %v2823 = vpop.f32.mrb[0].mxu0
    %v2824 = vadd.f32 0.0, %v2823
    %v2825 = vpop.f32.mrb[0].mxu0
    %2826 = vmatprep.mubr.bf16.mxu0 0
    %2827 = vmatmul.mubr.bf16.gmra.mrb[0].mxu0 %v2645
    %v2828 = vpop.f32.mrb[0].mxu0
    %v2829 = vadd.f32 0.0, %v2828
    %v2830 = vpop.f32.mrb[0].mxu0
    %v2831 = vpop.f32.mrb[0].mxu0
    %v2832 = vadd.f32 0.0, %v2831
    %v2833 = vpop.f32.mrb[0].mxu0
    %2834 = vmatprep.mubr.bf16.mxu0 0
    %2835 = vmatmul.mubr.bf16.gmra.mrb[0].mxu0 %v2648
    %v2836 = vpop.f32.mrb[0].mxu0
    %v2837 = vadd.f32 0.0, %v2836
    %v2838 = vpop.f32.mrb[0].mxu0
    %v2839 = vpop.f32.mrb[0].mxu0
    %v2840 = vadd.f32 0.0, %v2839
    %v2841 = vpop.f32.mrb[0].mxu0
    %2842 = vmatprep.mubr.bf16.mxu0 0
    %2843 = vmatmul.mubr.bf16.gmra.mrb[0].mxu0 %v2651
    %v2844 = vpop.f32.mrb[0].mxu0
    %v2845 = vadd.f32 0.0, %v2844
    %v2846 = vpop.f32.mrb[0].mxu0
    %v2847 = vpop.f32.mrb[0].mxu0
    %v2848 = vadd.f32 0.0, %v2847
    %v2849 = vpop.f32.mrb[0].mxu0
    %2850 = vmatprep.mubr.bf16.mxu0 0
    %2851 = vmatmul.mubr.bf16.gmra.mrb[0].mxu0 %v2654
    %v2852 = vpop.f32.mrb[0].mxu0
    %v2853 = vadd.f32 0.0, %v2852
    %v2854 = vpop.f32.mrb[0].mxu0
    %v2855 = vpop.f32.mrb[0].mxu0
    %v2856 = vadd.f32 0.0, %v2855
    %v2857 = vpop.f32.mrb[0].mxu0
    %2858 = vmatprep.mubr.bf16.mxu0 0
    %2859 = vmatmul.mubr.bf16.gmra.mrb[0].mxu0 %v2657
    %v2860 = vpop.f32.mrb[0].mxu0
    %v2861 = vadd.f32 0.0, %v2860
    %v2862 = vpop.f32.mrb[0].mxu0
    %v2863 = vpop.f32.mrb[0].mxu0
    %v2864 = vadd.f32 0.0, %v2863
    %v2865 = vpop.f32.mrb[0].mxu0
    %2866 = vmatprep.mubr.bf16.mxu0 0
    %2867 = vmatmul.mubr.bf16.gmra.mrb[0].mxu0 %v2660
    %v2868 = vpop.f32.mrb[0].mxu0
    %v2869 = vadd.f32 0.0, %v2868
    %v2870 = vpop.f32.mrb[0].mxu0
    %v2871 = vpop.f32.mrb[0].mxu0
    %v2872 = vadd.f32 0.0, %v2871
    %v2873 = vpop.f32.mrb[0].mxu0
    %2874 = vmatprep.mubr.bf16.mxu0 0
    %2875 = vmatmul.mubr.bf16.gmra.mrb[0].mxu0 %v2663
    %v2876 = vpop.f32.mrb[0].mxu0
    %v2877 = vadd.f32 0.0, %v2876
    %v2878 = vpop.f32.mrb[0].mxu0
    %v2879 = vpop.f32.mrb[0].mxu0
    %v2880 = vadd.f32 0.0, %v2879
    %v2881 = vpop.f32.mrb[0].mxu0
    %2882 = vmatprep.mubr.bf16.mxu0 0
    %2883 = vmatmul.mubr.bf16.gmra.mrb[0].mxu0 %v2666
    %v2884 = vpop.f32.mrb[0].mxu0
    %v2885 = vadd.f32 0.0, %v2884
    %v2886 = vpop.f32.mrb[0].mxu0
    %v2887 = vpop.f32.mrb[0].mxu0
    %v2888 = vadd.f32 0.0, %v2887
    %v2889 = vpop.f32.mrb[0].mxu0
    %2890 = vmatprep.mubr.bf16.mxu0 0
    %2891 = vmatmul.mubr.bf16.gmra.mrb[0].mxu0 %v2669
    %v2892 = vpop.f32.mrb[0].mxu0
    %v2893 = vadd.f32 0.0, %v2892
    %v2894 = vpop.f32.mrb[0].mxu0
    %v2895 = vpop.f32.mrb[0].mxu0
    %v2896 = vadd.f32 0.0, %v2895
    %v2897 = vpop.f32.mrb[0].mxu0
    %2898 = vmatprep.mubr.bf16.mxu0 0
    %2899 = vmatmul.mubr.bf16.gmra.mrb[0].mxu0 %v2672
    %v2900 = vpop.f32.mrb[0].mxu0
    %v2901 = vadd.f32 0.0, %v2900
    %v2902 = vpop.f32.mrb[0].mxu0
    %v2903 = vpop.f32.mrb[0].mxu0
    %v2904 = vadd.f32 0.0, %v2903
    %v2905 = vpop.f32.mrb[0].mxu0
    %2906 = vmatprep.mubr.bf16.mxu0 0
    %2907 = vmatmul.mubr.bf16.gmra.mrb[0].mxu0 %v2675
    %v2908 = vpop.f32.mrb[0].mxu0
    %v2909 = vadd.f32 0.0, %v2908
    %v2910 = vpop.f32.mrb[0].mxu0
    %v2911 = vpop.f32.mrb[0].mxu0
    %v2912 = vadd.f32 0.0, %v2911
    %v2913 = vpop.f32.mrb[0].mxu0
    %2914 = vmatprep.mubr.bf16.mxu0 0
    %2915 = vmatmul.mubr.bf16.gmra.mrb[0].mxu0 %v2678
    %v2916 = vpop.f32.mrb[0].mxu0
    %v2917 = vadd.f32 0.0, %v2916
    %v2918 = vpop.f32.mrb[0].mxu0
    %v2919 = vpop.f32.mrb[0].mxu0
    %v2920 = vadd.f32 0.0, %v2919
    %v2921 = vpop.f32.mrb[0].mxu0
    %2922 = vmatprep.mubr.bf16.mxu0 0
    %2923 = vmatmul.mubr.bf16.gmra.mrb[0].mxu0 %v2681
    %v2924 = vpop.f32.mrb[0].mxu0
    %v2925 = vadd.f32 0.0, %v2924
    %v2926 = vpop.f32.mrb[0].mxu0
    %v2927 = vpop.f32.mrb[0].mxu0
    %v2928 = vadd.f32 0.0, %v2927
    %v2929 = vpop.f32.mrb[0].mxu0
    %2930 = vmatprep.mubr.bf16.mxu0 0
    %2931 = vmatmul.mubr.bf16.gmra.mrb[0].mxu0 %v2684
    %v2932 = vpop.f32.mrb[0].mxu0
    %v2933 = vadd.f32 0.0, %v2932
    %v2934 = vpop.f32.mrb[0].mxu0
    %v2935 = vpop.f32.mrb[0].mxu0
    %v2936 = vadd.f32 0.0, %v2935
    %v2937 = vpop.f32.mrb[0].mxu0
    %2938 = vmatprep.mubr.bf16.mxu0 0
    %2939 = vmatmul.mubr.bf16.gmra.mrb[0].mxu0 %v2687
    %v2940 = vpop.f32.mrb[0].mxu0
    %v2941 = vadd.f32 0.0, %v2940
    %v2942 = vpop.f32.mrb[0].mxu0
    %v2943 = vpop.f32.mrb[0].mxu0
    %v2944 = vadd.f32 0.0, %v2943
    %v2945 = vpop.f32.mrb[0].mxu0
    %2946 = vmatprep.mubr.bf16.mxu0 0
    %2947 = vmatmul.mubr.bf16.gmra.mrb[0].mxu0 %v2690
    %v2948 = vpop.f32.mrb[0].mxu0
    %v2949 = vadd.f32 0.0, %v2948
    %v2950 = vpop.f32.mrb[0].mxu0
    %v2951 = vpop.f32.mrb[0].mxu0
    %v2952 = vadd.f32 0.0, %v2951
    %v2953 = vpop.f32.mrb[0].mxu0
    %2954 = vmatprep.mubr.bf16.mxu0 0
    %2955 = vmatmul.mubr.bf16.gmra.mrb[0].mxu0 %v2693
    %v2956 = vpop.f32.mrb[0].mxu0
    %v2957 = vadd.f32 0.0, %v2956
    %v2958 = vpop.f32.mrb[0].mxu0
    %v2959 = vpop.f32.mrb[0].mxu0
    %v2960 = vadd.f32 0.0, %v2959
    %v2961 = vpop.f32.mrb[0].mxu0
    %2962 = vmatprep.mubr.bf16.mxu0 0
    %2963 = vmatmul.mubr.bf16.gmra.mrb[0].mxu0 %v2696
    %v2964 = vpop.f32.mrb[0].mxu0
    %v2965 = vadd.f32 0.0, %v2964
    %v2966 = vpop.f32.mrb[0].mxu0
    %v2967 = vpop.f32.mrb[0].mxu0
    %v2968 = vadd.f32 0.0, %v2967
    %v2969 = vpop.f32.mrb[0].mxu0
    %2970 = vmatprep.mubr.bf16.mxu0 0
    %2971 = vmatmul.mubr.bf16.gmra.mrb[0].mxu0 %v2699
    %v2972 = vpop.f32.mrb[0].mxu0
    %v2973 = vadd.f32 0.0, %v2972
    %v2974 = vpop.f32.mrb[0].mxu0
    %v2975 = vpop.f32.mrb[0].mxu0
    %v2976 = vadd.f32 0.0, %v2975
    %v2977 = vpop.f32.mrb[0].mxu0
    %2978 = vmatprep.mubr.bf16.mxu0 0
    %2979 = vmatmul.mubr.bf16.gmra.mrb[0].mxu0 %v2702
    %v2980 = vpop.f32.mrb[0].mxu0
    %v2981 = vadd.f32 0.0, %v2980
    %v2982 = vpop.f32.mrb[0].mxu0
    %v2983 = vpop.f32.mrb[0].mxu0
    %v2984 = vadd.f32 0.0, %v2983
    %v2985 = vpop.f32.mrb[0].mxu0
    %2986 = vmatprep.mubr.bf16.mxu0 0
    %2987 = vmatmul.mubr.bf16.gmra.mrb[0].mxu0 %v2705
    %v2988 = vpop.f32.mrb[0].mxu0
    %v2989 = vadd.f32 0.0, %v2988
    %v2990 = vpop.f32.mrb[0].mxu0
    %v2991 = vpop.f32.mrb[0].mxu0
    %v2992 = vadd.f32 0.0, %v2991
    %v2993 = vpop.f32.mrb[0].mxu0
    %2994 = vmatprep.mubr.bf16.mxu0 0
    %2995 = vmatmul.mubr.bf16.gmra.mrb[0].mxu0 %v2708
    %v2996 = vpop.f32.mrb[0].mxu0
    %v2997 = vadd.f32 0.0, %v2996
    %v2998 = vpop.f32.mrb[0].mxu0
    %v2999 = vpop.f32.mrb[0].mxu0
    %v3000 = vadd.f32 0.0, %v2999
    %v3001 = vpop.f32.mrb[0].mxu0
    %3002 = vmatprep.mubr.bf16.mxu0 0
    %3003 = vmatmul.mubr.bf16.gmra.mrb[0].mxu0 %v2711
    %v3004 = vpop.f32.mrb[0].mxu0
    %v3005 = vadd.f32 0.0, %v3004
    %v3006 = vpop.f32.mrb[0].mxu0
    %v3007 = vpop.f32.mrb[0].mxu0
    %v3008 = vadd.f32 0.0, %v3007
    %v3009 = vpop.f32.mrb[0].mxu0
    %3010 = vmatprep.mubr.bf16.mxu0 0
    %3011 = vmatmul.mubr.bf16.gmra.mrb[0].mxu0 %v2714
    %v3012 = vpop.f32.mrb[0].mxu0
    %v3013 = vadd.f32 0.0, %v3012
    %v3014 = vpop.f32.mrb[0].mxu0
    %v3015 = vpop.f32.mrb[0].mxu0
    %v3016 = vadd.f32 0.0, %v3015
    %v3017 = vpop.f32.mrb[0].mxu0
    %3018 = vmatprep.mubr.bf16.mxu0 0
    %3019 = vmatmul.mubr.bf16.gmra.mrb[0].mxu0 %v2717
    %v3020 = vpop.f32.mrb[0].mxu0
    %v3021 = vadd.f32 0.0, %v3020
    %v3022 = vpop.f32.mrb[0].mxu0
    %v3023 = vpop.f32.mrb[0].mxu0
    %v3024 = vadd.f32 0.0, %v3023
    %v3025 = vpop.f32.mrb[0].mxu0
    %3026 = vmatprep.mubr.bf16.mxu0 0
    %3027 = vmatmul.mubr.bf16.gmra.mrb[0].mxu0 %v2720
    %v3028 = vpop.f32.mrb[0].mxu0
    %v3029 = vadd.f32 0.0, %v3028
    %v3030 = vpop.f32.mrb[0].mxu0
    %v3031 = vpop.f32.mrb[0].mxu0
    %v3032 = vadd.f32 0.0, %v3031
    %v3033 = vpop.f32.mrb[0].mxu0
    %3034 = vmatprep.mubr.bf16.mxu0 0
    %3035 = vmatmul.mubr.bf16.gmra.mrb[0].mxu0 %v2723
    %v3036 = vpop.f32.mrb[0].mxu0
    %v3037 = vadd.f32 0.0, %v3036
    %v3038 = vpop.f32.mrb[0].mxu0
    %v3039 = vpop.f32.mrb[0].mxu0
    %v3040 = vadd.f32 0.0, %v3039
    %v3041 = vpop.f32.mrb[0].mxu0
    %3042 = vmatprep.mubr.bf16.mxu0 0
    %3043 = vmatmul.mubr.bf16.gmra.mrb[0].mxu0 %v2726
    %v3044 = vpop.f32.mrb[0].mxu0
    %v3045 = vadd.f32 0.0, %v3044
    %v3046 = vpop.f32.mrb[0].mxu0
    %v3047 = vpop.f32.mrb[0].mxu0
    %v3048 = vadd.f32 0.0, %v3047
    %v3049 = vpop.f32.mrb[0].mxu0
    %3050 = vmatprep.mubr.bf16.mxu0 0
    %3051 = vmatmul.mubr.bf16.gmra.mrb[0].mxu0 %v2729
    %v3052 = vpop.f32.mrb[0].mxu0
    %v3053 = vadd.f32 0.0, %v3052
    %v3054 = vpop.f32.mrb[0].mxu0
    %v3055 = vpop.f32.mrb[0].mxu0
    %v3056 = vadd.f32 0.0, %v3055
    %v3057 = vpop.f32.mrb[0].mxu0
    %3058 = vmatprep.mubr.bf16.mxu0 0
    %3059 = vmatmul.mubr.bf16.gmra.mrb[0].mxu0 %v2732
    %v3060 = vpop.f32.mrb[0].mxu0
    %v3061 = vadd.f32 0.0, %v3060
    %v3062 = vpop.f32.mrb[0].mxu0
    %v3063 = vpop.f32.mrb[0].mxu0
    %v3064 = vadd.f32 0.0, %v3063
    %v3065 = vpop.f32.mrb[0].mxu0
    %3066 = vmatprep.mubr.bf16.mxu0 0
    %3067 = vmatmul.mubr.bf16.gmra.mrb[0].mxu0 %v2735
    %v3068 = vpop.f32.mrb[0].mxu0
    %v3069 = vadd.f32 0.0, %v3068
    %v3070 = vpop.f32.mrb[0].mxu0
    %v3071 = vpop.f32.mrb[0].mxu0
    %v3072 = vadd.f32 0.0, %v3071
    %v3073 = vpop.f32.mrb[0].mxu0
    %3074 = vmatprep.mubr.bf16.mxu0 0
    %3075 = vmatmul.mubr.bf16.gmra.mrb[0].mxu0 %v2738
    %v3076 = vpop.f32.mrb[0].mxu0
    %v3077 = vadd.f32 0.0, %v3076
    %v3078 = vpop.f32.mrb[0].mxu0
    %v3079 = vpop.f32.mrb[0].mxu0
    %v3080 = vadd.f32 0.0, %v3079
    %v3081 = vpop.f32.mrb[0].mxu0
    %3082 = vmatprep.mubr.bf16.mxu0 0
    %3083 = vmatmul.mubr.bf16.gmra.mrb[0].mxu0 %v2741
    %v3084 = vpop.f32.mrb[0].mxu0
    %v3085 = vadd.f32 0.0, %v3084
    %v3086 = vpop.f32.mrb[0].mxu0
    %v3087 = vpop.f32.mrb[0].mxu0
    %v3088 = vpop.f32.mrb[0].mxu0
    %3089 = vdwg.mxu0
    %v3090 = vadd.f32 %v2431, %v2781
    %v3091 = vadd.f32 %v2432, %v2784
    %v3092 = vadd.f32 %v2433, %v2789
    %v3093 = vadd.f32 %v2434, %v2792
    %v3094 = vadd.f32 %v2435, %v2797
    %v3095 = vadd.f32 %v2436, %v2800
    %v3096 = vadd.f32 %v2437, %v2805
    %v3097 = vadd.f32 %v2438, %v2808
    %v3098 = vadd.f32 %v2439, %v2813
    %v3099 = vadd.f32 %v2440, %v2816
    %v3100 = vadd.f32 %v2441, %v2821
    %v3101 = vadd.f32 %v2442, %v2824
    %v3102 = vadd.f32 %v2443, %v2829
    %v3103 = vadd.f32 %v2444, %v2832
    %v3104 = vadd.f32 %v2445, %v2837
    %v3105 = vadd.f32 %v2446, %v2840
    %v3106 = vadd.f32 %v2447, %v2845
    %v3107 = vadd.f32 %v2448, %v2848
    %v3108 = vadd.f32 %v2449, %v2853
    %v3109 = vadd.f32 %v2450, %v2856
    %v3110 = vadd.f32 %v2451, %v2861
    %v3111 = vadd.f32 %v2452, %v2864
    %v3112 = vadd.f32 %v2453, %v2869
    %v3113 = vadd.f32 %v2454, %v2872
    %v3114 = vadd.f32 %v2455, %v2877
    %v3115 = vadd.f32 %v2456, %v2880
    %v3116 = vadd.f32 %v2457, %v2885
    %v3117 = vadd.f32 %v2458, %v2888
    %v3118 = vadd.f32 %v2459, %v2893
    %v3119 = vadd.f32 %v2460, %v2896
    %v3120 = vadd.f32 %v2461, %v2901
    %v3121 = vadd.f32 %v2462, %v2904
    %v3122 = vadd.f32 %v2463, %v2909
    %v3123 = vadd.f32 %v2464, %v2912
    %v3124 = vadd.f32 %v2465, %v2917
    %v3125 = vadd.f32 %v2466, %v2920
    %v3126 = vadd.f32 %v2467, %v2925
    %v3127 = vadd.f32 %v2468, %v2928
    %v3128 = vadd.f32 %v2469, %v2933
    %v3129 = vadd.f32 %v2470, %v2936
    %v3130 = vadd.f32 %v2471, %v2941
    %v3131 = vadd.f32 %v2472, %v2944
    %v3132 = vadd.f32 %v2473, %v2949
    %v3133 = vadd.f32 %v2474, %v2952
    %v3134 = vadd.f32 %v2475, %v2957
    %v3135 = vadd.f32 %v2476, %v2960
    %v3136 = vadd.f32 %v2477, %v2965
    %v3137 = vadd.f32 %v2478, %v2968
    %v3138 = vadd.f32 %v2479, %v2973
    %v3139 = vadd.f32 %v2480, %v2976
    %v3140 = vadd.f32 %v2481, %v2981
    %v3141 = vadd.f32 %v2482, %v2984
    %v3142 = vadd.f32 %v2483, %v2989
    %v3143 = vadd.f32 %v2484, %v2992
    %v3144 = vadd.f32 %v2485, %v2997
    %v3145 = vadd.f32 %v2486, %v3000
    %v3146 = vadd.f32 %v2487, %v3005
    %v3147 = vadd.f32 %v2488, %v3008
    %v3148 = vadd.f32 %v2489, %v3013
    %v3149 = vadd.f32 %v2490, %v3016
    %v3150 = vadd.f32 %v2491, %v3021
    %v3151 = vadd.f32 %v2492, %v3024
    %v3152 = vadd.f32 %v2493, %v3029
    %v3153 = vadd.f32 %v2494, %v3032
    %v3154 = vadd.f32 %v2495, %v3037
    %v3155 = vadd.f32 %v2496, %v3040
    %v3156 = vadd.f32 %v2497, %v3045
    %v3157 = vadd.f32 %v2498, %v3048
    %v3158 = vadd.f32 %v2499, %v3053
    %v3159 = vadd.f32 %v2500, %v3056
    %v3160 = vadd.f32 %v2501, %v3061
    %v3161 = vadd.f32 %v2502, %v3064
    %v3162 = vadd.f32 %v2503, %v3069
    %v3163 = vadd.f32 %v2504, %v3072
    %v3164 = vadd.f32 %v2505, %v3077
    %v3165 = vadd.f32 %v2506, %v3080
    %v3166 = vadd.f32 %v2507, %v3085
    %v3167 = vld [vmem:[%s0 + $0x14] sm:$0xff]
    %v3168 = vld [vmem:[%s0 + $0x1c] sm:$0xff]
    %v3169 = vld [vmem:[%s0 + $0x24] sm:$0xff]
    %v3170 = vld [vmem:[%s0 + $0x2c] sm:$0xff]
    %v3171 = vld [vmem:[%s0 + $0x34] sm:$0xff]
    %v3172 = vld [vmem:[%s0 + $0x3c] sm:$0xff]
    %v3173 = vld [vmem:[%s0 + $0x44] sm:$0xff]
    %v3174 = vld [vmem:[%s0 + $0x4c] sm:$0xff]
    %v3175 = vld [vmem:[%s0 + $0x54] sm:$0xff]
    %v3176 = vld [vmem:[%s0 + $0x5c] sm:$0xff]
    %v3177 = vld [vmem:[%s0 + $0x64] sm:$0xff]
    %v3178 = vld [vmem:[%s0 + $0x6c] sm:$0xff]
    %v3179 = vld [vmem:[%s0 + $0x74] sm:$0xff]
    %v3180 = vld [vmem:[%s0 + $0x7c] sm:$0xff]
    %v3181 = vld [vmem:[%s0 + $0x84] sm:$0xff]
    %v3182 = vld [vmem:[%s0 + $0x8c] sm:$0xff]
    %v3183 = vld [vmem:[%s0 + $0x94] sm:$0xff]
    %v3184 = vld [vmem:[%s0 + $0x9c] sm:$0xff]
    %v3185 = vld [vmem:[%s0 + $0xa4] sm:$0xff]
    %v3186 = vld [vmem:[%s0 + $0xac] sm:$0xff]
    %v3187 = vld [vmem:[%s0 + $0xb4] sm:$0xff]
    %v3188 = vld [vmem:[%s0 + $0xbc] sm:$0xff]
    %v3189 = vld [vmem:[%s0 + $0xc4] sm:$0xff]
    %v3190 = vld [vmem:[%s0 + $0xcc] sm:$0xff]
    %v3191 = vld [vmem:[%s0 + $0xd4] sm:$0xff]
    %v3192 = vld [vmem:[%s0 + $0xdc] sm:$0xff]
    %v3193 = vld [vmem:[%s0 + $0xe4] sm:$0xff]
    %v3194 = vld [vmem:[%s0 + $0xec] sm:$0xff]
    %v3195 = vld [vmem:[%s0 + $0xf4] sm:$0xff]
    %v3196 = vld [vmem:[%s0 + $0xfc] sm:$0xff]
    %v3197 = vld [vmem:[%s0 + $0x104] sm:$0xff]
    %v3198 = vld [vmem:[%s0 + $0x10c] sm:$0xff]
    %v3199 = vld [vmem:[%s0 + $0x114] sm:$0xff]
    %v3200 = vld [vmem:[%s0 + $0x11c] sm:$0xff]
    %v3201 = vld [vmem:[%s0 + $0x124] sm:$0xff]
    %v3202 = vld [vmem:[%s0 + $0x12c] sm:$0xff]
    %v3203 = vld [vmem:[%s0 + $0x134] sm:$0xff]
    %v3204 = vld [vmem:[%s0 + $0x13c] sm:$0xff]
    %v3205 = vld [vmem:[%s0 + $0x144] sm:$0xff]
    %v3206 = vld [vmem:[%s0 + $0x14c] sm:$0xff]
    %v3207 = vld [vmem:[%s0 + $0x154] sm:$0xff]
    %v3208 = vld [vmem:[%s0 + $0x15c] sm:$0xff]
    %v3209 = vld [vmem:[%s0 + $0x164] sm:$0xff]
    %v3210 = vld [vmem:[%s0 + $0x16c] sm:$0xff]
    %v3211 = vld [vmem:[%s0 + $0x174] sm:$0xff]
    %v3212 = vld [vmem:[%s0 + $0x17c] sm:$0xff]
    %v3213 = vld [vmem:[%s0 + $0x184] sm:$0xff]
    %v3214 = vld [vmem:[%s0 + $0x18c] sm:$0xff]
    %v3215 = vld [vmem:[%s0 + $0x194] sm:$0xff]
    %v3216 = vld [vmem:[%s0 + $0x19c] sm:$0xff]
    %v3217 = vld [vmem:[%s0 + $0x1a4] sm:$0xff]
    %v3218 = vld [vmem:[%s0 + $0x1ac] sm:$0xff]
    %v3219 = vld [vmem:[%s0 + $0x1b4] sm:$0xff]
    %v3220 = vld [vmem:[%s0 + $0x1bc] sm:$0xff]
    %v3221 = vld [vmem:[%s0 + $0x1c4] sm:$0xff]
    %v3222 = vld [vmem:[%s0 + $0x1cc] sm:$0xff]
    %v3223 = vld [vmem:[%s0 + $0x1d4] sm:$0xff]
    %v3224 = vld [vmem:[%s0 + $0x1dc] sm:$0xff]
    %v3225 = vld [vmem:[%s0 + $0x1e4] sm:$0xff]
    %v3226 = vld [vmem:[%s0 + $0x1ec] sm:$0xff]
    %v3227 = vld [vmem:[%s0 + $0x1f4] sm:$0xff]
    %v3228 = vld [vmem:[%s0 + $0x1fc] sm:$0xff]
    %v3229 = vld [vmem:[%s0 + $0x204] sm:$0xff]
    %v3230 = vld [vmem:[%s0 + $0x20c] sm:$0xff]
    %v3231 = vld [vmem:[%s0 + $0x214] sm:$0xff]
    %v3232 = vld [vmem:[%s0 + $0x21c] sm:$0xff]
    %v3233 = vld [vmem:[%s0 + $0x224] sm:$0xff]
    %v3234 = vld [vmem:[%s0 + $0x22c] sm:$0xff]
    %v3235 = vld [vmem:[%s0 + $0x234] sm:$0xff]
    %v3236 = vld [vmem:[%s0 + $0x23c] sm:$0xff]
    %v3237 = vld [vmem:[%s0 + $0x244] sm:$0xff]
    %v3238 = vld [vmem:[%s0 + $0x24c] sm:$0xff]
    %v3239 = vld [vmem:[%s0 + $0x254] sm:$0xff]
    %v3240 = vld [vmem:[%s0 + $0x25c] sm:$0xff]
    %v3241 = vld [vmem:[%s0 + $0x264] sm:$0xff]
    %v3242 = vld [vmem:[%s0 + $0x26c] sm:$0xff]
    %v3243 = vld [vmem:[%s0 + $0x274] sm:$0x3]
    %v3244 = vpack.c.bf16 %v3168, %v3167
    %v3245 = vpack.c.bf16 %v3170, %v3169
    %v3246 = vpack.c.bf16 %v3172, %v3171
    %v3247 = vpack.c.bf16 %v3174, %v3173
    %v3248 = vpack.c.bf16 %v3176, %v3175
    %v3249 = vpack.c.bf16 %v3178, %v3177
    %v3250 = vpack.c.bf16 %v3180, %v3179
    %v3251 = vpack.c.bf16 %v3182, %v3181
    %v3252 = vpack.c.bf16 %v3184, %v3183
    %v3253 = vpack.c.bf16 %v3186, %v3185
    %v3254 = vpack.c.bf16 %v3188, %v3187
    %v3255 = vpack.c.bf16 %v3190, %v3189
    %v3256 = vpack.c.bf16 %v3192, %v3191
    %v3257 = vpack.c.bf16 %v3194, %v3193
    %v3258 = vpack.c.bf16 %v3196, %v3195
    %v3259 = vpack.c.bf16 %v3198, %v3197
    %v3260 = vpack.c.bf16 %v3200, %v3199
    %v3261 = vpack.c.bf16 %v3202, %v3201
    %v3262 = vpack.c.bf16 %v3204, %v3203
    %v3263 = vpack.c.bf16 %v3206, %v3205
    %v3264 = vpack.c.bf16 %v3208, %v3207
    %v3265 = vpack.c.bf16 %v3210, %v3209
    %v3266 = vpack.c.bf16 %v3212, %v3211
    %v3267 = vpack.c.bf16 %v3214, %v3213
    %v3268 = vpack.c.bf16 %v3216, %v3215
    %v3269 = vpack.c.bf16 %v3218, %v3217
    %v3270 = vpack.c.bf16 %v3220, %v3219
    %v3271 = vpack.c.bf16 %v3222, %v3221
    %v3272 = vpack.c.bf16 %v3224, %v3223
    %v3273 = vpack.c.bf16 %v3226, %v3225
    %v3274 = vpack.c.bf16 %v3228, %v3227
    %v3275 = vpack.c.bf16 %v3230, %v3229
    %v3276 = vpack.c.bf16 %v3232, %v3231
    %v3277 = vpack.c.bf16 %v3234, %v3233
    %v3278 = vpack.c.bf16 %v3236, %v3235
    %v3279 = vpack.c.bf16 %v3238, %v3237
    %v3280 = vpack.c.bf16 %v3240, %v3239
    %v3281 = vpack.c.bf16 %v3242, %v3241
    %v3282 = vpack.c.bf16 %v3243, %v3243
    %s3283 = scalar_lea.vmem %s1, 10
    %v3284 = vld [vmem:[%s3283] sm:$0x3]
    %v3286 = vsel %vm260, %v3244, 0
    %v3289 = vsel %vm260, %v3245, 0
    %v3292 = vsel %vm260, %v3246, 0
    %v3295 = vsel %vm260, %v3247, 0
    %v3298 = vsel %vm260, %v3248, 0
    %v3301 = vsel %vm260, %v3249, 0
    %v3304 = vsel %vm260, %v3250, 0
    %v3307 = vsel %vm260, %v3251, 0
    %v3310 = vsel %vm260, %v3252, 0
    %v3313 = vsel %vm260, %v3253, 0
    %v3316 = vsel %vm260, %v3254, 0
    %v3319 = vsel %vm260, %v3255, 0
    %v3322 = vsel %vm260, %v3256, 0
    %v3325 = vsel %vm260, %v3257, 0
    %v3328 = vsel %vm260, %v3258, 0
    %v3331 = vsel %vm260, %v3259, 0
    %v3334 = vsel %vm260, %v3260, 0
    %v3337 = vsel %vm260, %v3261, 0
    %v3340 = vsel %vm260, %v3262, 0
    %v3343 = vsel %vm260, %v3263, 0
    %v3346 = vsel %vm260, %v3264, 0
    %v3349 = vsel %vm260, %v3265, 0
    %v3352 = vsel %vm260, %v3266, 0
    %v3355 = vsel %vm260, %v3267, 0
    %v3358 = vsel %vm260, %v3268, 0
    %v3361 = vsel %vm260, %v3269, 0
    %v3364 = vsel %vm260, %v3270, 0
    %v3367 = vsel %vm260, %v3271, 0
    %v3370 = vsel %vm260, %v3272, 0
    %v3373 = vsel %vm260, %v3273, 0
    %v3376 = vsel %vm260, %v3274, 0
    %v3379 = vsel %vm260, %v3275, 0
    %v3382 = vsel %vm260, %v3276, 0
    %v3385 = vsel %vm260, %v3277, 0
    %v3388 = vsel %vm260, %v3278, 0
    %v3391 = vsel %vm260, %v3279, 0
    %v3394 = vsel %vm260, %v3280, 0
    %v3397 = vsel %vm260, %v3281, 0
    %v3400 = vsel %vm260, %v3282, 0
    %v3403 = vsel %vm378, %v3284, 0
    %3405 = vmatprep.subr.bf16.mxu0 0
    %3406 = vmatpush1.bf16.msra.mxu0 %v3403
    %3407 = vmatprep.subr.bf16.mxu0 0
    %3408 = vmatpush1.bf16.msra.mxu0 0
    %3409 = vmatprep.subr.bf16.mxu0 0
    %3410 = vmatpush1.bf16.msra.mxu0 0
    %3411 = vmatprep.subr.bf16.mxu0 0
    %3412 = vmatpush1.bf16.msra.mxu0 0
    %3413 = vmatprep.subr.bf16.mxu0 0
    %3414 = vmatpush1.bf16.msra.mxu0 0
    %3415 = vmatprep.subr.bf16.mxu0 0
    %3416 = vmatpush1.bf16.msra.mxu0 0
    %3417 = vmatprep.subr.bf16.mxu0 0
    %3418 = vmatpush1.bf16.msra.mxu0 0
    %3419 = vmatprep.subr.bf16.mxu0 0
    %3420 = vmatpush1.bf16.msra.mxu0 0
    %3421 = vmatprep.subr.bf16.mxu0 0
    %3422 = vmatpush1.bf16.msra.mxu0 0
    %3423 = vmatprep.subr.bf16.mxu0 0
    %3424 = vmatpush1.bf16.msra.mxu0 0
    %3425 = vmatprep.subr.bf16.mxu0 0
    %3426 = vmatpush1.bf16.msra.mxu0 0
    %3427 = vmatprep.subr.bf16.mxu0 0
    %3428 = vmatpush1.bf16.msra.mxu0 0
    %3429 = vmatprep.subr.bf16.mxu0 0
    %3430 = vmatpush1.bf16.msra.mxu0 0
    %3431 = vmatprep.subr.bf16.mxu0 0
    %3432 = vmatpush1.bf16.msra.mxu0 0
    %3433 = vmatprep.subr.bf16.mxu0 0
    %3434 = vmatpush1.bf16.msra.mxu0 0
    %3435 = vmatprep.subr.bf16.mxu0 0
    %3436 = vmatpush1.bf16.msra.mxu0 0
    %3437 = vmatprep.mubr.bf16.mxu0 0
    %3438 = vmatmul.mubr.bf16.gmra.mrb[0].mxu0 %v3286
    %v3439 = vpop.f32.mrb[0].mxu0
    %v3440 = vadd.f32 0.0, %v3439
    %v3441 = vpop.f32.mrb[0].mxu0
    %v3442 = vpop.f32.mrb[0].mxu0
    %v3443 = vadd.f32 0.0, %v3442
    %v3444 = vpop.f32.mrb[0].mxu0
    %3445 = vmatprep.mubr.bf16.mxu0 0
    %3446 = vmatmul.mubr.bf16.gmra.mrb[0].mxu0 %v3289
    %v3447 = vpop.f32.mrb[0].mxu0
    %v3448 = vadd.f32 0.0, %v3447
    %v3449 = vpop.f32.mrb[0].mxu0
    %v3450 = vpop.f32.mrb[0].mxu0
    %v3451 = vadd.f32 0.0, %v3450
    %v3452 = vpop.f32.mrb[0].mxu0
    %3453 = vmatprep.mubr.bf16.mxu0 0
    %3454 = vmatmul.mubr.bf16.gmra.mrb[0].mxu0 %v3292
    %v3455 = vpop.f32.mrb[0].mxu0
    %v3456 = vadd.f32 0.0, %v3455
    %v3457 = vpop.f32.mrb[0].mxu0
    %v3458 = vpop.f32.mrb[0].mxu0
    %v3459 = vadd.f32 0.0, %v3458
    %v3460 = vpop.f32.mrb[0].mxu0
    %3461 = vmatprep.mubr.bf16.mxu0 0
    %3462 = vmatmul.mubr.bf16.gmra.mrb[0].mxu0 %v3295
    %v3463 = vpop.f32.mrb[0].mxu0
    %v3464 = vadd.f32 0.0, %v3463
    %v3465 = vpop.f32.mrb[0].mxu0
    %v3466 = vpop.f32.mrb[0].mxu0
    %v3467 = vadd.f32 0.0, %v3466
    %v3468 = vpop.f32.mrb[0].mxu0
    %3469 = vmatprep.mubr.bf16.mxu0 0
    %3470 = vmatmul.mubr.bf16.gmra.mrb[0].mxu0 %v3298
    %v3471 = vpop.f32.mrb[0].mxu0
    %v3472 = vadd.f32 0.0, %v3471
    %v3473 = vpop.f32.mrb[0].mxu0
    %v3474 = vpop.f32.mrb[0].mxu0
    %v3475 = vadd.f32 0.0, %v3474
    %v3476 = vpop.f32.mrb[0].mxu0
    %3477 = vmatprep.mubr.bf16.mxu0 0
    %3478 = vmatmul.mubr.bf16.gmra.mrb[0].mxu0 %v3301
    %v3479 = vpop.f32.mrb[0].mxu0
    %v3480 = vadd.f32 0.0, %v3479
    %v3481 = vpop.f32.mrb[0].mxu0
    %v3482 = vpop.f32.mrb[0].mxu0
    %v3483 = vadd.f32 0.0, %v3482
    %v3484 = vpop.f32.mrb[0].mxu0
    %3485 = vmatprep.mubr.bf16.mxu0 0
    %3486 = vmatmul.mubr.bf16.gmra.mrb[0].mxu0 %v3304
    %v3487 = vpop.f32.mrb[0].mxu0
    %v3488 = vadd.f32 0.0, %v3487
    %v3489 = vpop.f32.mrb[0].mxu0
    %v3490 = vpop.f32.mrb[0].mxu0
    %v3491 = vadd.f32 0.0, %v3490
    %v3492 = vpop.f32.mrb[0].mxu0
    %3493 = vmatprep.mubr.bf16.mxu0 0
    %3494 = vmatmul.mubr.bf16.gmra.mrb[0].mxu0 %v3307
    %v3495 = vpop.f32.mrb[0].mxu0
    %v3496 = vadd.f32 0.0, %v3495
    %v3497 = vpop.f32.mrb[0].mxu0
    %v3498 = vpop.f32.mrb[0].mxu0
    %v3499 = vadd.f32 0.0, %v3498
    %v3500 = vpop.f32.mrb[0].mxu0
    %3501 = vmatprep.mubr.bf16.mxu0 0
    %3502 = vmatmul.mubr.bf16.gmra.mrb[0].mxu0 %v3310
    %v3503 = vpop.f32.mrb[0].mxu0
    %v3504 = vadd.f32 0.0, %v3503
    %v3505 = vpop.f32.mrb[0].mxu0
    %v3506 = vpop.f32.mrb[0].mxu0
    %v3507 = vadd.f32 0.0, %v3506
    %v3508 = vpop.f32.mrb[0].mxu0
    %3509 = vmatprep.mubr.bf16.mxu0 0
    %3510 = vmatmul.mubr.bf16.gmra.mrb[0].mxu0 %v3313
    %v3511 = vpop.f32.mrb[0].mxu0
    %v3512 = vadd.f32 0.0, %v3511
    %v3513 = vpop.f32.mrb[0].mxu0
    %v3514 = vpop.f32.mrb[0].mxu0
    %v3515 = vadd.f32 0.0, %v3514
    %v3516 = vpop.f32.mrb[0].mxu0
    %3517 = vmatprep.mubr.bf16.mxu0 0
    %3518 = vmatmul.mubr.bf16.gmra.mrb[0].mxu0 %v3316
    %v3519 = vpop.f32.mrb[0].mxu0
    %v3520 = vadd.f32 0.0, %v3519
    %v3521 = vpop.f32.mrb[0].mxu0
    %v3522 = vpop.f32.mrb[0].mxu0
    %v3523 = vadd.f32 0.0, %v3522
    %v3524 = vpop.f32.mrb[0].mxu0
    %3525 = vmatprep.mubr.bf16.mxu0 0
    %3526 = vmatmul.mubr.bf16.gmra.mrb[0].mxu0 %v3319
    %v3527 = vpop.f32.mrb[0].mxu0
    %v3528 = vadd.f32 0.0, %v3527
    %v3529 = vpop.f32.mrb[0].mxu0
    %v3530 = vpop.f32.mrb[0].mxu0
    %v3531 = vadd.f32 0.0, %v3530
    %v3532 = vpop.f32.mrb[0].mxu0
    %3533 = vmatprep.mubr.bf16.mxu0 0
    %3534 = vmatmul.mubr.bf16.gmra.mrb[0].mxu0 %v3322
    %v3535 = vpop.f32.mrb[0].mxu0
    %v3536 = vadd.f32 0.0, %v3535
    %v3537 = vpop.f32.mrb[0].mxu0
    %v3538 = vpop.f32.mrb[0].mxu0
    %v3539 = vadd.f32 0.0, %v3538
    %v3540 = vpop.f32.mrb[0].mxu0
    %3541 = vmatprep.mubr.bf16.mxu0 0
    %3542 = vmatmul.mubr.bf16.gmra.mrb[0].mxu0 %v3325
    %v3543 = vpop.f32.mrb[0].mxu0
    %v3544 = vadd.f32 0.0, %v3543
    %v3545 = vpop.f32.mrb[0].mxu0
    %v3546 = vpop.f32.mrb[0].mxu0
    %v3547 = vadd.f32 0.0, %v3546
    %v3548 = vpop.f32.mrb[0].mxu0
    %3549 = vmatprep.mubr.bf16.mxu0 0
    %3550 = vmatmul.mubr.bf16.gmra.mrb[0].mxu0 %v3328
    %v3551 = vpop.f32.mrb[0].mxu0
    %v3552 = vadd.f32 0.0, %v3551
    %v3553 = vpop.f32.mrb[0].mxu0
    %v3554 = vpop.f32.mrb[0].mxu0
    %v3555 = vadd.f32 0.0, %v3554
    %v3556 = vpop.f32.mrb[0].mxu0
    %3557 = vmatprep.mubr.bf16.mxu0 0
    %3558 = vmatmul.mubr.bf16.gmra.mrb[0].mxu0 %v3331
    %v3559 = vpop.f32.mrb[0].mxu0
    %v3560 = vadd.f32 0.0, %v3559
    %v3561 = vpop.f32.mrb[0].mxu0
    %v3562 = vpop.f32.mrb[0].mxu0
    %v3563 = vadd.f32 0.0, %v3562
    %v3564 = vpop.f32.mrb[0].mxu0
    %3565 = vmatprep.mubr.bf16.mxu0 0
    %3566 = vmatmul.mubr.bf16.gmra.mrb[0].mxu0 %v3334
    %v3567 = vpop.f32.mrb[0].mxu0
    %v3568 = vadd.f32 0.0, %v3567
    %v3569 = vpop.f32.mrb[0].mxu0
    %v3570 = vpop.f32.mrb[0].mxu0
    %v3571 = vadd.f32 0.0, %v3570
    %v3572 = vpop.f32.mrb[0].mxu0
    %3573 = vmatprep.mubr.bf16.mxu0 0
    %3574 = vmatmul.mubr.bf16.gmra.mrb[0].mxu0 %v3337
    %v3575 = vpop.f32.mrb[0].mxu0
    %v3576 = vadd.f32 0.0, %v3575
    %v3577 = vpop.f32.mrb[0].mxu0
    %v3578 = vpop.f32.mrb[0].mxu0
    %v3579 = vadd.f32 0.0, %v3578
    %v3580 = vpop.f32.mrb[0].mxu0
    %3581 = vmatprep.mubr.bf16.mxu0 0
    %3582 = vmatmul.mubr.bf16.gmra.mrb[0].mxu0 %v3340
    %v3583 = vpop.f32.mrb[0].mxu0
    %v3584 = vadd.f32 0.0, %v3583
    %v3585 = vpop.f32.mrb[0].mxu0
    %v3586 = vpop.f32.mrb[0].mxu0
    %v3587 = vadd.f32 0.0, %v3586
    %v3588 = vpop.f32.mrb[0].mxu0
    %3589 = vmatprep.mubr.bf16.mxu0 0
    %3590 = vmatmul.mubr.bf16.gmra.mrb[0].mxu0 %v3343
    %v3591 = vpop.f32.mrb[0].mxu0
    %v3592 = vadd.f32 0.0, %v3591
    %v3593 = vpop.f32.mrb[0].mxu0
    %v3594 = vpop.f32.mrb[0].mxu0
    %v3595 = vadd.f32 0.0, %v3594
    %v3596 = vpop.f32.mrb[0].mxu0
    %3597 = vmatprep.mubr.bf16.mxu0 0
    %3598 = vmatmul.mubr.bf16.gmra.mrb[0].mxu0 %v3346
    %v3599 = vpop.f32.mrb[0].mxu0
    %v3600 = vadd.f32 0.0, %v3599
    %v3601 = vpop.f32.mrb[0].mxu0
    %v3602 = vpop.f32.mrb[0].mxu0
    %v3603 = vadd.f32 0.0, %v3602
    %v3604 = vpop.f32.mrb[0].mxu0
    %3605 = vmatprep.mubr.bf16.mxu0 0
    %3606 = vmatmul.mubr.bf16.gmra.mrb[0].mxu0 %v3349
    %v3607 = vpop.f32.mrb[0].mxu0
    %v3608 = vadd.f32 0.0, %v3607
    %v3609 = vpop.f32.mrb[0].mxu0
    %v3610 = vpop.f32.mrb[0].mxu0
    %v3611 = vadd.f32 0.0, %v3610
    %v3612 = vpop.f32.mrb[0].mxu0
    %3613 = vmatprep.mubr.bf16.mxu0 0
    %3614 = vmatmul.mubr.bf16.gmra.mrb[0].mxu0 %v3352
    %v3615 = vpop.f32.mrb[0].mxu0
    %v3616 = vadd.f32 0.0, %v3615
    %v3617 = vpop.f32.mrb[0].mxu0
    %v3618 = vpop.f32.mrb[0].mxu0
    %v3619 = vadd.f32 0.0, %v3618
    %v3620 = vpop.f32.mrb[0].mxu0
    %3621 = vmatprep.mubr.bf16.mxu0 0
    %3622 = vmatmul.mubr.bf16.gmra.mrb[0].mxu0 %v3355
    %v3623 = vpop.f32.mrb[0].mxu0
    %v3624 = vadd.f32 0.0, %v3623
    %v3625 = vpop.f32.mrb[0].mxu0
    %v3626 = vpop.f32.mrb[0].mxu0
    %v3627 = vadd.f32 0.0, %v3626
    %v3628 = vpop.f32.mrb[0].mxu0
    %3629 = vmatprep.mubr.bf16.mxu0 0
    %3630 = vmatmul.mubr.bf16.gmra.mrb[0].mxu0 %v3358
    %v3631 = vpop.f32.mrb[0].mxu0
    %v3632 = vadd.f32 0.0, %v3631
    %v3633 = vpop.f32.mrb[0].mxu0
    %v3634 = vpop.f32.mrb[0].mxu0
    %v3635 = vadd.f32 0.0, %v3634
    %v3636 = vpop.f32.mrb[0].mxu0
    %3637 = vmatprep.mubr.bf16.mxu0 0
    %3638 = vmatmul.mubr.bf16.gmra.mrb[0].mxu0 %v3361
    %v3639 = vpop.f32.mrb[0].mxu0
    %v3640 = vadd.f32 0.0, %v3639
    %v3641 = vpop.f32.mrb[0].mxu0
    %v3642 = vpop.f32.mrb[0].mxu0
    %v3643 = vadd.f32 0.0, %v3642
    %v3644 = vpop.f32.mrb[0].mxu0
    %3645 = vmatprep.mubr.bf16.mxu0 0
    %3646 = vmatmul.mubr.bf16.gmra.mrb[0].mxu0 %v3364
    %v3647 = vpop.f32.mrb[0].mxu0
    %v3648 = vadd.f32 0.0, %v3647
    %v3649 = vpop.f32.mrb[0].mxu0
    %v3650 = vpop.f32.mrb[0].mxu0
    %v3651 = vadd.f32 0.0, %v3650
    %v3652 = vpop.f32.mrb[0].mxu0
    %3653 = vmatprep.mubr.bf16.mxu0 0
    %3654 = vmatmul.mubr.bf16.gmra.mrb[0].mxu0 %v3367
    %v3655 = vpop.f32.mrb[0].mxu0
    %v3656 = vadd.f32 0.0, %v3655
    %v3657 = vpop.f32.mrb[0].mxu0
    %v3658 = vpop.f32.mrb[0].mxu0
    %v3659 = vadd.f32 0.0, %v3658
    %v3660 = vpop.f32.mrb[0].mxu0
    %3661 = vmatprep.mubr.bf16.mxu0 0
    %3662 = vmatmul.mubr.bf16.gmra.mrb[0].mxu0 %v3370
    %v3663 = vpop.f32.mrb[0].mxu0
    %v3664 = vadd.f32 0.0, %v3663
    %v3665 = vpop.f32.mrb[0].mxu0
    %v3666 = vpop.f32.mrb[0].mxu0
    %v3667 = vadd.f32 0.0, %v3666
    %v3668 = vpop.f32.mrb[0].mxu0
    %3669 = vmatprep.mubr.bf16.mxu0 0
    %3670 = vmatmul.mubr.bf16.gmra.mrb[0].mxu0 %v3373
    %v3671 = vpop.f32.mrb[0].mxu0
    %v3672 = vadd.f32 0.0, %v3671
    %v3673 = vpop.f32.mrb[0].mxu0
    %v3674 = vpop.f32.mrb[0].mxu0
    %v3675 = vadd.f32 0.0, %v3674
    %v3676 = vpop.f32.mrb[0].mxu0
    %3677 = vmatprep.mubr.bf16.mxu0 0
    %3678 = vmatmul.mubr.bf16.gmra.mrb[0].mxu0 %v3376
    %v3679 = vpop.f32.mrb[0].mxu0
    %v3680 = vadd.f32 0.0, %v3679
    %v3681 = vpop.f32.mrb[0].mxu0
    %v3682 = vpop.f32.mrb[0].mxu0
    %v3683 = vadd.f32 0.0, %v3682
    %v3684 = vpop.f32.mrb[0].mxu0
    %3685 = vmatprep.mubr.bf16.mxu0 0
    %3686 = vmatmul.mubr.bf16.gmra.mrb[0].mxu0 %v3379
    %v3687 = vpop.f32.mrb[0].mxu0
    %v3688 = vadd.f32 0.0, %v3687
    %v3689 = vpop.f32.mrb[0].mxu0
    %v3690 = vpop.f32.mrb[0].mxu0
    %v3691 = vadd.f32 0.0, %v3690
    %v3692 = vpop.f32.mrb[0].mxu0
    %3693 = vmatprep.mubr.bf16.mxu0 0
    %3694 = vmatmul.mubr.bf16.gmra.mrb[0].mxu0 %v3382
    %v3695 = vpop.f32.mrb[0].mxu0
    %v3696 = vadd.f32 0.0, %v3695
    %v3697 = vpop.f32.mrb[0].mxu0
    %v3698 = vpop.f32.mrb[0].mxu0
    %v3699 = vadd.f32 0.0, %v3698
    %v3700 = vpop.f32.mrb[0].mxu0
    %3701 = vmatprep.mubr.bf16.mxu0 0
    %3702 = vmatmul.mubr.bf16.gmra.mrb[0].mxu0 %v3385
    %v3703 = vpop.f32.mrb[0].mxu0
    %v3704 = vadd.f32 0.0, %v3703
    %v3705 = vpop.f32.mrb[0].mxu0
    %v3706 = vpop.f32.mrb[0].mxu0
    %v3707 = vadd.f32 0.0, %v3706
    %v3708 = vpop.f32.mrb[0].mxu0
    %3709 = vmatprep.mubr.bf16.mxu0 0
    %3710 = vmatmul.mubr.bf16.gmra.mrb[0].mxu0 %v3388
    %v3711 = vpop.f32.mrb[0].mxu0
    %v3712 = vadd.f32 0.0, %v3711
    %v3713 = vpop.f32.mrb[0].mxu0
    %v3714 = vpop.f32.mrb[0].mxu0
    %v3715 = vadd.f32 0.0, %v3714
    %v3716 = vpop.f32.mrb[0].mxu0
    %3717 = vmatprep.mubr.bf16.mxu0 0
    %3718 = vmatmul.mubr.bf16.gmra.mrb[0].mxu0 %v3391
    %v3719 = vpop.f32.mrb[0].mxu0
    %v3720 = vadd.f32 0.0, %v3719
    %v3721 = vpop.f32.mrb[0].mxu0
    %v3722 = vpop.f32.mrb[0].mxu0
    %v3723 = vadd.f32 0.0, %v3722
    %v3724 = vpop.f32.mrb[0].mxu0
    %3725 = vmatprep.mubr.bf16.mxu0 0
    %3726 = vmatmul.mubr.bf16.gmra.mrb[0].mxu0 %v3394
    %v3727 = vpop.f32.mrb[0].mxu0
    %v3728 = vadd.f32 0.0, %v3727
    %v3729 = vpop.f32.mrb[0].mxu0
    %v3730 = vpop.f32.mrb[0].mxu0
    %v3731 = vadd.f32 0.0, %v3730
    %v3732 = vpop.f32.mrb[0].mxu0
    %3733 = vmatprep.mubr.bf16.mxu0 0
    %3734 = vmatmul.mubr.bf16.gmra.mrb[0].mxu0 %v3397
    %v3735 = vpop.f32.mrb[0].mxu0
    %v3736 = vadd.f32 0.0, %v3735
    %v3737 = vpop.f32.mrb[0].mxu0
    %v3738 = vpop.f32.mrb[0].mxu0
    %v3739 = vadd.f32 0.0, %v3738
    %v3740 = vpop.f32.mrb[0].mxu0
    %3741 = vmatprep.mubr.bf16.mxu0 0
    %3742 = vmatmul.mubr.bf16.gmra.mrb[0].mxu0 %v3400
    %v3743 = vpop.f32.mrb[0].mxu0
    %v3744 = vadd.f32 0.0, %v3743
    %v3745 = vpop.f32.mrb[0].mxu0
    %v3746 = vpop.f32.mrb[0].mxu0
    %v3747 = vpop.f32.mrb[0].mxu0
    %3748 = vdwg.mxu0
    %v3749 = vadd.f32 %v3090, %v3440
    %v3750 = vadd.f32 %v3091, %v3443
    %v3751 = vadd.f32 %v3092, %v3448
    %v3752 = vadd.f32 %v3093, %v3451
    %v3753 = vadd.f32 %v3094, %v3456
    %v3754 = vadd.f32 %v3095, %v3459
    %v3755 = vadd.f32 %v3096, %v3464
    %v3756 = vadd.f32 %v3097, %v3467
    %v3757 = vadd.f32 %v3098, %v3472
    %v3758 = vadd.f32 %v3099, %v3475
    %v3759 = vadd.f32 %v3100, %v3480
    %v3760 = vadd.f32 %v3101, %v3483
    %v3761 = vadd.f32 %v3102, %v3488
    %v3762 = vadd.f32 %v3103, %v3491
    %v3763 = vadd.f32 %v3104, %v3496
    %v3764 = vadd.f32 %v3105, %v3499
    %v3765 = vadd.f32 %v3106, %v3504
    %v3766 = vadd.f32 %v3107, %v3507
    %v3767 = vadd.f32 %v3108, %v3512
    %v3768 = vadd.f32 %v3109, %v3515
    %v3769 = vadd.f32 %v3110, %v3520
    %v3770 = vadd.f32 %v3111, %v3523
    %v3771 = vadd.f32 %v3112, %v3528
    %v3772 = vadd.f32 %v3113, %v3531
    %v3773 = vadd.f32 %v3114, %v3536
    %v3774 = vadd.f32 %v3115, %v3539
    %v3775 = vadd.f32 %v3116, %v3544
    %v3776 = vadd.f32 %v3117, %v3547
    %v3777 = vadd.f32 %v3118, %v3552
    %v3778 = vadd.f32 %v3119, %v3555
    %v3779 = vadd.f32 %v3120, %v3560
    %v3780 = vadd.f32 %v3121, %v3563
    %v3781 = vadd.f32 %v3122, %v3568
    %v3782 = vadd.f32 %v3123, %v3571
    %v3783 = vadd.f32 %v3124, %v3576
    %v3784 = vadd.f32 %v3125, %v3579
    %v3785 = vadd.f32 %v3126, %v3584
    %v3786 = vadd.f32 %v3127, %v3587
    %v3787 = vadd.f32 %v3128, %v3592
    %v3788 = vadd.f32 %v3129, %v3595
    %v3789 = vadd.f32 %v3130, %v3600
    %v3790 = vadd.f32 %v3131, %v3603
    %v3791 = vadd.f32 %v3132, %v3608
    %v3792 = vadd.f32 %v3133, %v3611
    %v3793 = vadd.f32 %v3134, %v3616
    %v3794 = vadd.f32 %v3135, %v3619
    %v3795 = vadd.f32 %v3136, %v3624
    %v3796 = vadd.f32 %v3137, %v3627
    %v3797 = vadd.f32 %v3138, %v3632
    %v3798 = vadd.f32 %v3139, %v3635
    %v3799 = vadd.f32 %v3140, %v3640
    %v3800 = vadd.f32 %v3141, %v3643
    %v3801 = vadd.f32 %v3142, %v3648
    %v3802 = vadd.f32 %v3143, %v3651
    %v3803 = vadd.f32 %v3144, %v3656
    %v3804 = vadd.f32 %v3145, %v3659
    %v3805 = vadd.f32 %v3146, %v3664
    %v3806 = vadd.f32 %v3147, %v3667
    %v3807 = vadd.f32 %v3148, %v3672
    %v3808 = vadd.f32 %v3149, %v3675
    %v3809 = vadd.f32 %v3150, %v3680
    %v3810 = vadd.f32 %v3151, %v3683
    %v3811 = vadd.f32 %v3152, %v3688
    %v3812 = vadd.f32 %v3153, %v3691
    %v3813 = vadd.f32 %v3154, %v3696
    %v3814 = vadd.f32 %v3155, %v3699
    %v3815 = vadd.f32 %v3156, %v3704
    %v3816 = vadd.f32 %v3157, %v3707
    %v3817 = vadd.f32 %v3158, %v3712
    %v3818 = vadd.f32 %v3159, %v3715
    %v3819 = vadd.f32 %v3160, %v3720
    %v3820 = vadd.f32 %v3161, %v3723
    %v3821 = vadd.f32 %v3162, %v3728
    %v3822 = vadd.f32 %v3163, %v3731
    %v3823 = vadd.f32 %v3164, %v3736
    %v3824 = vadd.f32 %v3165, %v3739
    %v3825 = vadd.f32 %v3166, %v3744
    %v3826 = vld [vmem:[%s0 + $0x24] sm:$0xff]
    %v3827 = vld [vmem:[%s0 + $0x2c] sm:$0xff]
    %v3828 = vld [vmem:[%s0 + $0x34] sm:$0xff]
    %v3829 = vld [vmem:[%s0 + $0x3c] sm:$0xff]
    %v3830 = vld [vmem:[%s0 + $0x44] sm:$0xff]
    %v3831 = vld [vmem:[%s0 + $0x4c] sm:$0xff]
    %v3832 = vld [vmem:[%s0 + $0x54] sm:$0xff]
    %v3833 = vld [vmem:[%s0 + $0x5c] sm:$0xff]
    %v3834 = vld [vmem:[%s0 + $0x64] sm:$0xff]
    %v3835 = vld [vmem:[%s0 + $0x6c] sm:$0xff]
    %v3836 = vld [vmem:[%s0 + $0x74] sm:$0xff]
    %v3837 = vld [vmem:[%s0 + $0x7c] sm:$0xff]
    %v3838 = vld [vmem:[%s0 + $0x84] sm:$0xff]
    %v3839 = vld [vmem:[%s0 + $0x8c] sm:$0xff]
    %v3840 = vld [vmem:[%s0 + $0x94] sm:$0xff]
    %v3841 = vld [vmem:[%s0 + $0x9c] sm:$0xff]
    %v3842 = vld [vmem:[%s0 + $0xa4] sm:$0xff]
    %v3843 = vld [vmem:[%s0 + $0xac] sm:$0xff]
    %v3844 = vld [vmem:[%s0 + $0xb4] sm:$0xff]
    %v3845 = vld [vmem:[%s0 + $0xbc] sm:$0xff]
    %v3846 = vld [vmem:[%s0 + $0xc4] sm:$0xff]
    %v3847 = vld [vmem:[%s0 + $0xcc] sm:$0xff]
    %v3848 = vld [vmem:[%s0 + $0xd4] sm:$0xff]
    %v3849 = vld [vmem:[%s0 + $0xdc] sm:$0xff]
    %v3850 = vld [vmem:[%s0 + $0xe4] sm:$0xff]
    %v3851 = vld [vmem:[%s0 + $0xec] sm:$0xff]
    %v3852 = vld [vmem:[%s0 + $0xf4] sm:$0xff]
    %v3853 = vld [vmem:[%s0 + $0xfc] sm:$0xff]
    %v3854 = vld [vmem:[%s0 + $0x104] sm:$0xff]
    %v3855 = vld [vmem:[%s0 + $0x10c] sm:$0xff]
    %v3856 = vld [vmem:[%s0 + $0x114] sm:$0xff]
    %v3857 = vld [vmem:[%s0 + $0x11c] sm:$0xff]
    %v3858 = vld [vmem:[%s0 + $0x124] sm:$0xff]
    %v3859 = vld [vmem:[%s0 + $0x12c] sm:$0xff]
    %v3860 = vld [vmem:[%s0 + $0x134] sm:$0xff]
    %v3861 = vld [vmem:[%s0 + $0x13c] sm:$0xff]
    %v3862 = vld [vmem:[%s0 + $0x144] sm:$0xff]
    %v3863 = vld [vmem:[%s0 + $0x14c] sm:$0xff]
    %v3864 = vld [vmem:[%s0 + $0x154] sm:$0xff]
    %v3865 = vld [vmem:[%s0 + $0x15c] sm:$0xff]
    %v3866 = vld [vmem:[%s0 + $0x164] sm:$0xff]
    %v3867 = vld [vmem:[%s0 + $0x16c] sm:$0xff]
    %v3868 = vld [vmem:[%s0 + $0x174] sm:$0xff]
    %v3869 = vld [vmem:[%s0 + $0x17c] sm:$0xff]
    %v3870 = vld [vmem:[%s0 + $0x184] sm:$0xff]
    %v3871 = vld [vmem:[%s0 + $0x18c] sm:$0xff]
    %v3872 = vld [vmem:[%s0 + $0x194] sm:$0xff]
    %v3873 = vld [vmem:[%s0 + $0x19c] sm:$0xff]
    %v3874 = vld [vmem:[%s0 + $0x1a4] sm:$0xff]
    %v3875 = vld [vmem:[%s0 + $0x1ac] sm:$0xff]
    %v3876 = vld [vmem:[%s0 + $0x1b4] sm:$0xff]
    %v3877 = vld [vmem:[%s0 + $0x1bc] sm:$0xff]
    %v3878 = vld [vmem:[%s0 + $0x1c4] sm:$0xff]
    %v3879 = vld [vmem:[%s0 + $0x1cc] sm:$0xff]
    %v3880 = vld [vmem:[%s0 + $0x1d4] sm:$0xff]
    %v3881 = vld [vmem:[%s0 + $0x1dc] sm:$0xff]
    %v3882 = vld [vmem:[%s0 + $0x1e4] sm:$0xff]
    %v3883 = vld [vmem:[%s0 + $0x1ec] sm:$0xff]
    %v3884 = vld [vmem:[%s0 + $0x1f4] sm:$0xff]
    %v3885 = vld [vmem:[%s0 + $0x1fc] sm:$0xff]
    %v3886 = vld [vmem:[%s0 + $0x204] sm:$0xff]
    %v3887 = vld [vmem:[%s0 + $0x20c] sm:$0xff]
    %v3888 = vld [vmem:[%s0 + $0x214] sm:$0xff]
    %v3889 = vld [vmem:[%s0 + $0x21c] sm:$0xff]
    %v3890 = vld [vmem:[%s0 + $0x224] sm:$0xff]
    %v3891 = vld [vmem:[%s0 + $0x22c] sm:$0xff]
    %v3892 = vld [vmem:[%s0 + $0x234] sm:$0xff]
    %v3893 = vld [vmem:[%s0 + $0x23c] sm:$0xff]
    %v3894 = vld [vmem:[%s0 + $0x244] sm:$0xff]
    %v3895 = vld [vmem:[%s0 + $0x24c] sm:$0xff]
    %v3896 = vld [vmem:[%s0 + $0x254] sm:$0xff]
    %v3897 = vld [vmem:[%s0 + $0x25c] sm:$0xff]
    %v3898 = vld [vmem:[%s0 + $0x264] sm:$0xff]
    %v3899 = vld [vmem:[%s0 + $0x26c] sm:$0xff]
    %v3900 = vld [vmem:[%s0 + $0x274] sm:$0xff]
    %v3901 = vld [vmem:[%s0 + $0x27c] sm:$0xff]
    %v3902 = vld [vmem:[%s0 + $0x284] sm:$0x3]
    %v3903 = vpack.c.bf16 %v3827, %v3826
    %v3904 = vpack.c.bf16 %v3829, %v3828
    %v3905 = vpack.c.bf16 %v3831, %v3830
    %v3906 = vpack.c.bf16 %v3833, %v3832
    %v3907 = vpack.c.bf16 %v3835, %v3834
    %v3908 = vpack.c.bf16 %v3837, %v3836
    %v3909 = vpack.c.bf16 %v3839, %v3838
    %v3910 = vpack.c.bf16 %v3841, %v3840
    %v3911 = vpack.c.bf16 %v3843, %v3842
    %v3912 = vpack.c.bf16 %v3845, %v3844
    %v3913 = vpack.c.bf16 %v3847, %v3846
    %v3914 = vpack.c.bf16 %v3849, %v3848
    %v3915 = vpack.c.bf16 %v3851, %v3850
    %v3916 = vpack.c.bf16 %v3853, %v3852
    %v3917 = vpack.c.bf16 %v3855, %v3854
    %v3918 = vpack.c.bf16 %v3857, %v3856
    %v3919 = vpack.c.bf16 %v3859, %v3858
    %v3920 = vpack.c.bf16 %v3861, %v3860
    %v3921 = vpack.c.bf16 %v3863, %v3862
    %v3922 = vpack.c.bf16 %v3865, %v3864
    %v3923 = vpack.c.bf16 %v3867, %v3866
    %v3924 = vpack.c.bf16 %v3869, %v3868
    %v3925 = vpack.c.bf16 %v3871, %v3870
    %v3926 = vpack.c.bf16 %v3873, %v3872
    %v3927 = vpack.c.bf16 %v3875, %v3874
    %v3928 = vpack.c.bf16 %v3877, %v3876
    %v3929 = vpack.c.bf16 %v3879, %v3878
    %v3930 = vpack.c.bf16 %v3881, %v3880
    %v3931 = vpack.c.bf16 %v3883, %v3882
    %v3932 = vpack.c.bf16 %v3885, %v3884
    %v3933 = vpack.c.bf16 %v3887, %v3886
    %v3934 = vpack.c.bf16 %v3889, %v3888
    %v3935 = vpack.c.bf16 %v3891, %v3890
    %v3936 = vpack.c.bf16 %v3893, %v3892
    %v3937 = vpack.c.bf16 %v3895, %v3894
    %v3938 = vpack.c.bf16 %v3897, %v3896
    %v3939 = vpack.c.bf16 %v3899, %v3898
    %v3940 = vpack.c.bf16 %v3901, %v3900
    %v3941 = vpack.c.bf16 %v3902, %v3902
    %s3942 = scalar_lea.vmem %s1, 12
    %v3943 = vld [vmem:[%s3942] sm:$0x3]
    %v3945 = vsel %vm260, %v3903, 0
    %v3948 = vsel %vm260, %v3904, 0
    %v3951 = vsel %vm260, %v3905, 0
    %v3954 = vsel %vm260, %v3906, 0
    %v3957 = vsel %vm260, %v3907, 0
    %v3960 = vsel %vm260, %v3908, 0
    %v3963 = vsel %vm260, %v3909, 0
    %v3966 = vsel %vm260, %v3910, 0
    %v3969 = vsel %vm260, %v3911, 0
    %v3972 = vsel %vm260, %v3912, 0
    %v3975 = vsel %vm260, %v3913, 0
    %v3978 = vsel %vm260, %v3914, 0
    %v3981 = vsel %vm260, %v3915, 0
    %v3984 = vsel %vm260, %v3916, 0
    %v3987 = vsel %vm260, %v3917, 0
    %v3990 = vsel %vm260, %v3918, 0
    %v3993 = vsel %vm260, %v3919, 0
    %v3996 = vsel %vm260, %v3920, 0
    %v3999 = vsel %vm260, %v3921, 0
    %v4002 = vsel %vm260, %v3922, 0
    %v4005 = vsel %vm260, %v3923, 0
    %v4008 = vsel %vm260, %v3924, 0
    %v4011 = vsel %vm260, %v3925, 0
    %v4014 = vsel %vm260, %v3926, 0
    %v4017 = vsel %vm260, %v3927, 0
    %v4020 = vsel %vm260, %v3928, 0
    %v4023 = vsel %vm260, %v3929, 0
    %v4026 = vsel %vm260, %v3930, 0
    %v4029 = vsel %vm260, %v3931, 0
    %v4032 = vsel %vm260, %v3932, 0
    %v4035 = vsel %vm260, %v3933, 0
    %v4038 = vsel %vm260, %v3934, 0
    %v4041 = vsel %vm260, %v3935, 0
    %v4044 = vsel %vm260, %v3936, 0
    %v4047 = vsel %vm260, %v3937, 0
    %v4050 = vsel %vm260, %v3938, 0
    %v4053 = vsel %vm260, %v3939, 0
    %v4056 = vsel %vm260, %v3940, 0
    %v4059 = vsel %vm260, %v3941, 0
    %v4062 = vsel %vm378, %v3943, 0
    %4064 = vmatprep.subr.bf16.mxu0 0
    %4065 = vmatpush1.bf16.msra.mxu0 %v4062
    %4066 = vmatprep.subr.bf16.mxu0 0
    %4067 = vmatpush1.bf16.msra.mxu0 0
    %4068 = vmatprep.subr.bf16.mxu0 0
    %4069 = vmatpush1.bf16.msra.mxu0 0
    %4070 = vmatprep.subr.bf16.mxu0 0
    %4071 = vmatpush1.bf16.msra.mxu0 0
    %4072 = vmatprep.subr.bf16.mxu0 0
    %4073 = vmatpush1.bf16.msra.mxu0 0
    %4074 = vmatprep.subr.bf16.mxu0 0
    %4075 = vmatpush1.bf16.msra.mxu0 0
    %4076 = vmatprep.subr.bf16.mxu0 0
    %4077 = vmatpush1.bf16.msra.mxu0 0
    %4078 = vmatprep.subr.bf16.mxu0 0
    %4079 = vmatpush1.bf16.msra.mxu0 0
    %4080 = vmatprep.subr.bf16.mxu0 0
    %4081 = vmatpush1.bf16.msra.mxu0 0
    %4082 = vmatprep.subr.bf16.mxu0 0
    %4083 = vmatpush1.bf16.msra.mxu0 0
    %4084 = vmatprep.subr.bf16.mxu0 0
    %4085 = vmatpush1.bf16.msra.mxu0 0
    %4086 = vmatprep.subr.bf16.mxu0 0
    %4087 = vmatpush1.bf16.msra.mxu0 0
    %4088 = vmatprep.subr.bf16.mxu0 0
    %4089 = vmatpush1.bf16.msra.mxu0 0
    %4090 = vmatprep.subr.bf16.mxu0 0
    %4091 = vmatpush1.bf16.msra.mxu0 0
    %4092 = vmatprep.subr.bf16.mxu0 0
    %4093 = vmatpush1.bf16.msra.mxu0 0
    %4094 = vmatprep.subr.bf16.mxu0 0
    %4095 = vmatpush1.bf16.msra.mxu0 0
    %4096 = vmatprep.mubr.bf16.mxu0 0
    %4097 = vmatmul.mubr.bf16.gmra.mrb[0].mxu0 %v3945
    %v4098 = vpop.f32.mrb[0].mxu0
    %v4099 = vadd.f32 0.0, %v4098
    %v4100 = vpop.f32.mrb[0].mxu0
    %v4101 = vpop.f32.mrb[0].mxu0
    %v4102 = vadd.f32 0.0, %v4101
    %v4103 = vpop.f32.mrb[0].mxu0
    %4104 = vmatprep.mubr.bf16.mxu0 0
    %4105 = vmatmul.mubr.bf16.gmra.mrb[0].mxu0 %v3948
    %v4106 = vpop.f32.mrb[0].mxu0
    %v4107 = vadd.f32 0.0, %v4106
    %v4108 = vpop.f32.mrb[0].mxu0
    %v4109 = vpop.f32.mrb[0].mxu0
    %v4110 = vadd.f32 0.0, %v4109
    %v4111 = vpop.f32.mrb[0].mxu0
    %4112 = vmatprep.mubr.bf16.mxu0 0
    %4113 = vmatmul.mubr.bf16.gmra.mrb[0].mxu0 %v3951
    %v4114 = vpop.f32.mrb[0].mxu0
    %v4115 = vadd.f32 0.0, %v4114
    %v4116 = vpop.f32.mrb[0].mxu0
    %v4117 = vpop.f32.mrb[0].mxu0
    %v4118 = vadd.f32 0.0, %v4117
    %v4119 = vpop.f32.mrb[0].mxu0
    %4120 = vmatprep.mubr.bf16.mxu0 0
    %4121 = vmatmul.mubr.bf16.gmra.mrb[0].mxu0 %v3954
    %v4122 = vpop.f32.mrb[0].mxu0
    %v4123 = vadd.f32 0.0, %v4122
    %v4124 = vpop.f32.mrb[0].mxu0
    %v4125 = vpop.f32.mrb[0].mxu0
    %v4126 = vadd.f32 0.0, %v4125
    %v4127 = vpop.f32.mrb[0].mxu0
    %4128 = vmatprep.mubr.bf16.mxu0 0
    %4129 = vmatmul.mubr.bf16.gmra.mrb[0].mxu0 %v3957
    %v4130 = vpop.f32.mrb[0].mxu0
    %v4131 = vadd.f32 0.0, %v4130
    %v4132 = vpop.f32.mrb[0].mxu0
    %v4133 = vpop.f32.mrb[0].mxu0
    %v4134 = vadd.f32 0.0, %v4133
    %v4135 = vpop.f32.mrb[0].mxu0
    %4136 = vmatprep.mubr.bf16.mxu0 0
    %4137 = vmatmul.mubr.bf16.gmra.mrb[0].mxu0 %v3960
    %v4138 = vpop.f32.mrb[0].mxu0
    %v4139 = vadd.f32 0.0, %v4138
    %v4140 = vpop.f32.mrb[0].mxu0
    %v4141 = vpop.f32.mrb[0].mxu0
    %v4142 = vadd.f32 0.0, %v4141
    %v4143 = vpop.f32.mrb[0].mxu0
    %4144 = vmatprep.mubr.bf16.mxu0 0
    %4145 = vmatmul.mubr.bf16.gmra.mrb[0].mxu0 %v3963
    %v4146 = vpop.f32.mrb[0].mxu0
    %v4147 = vadd.f32 0.0, %v4146
    %v4148 = vpop.f32.mrb[0].mxu0
    %v4149 = vpop.f32.mrb[0].mxu0
    %v4150 = vadd.f32 0.0, %v4149
    %v4151 = vpop.f32.mrb[0].mxu0
    %4152 = vmatprep.mubr.bf16.mxu0 0
    %4153 = vmatmul.mubr.bf16.gmra.mrb[0].mxu0 %v3966
    %v4154 = vpop.f32.mrb[0].mxu0
    %v4155 = vadd.f32 0.0, %v4154
    %v4156 = vpop.f32.mrb[0].mxu0
    %v4157 = vpop.f32.mrb[0].mxu0
    %v4158 = vadd.f32 0.0, %v4157
    %v4159 = vpop.f32.mrb[0].mxu0
    %4160 = vmatprep.mubr.bf16.mxu0 0
    %4161 = vmatmul.mubr.bf16.gmra.mrb[0].mxu0 %v3969
    %v4162 = vpop.f32.mrb[0].mxu0
    %v4163 = vadd.f32 0.0, %v4162
    %v4164 = vpop.f32.mrb[0].mxu0
    %v4165 = vpop.f32.mrb[0].mxu0
    %v4166 = vadd.f32 0.0, %v4165
    %v4167 = vpop.f32.mrb[0].mxu0
    %4168 = vmatprep.mubr.bf16.mxu0 0
    %4169 = vmatmul.mubr.bf16.gmra.mrb[0].mxu0 %v3972
    %v4170 = vpop.f32.mrb[0].mxu0
    %v4171 = vadd.f32 0.0, %v4170
    %v4172 = vpop.f32.mrb[0].mxu0
    %v4173 = vpop.f32.mrb[0].mxu0
    %v4174 = vadd.f32 0.0, %v4173
    %v4175 = vpop.f32.mrb[0].mxu0
    %4176 = vmatprep.mubr.bf16.mxu0 0
    %4177 = vmatmul.mubr.bf16.gmra.mrb[0].mxu0 %v3975
    %v4178 = vpop.f32.mrb[0].mxu0
    %v4179 = vadd.f32 0.0, %v4178
    %v4180 = vpop.f32.mrb[0].mxu0
    %v4181 = vpop.f32.mrb[0].mxu0
    %v4182 = vadd.f32 0.0, %v4181
    %v4183 = vpop.f32.mrb[0].mxu0
    %4184 = vmatprep.mubr.bf16.mxu0 0
    %4185 = vmatmul.mubr.bf16.gmra.mrb[0].mxu0 %v3978
    %v4186 = vpop.f32.mrb[0].mxu0
    %v4187 = vadd.f32 0.0, %v4186
    %v4188 = vpop.f32.mrb[0].mxu0
    %v4189 = vpop.f32.mrb[0].mxu0
    %v4190 = vadd.f32 0.0, %v4189
    %v4191 = vpop.f32.mrb[0].mxu0
    %4192 = vmatprep.mubr.bf16.mxu0 0
    %4193 = vmatmul.mubr.bf16.gmra.mrb[0].mxu0 %v3981
    %v4194 = vpop.f32.mrb[0].mxu0
    %v4195 = vadd.f32 0.0, %v4194
    %v4196 = vpop.f32.mrb[0].mxu0
    %v4197 = vpop.f32.mrb[0].mxu0
    %v4198 = vadd.f32 0.0, %v4197
    %v4199 = vpop.f32.mrb[0].mxu0
    %4200 = vmatprep.mubr.bf16.mxu0 0
    %4201 = vmatmul.mubr.bf16.gmra.mrb[0].mxu0 %v3984
    %v4202 = vpop.f32.mrb[0].mxu0
    %v4203 = vadd.f32 0.0, %v4202
    %v4204 = vpop.f32.mrb[0].mxu0
    %v4205 = vpop.f32.mrb[0].mxu0
    %v4206 = vadd.f32 0.0, %v4205
    %v4207 = vpop.f32.mrb[0].mxu0
    %4208 = vmatprep.mubr.bf16.mxu0 0
    %4209 = vmatmul.mubr.bf16.gmra.mrb[0].mxu0 %v3987
    %v4210 = vpop.f32.mrb[0].mxu0
    %v4211 = vadd.f32 0.0, %v4210
    %v4212 = vpop.f32.mrb[0].mxu0
    %v4213 = vpop.f32.mrb[0].mxu0
    %v4214 = vadd.f32 0.0, %v4213
    %v4215 = vpop.f32.mrb[0].mxu0
    %4216 = vmatprep.mubr.bf16.mxu0 0
    %4217 = vmatmul.mubr.bf16.gmra.mrb[0].mxu0 %v3990
    %v4218 = vpop.f32.mrb[0].mxu0
    %v4219 = vadd.f32 0.0, %v4218
    %v4220 = vpop.f32.mrb[0].mxu0
    %v4221 = vpop.f32.mrb[0].mxu0
    %v4222 = vadd.f32 0.0, %v4221
    %v4223 = vpop.f32.mrb[0].mxu0
    %4224 = vmatprep.mubr.bf16.mxu0 0
    %4225 = vmatmul.mubr.bf16.gmra.mrb[0].mxu0 %v3993
    %v4226 = vpop.f32.mrb[0].mxu0
    %v4227 = vadd.f32 0.0, %v4226
    %v4228 = vpop.f32.mrb[0].mxu0
    %v4229 = vpop.f32.mrb[0].mxu0
    %v4230 = vadd.f32 0.0, %v4229
    %v4231 = vpop.f32.mrb[0].mxu0
    %4232 = vmatprep.mubr.bf16.mxu0 0
    %4233 = vmatmul.mubr.bf16.gmra.mrb[0].mxu0 %v3996
    %v4234 = vpop.f32.mrb[0].mxu0
    %v4235 = vadd.f32 0.0, %v4234
    %v4236 = vpop.f32.mrb[0].mxu0
    %v4237 = vpop.f32.mrb[0].mxu0
    %v4238 = vadd.f32 0.0, %v4237
    %v4239 = vpop.f32.mrb[0].mxu0
    %4240 = vmatprep.mubr.bf16.mxu0 0
    %4241 = vmatmul.mubr.bf16.gmra.mrb[0].mxu0 %v3999
    %v4242 = vpop.f32.mrb[0].mxu0
    %v4243 = vadd.f32 0.0, %v4242
    %v4244 = vpop.f32.mrb[0].mxu0
    %v4245 = vpop.f32.mrb[0].mxu0
    %v4246 = vadd.f32 0.0, %v4245
    %v4247 = vpop.f32.mrb[0].mxu0
    %4248 = vmatprep.mubr.bf16.mxu0 0
    %4249 = vmatmul.mubr.bf16.gmra.mrb[0].mxu0 %v4002
    %v4250 = vpop.f32.mrb[0].mxu0
    %v4251 = vadd.f32 0.0, %v4250
    %v4252 = vpop.f32.mrb[0].mxu0
    %v4253 = vpop.f32.mrb[0].mxu0
    %v4254 = vadd.f32 0.0, %v4253
    %v4255 = vpop.f32.mrb[0].mxu0
    %4256 = vmatprep.mubr.bf16.mxu0 0
    %4257 = vmatmul.mubr.bf16.gmra.mrb[0].mxu0 %v4005
    %v4258 = vpop.f32.mrb[0].mxu0
    %v4259 = vadd.f32 0.0, %v4258
    %v4260 = vpop.f32.mrb[0].mxu0
    %v4261 = vpop.f32.mrb[0].mxu0
    %v4262 = vadd.f32 0.0, %v4261
    %v4263 = vpop.f32.mrb[0].mxu0
    %4264 = vmatprep.mubr.bf16.mxu0 0
    %4265 = vmatmul.mubr.bf16.gmra.mrb[0].mxu0 %v4008
    %v4266 = vpop.f32.mrb[0].mxu0
    %v4267 = vadd.f32 0.0, %v4266
    %v4268 = vpop.f32.mrb[0].mxu0
    %v4269 = vpop.f32.mrb[0].mxu0
    %v4270 = vadd.f32 0.0, %v4269
    %v4271 = vpop.f32.mrb[0].mxu0
    %4272 = vmatprep.mubr.bf16.mxu0 0
    %4273 = vmatmul.mubr.bf16.gmra.mrb[0].mxu0 %v4011
    %v4274 = vpop.f32.mrb[0].mxu0
    %v4275 = vadd.f32 0.0, %v4274
    %v4276 = vpop.f32.mrb[0].mxu0
    %v4277 = vpop.f32.mrb[0].mxu0
    %v4278 = vadd.f32 0.0, %v4277
    %v4279 = vpop.f32.mrb[0].mxu0
    %4280 = vmatprep.mubr.bf16.mxu0 0
    %4281 = vmatmul.mubr.bf16.gmra.mrb[0].mxu0 %v4014
    %v4282 = vpop.f32.mrb[0].mxu0
    %v4283 = vadd.f32 0.0, %v4282
    %v4284 = vpop.f32.mrb[0].mxu0
    %v4285 = vpop.f32.mrb[0].mxu0
    %v4286 = vadd.f32 0.0, %v4285
    %v4287 = vpop.f32.mrb[0].mxu0
    %4288 = vmatprep.mubr.bf16.mxu0 0
    %4289 = vmatmul.mubr.bf16.gmra.mrb[0].mxu0 %v4017
    %v4290 = vpop.f32.mrb[0].mxu0
    %v4291 = vadd.f32 0.0, %v4290
    %v4292 = vpop.f32.mrb[0].mxu0
    %v4293 = vpop.f32.mrb[0].mxu0
    %v4294 = vadd.f32 0.0, %v4293
    %v4295 = vpop.f32.mrb[0].mxu0
    %4296 = vmatprep.mubr.bf16.mxu0 0
    %4297 = vmatmul.mubr.bf16.gmra.mrb[0].mxu0 %v4020
    %v4298 = vpop.f32.mrb[0].mxu0
    %v4299 = vadd.f32 0.0, %v4298
    %v4300 = vpop.f32.mrb[0].mxu0
    %v4301 = vpop.f32.mrb[0].mxu0
    %v4302 = vadd.f32 0.0, %v4301
    %v4303 = vpop.f32.mrb[0].mxu0
    %4304 = vmatprep.mubr.bf16.mxu0 0
    %4305 = vmatmul.mubr.bf16.gmra.mrb[0].mxu0 %v4023
    %v4306 = vpop.f32.mrb[0].mxu0
    %v4307 = vadd.f32 0.0, %v4306
    %v4308 = vpop.f32.mrb[0].mxu0
    %v4309 = vpop.f32.mrb[0].mxu0
    %v4310 = vadd.f32 0.0, %v4309
    %v4311 = vpop.f32.mrb[0].mxu0
    %4312 = vmatprep.mubr.bf16.mxu0 0
    %4313 = vmatmul.mubr.bf16.gmra.mrb[0].mxu0 %v4026
    %v4314 = vpop.f32.mrb[0].mxu0
    %v4315 = vadd.f32 0.0, %v4314
    %v4316 = vpop.f32.mrb[0].mxu0
    %v4317 = vpop.f32.mrb[0].mxu0
    %v4318 = vadd.f32 0.0, %v4317
    %v4319 = vpop.f32.mrb[0].mxu0
    %4320 = vmatprep.mubr.bf16.mxu0 0
    %4321 = vmatmul.mubr.bf16.gmra.mrb[0].mxu0 %v4029
    %v4322 = vpop.f32.mrb[0].mxu0
    %v4323 = vadd.f32 0.0, %v4322
    %v4324 = vpop.f32.mrb[0].mxu0
    %v4325 = vpop.f32.mrb[0].mxu0
    %v4326 = vadd.f32 0.0, %v4325
    %v4327 = vpop.f32.mrb[0].mxu0
    %4328 = vmatprep.mubr.bf16.mxu0 0
    %4329 = vmatmul.mubr.bf16.gmra.mrb[0].mxu0 %v4032
    %v4330 = vpop.f32.mrb[0].mxu0
    %v4331 = vadd.f32 0.0, %v4330
    %v4332 = vpop.f32.mrb[0].mxu0
    %v4333 = vpop.f32.mrb[0].mxu0
    %v4334 = vadd.f32 0.0, %v4333
    %v4335 = vpop.f32.mrb[0].mxu0
    %4336 = vmatprep.mubr.bf16.mxu0 0
    %4337 = vmatmul.mubr.bf16.gmra.mrb[0].mxu0 %v4035
    %v4338 = vpop.f32.mrb[0].mxu0
    %v4339 = vadd.f32 0.0, %v4338
    %v4340 = vpop.f32.mrb[0].mxu0
    %v4341 = vpop.f32.mrb[0].mxu0
    %v4342 = vadd.f32 0.0, %v4341
    %v4343 = vpop.f32.mrb[0].mxu0
    %4344 = vmatprep.mubr.bf16.mxu0 0
    %4345 = vmatmul.mubr.bf16.gmra.mrb[0].mxu0 %v4038
    %v4346 = vpop.f32.mrb[0].mxu0
    %v4347 = vadd.f32 0.0, %v4346
    %v4348 = vpop.f32.mrb[0].mxu0
    %v4349 = vpop.f32.mrb[0].mxu0
    %v4350 = vadd.f32 0.0, %v4349
    %v4351 = vpop.f32.mrb[0].mxu0
    %4352 = vmatprep.mubr.bf16.mxu0 0
    %4353 = vmatmul.mubr.bf16.gmra.mrb[0].mxu0 %v4041
    %v4354 = vpop.f32.mrb[0].mxu0
    %v4355 = vadd.f32 0.0, %v4354
    %v4356 = vpop.f32.mrb[0].mxu0
    %v4357 = vpop.f32.mrb[0].mxu0
    %v4358 = vadd.f32 0.0, %v4357
    %v4359 = vpop.f32.mrb[0].mxu0
    %4360 = vmatprep.mubr.bf16.mxu0 0
    %4361 = vmatmul.mubr.bf16.gmra.mrb[0].mxu0 %v4044
    %v4362 = vpop.f32.mrb[0].mxu0
    %v4363 = vadd.f32 0.0, %v4362
    %v4364 = vpop.f32.mrb[0].mxu0
    %v4365 = vpop.f32.mrb[0].mxu0
    %v4366 = vadd.f32 0.0, %v4365
    %v4367 = vpop.f32.mrb[0].mxu0
    %4368 = vmatprep.mubr.bf16.mxu0 0
    %4369 = vmatmul.mubr.bf16.gmra.mrb[0].mxu0 %v4047
    %v4370 = vpop.f32.mrb[0].mxu0
    %v4371 = vadd.f32 0.0, %v4370
    %v4372 = vpop.f32.mrb[0].mxu0
    %v4373 = vpop.f32.mrb[0].mxu0
    %v4374 = vadd.f32 0.0, %v4373
    %v4375 = vpop.f32.mrb[0].mxu0
    %4376 = vmatprep.mubr.bf16.mxu0 0
    %4377 = vmatmul.mubr.bf16.gmra.mrb[0].mxu0 %v4050
    %v4378 = vpop.f32.mrb[0].mxu0
    %v4379 = vadd.f32 0.0, %v4378
    %v4380 = vpop.f32.mrb[0].mxu0
    %v4381 = vpop.f32.mrb[0].mxu0
    %v4382 = vadd.f32 0.0, %v4381
    %v4383 = vpop.f32.mrb[0].mxu0
    %4384 = vmatprep.mubr.bf16.mxu0 0
    %4385 = vmatmul.mubr.bf16.gmra.mrb[0].mxu0 %v4053
    %v4386 = vpop.f32.mrb[0].mxu0
    %v4387 = vadd.f32 0.0, %v4386
    %v4388 = vpop.f32.mrb[0].mxu0
    %v4389 = vpop.f32.mrb[0].mxu0
    %v4390 = vadd.f32 0.0, %v4389
    %v4391 = vpop.f32.mrb[0].mxu0
    %4392 = vmatprep.mubr.bf16.mxu0 0
    %4393 = vmatmul.mubr.bf16.gmra.mrb[0].mxu0 %v4056
    %v4394 = vpop.f32.mrb[0].mxu0
    %v4395 = vadd.f32 0.0, %v4394
    %v4396 = vpop.f32.mrb[0].mxu0
    %v4397 = vpop.f32.mrb[0].mxu0
    %v4398 = vadd.f32 0.0, %v4397
    %v4399 = vpop.f32.mrb[0].mxu0
    %4400 = vmatprep.mubr.bf16.mxu0 0
    %4401 = vmatmul.mubr.bf16.gmra.mrb[0].mxu0 %v4059
    %v4402 = vpop.f32.mrb[0].mxu0
    %v4403 = vadd.f32 0.0, %v4402
    %v4404 = vpop.f32.mrb[0].mxu0
    %v4405 = vpop.f32.mrb[0].mxu0
    %v4406 = vpop.f32.mrb[0].mxu0
    %4407 = vdwg.mxu0
    %v4408 = vadd.f32 %v3749, %v4099
    %v4409 = vadd.f32 %v3750, %v4102
    %v4410 = vadd.f32 %v3751, %v4107
    %v4411 = vadd.f32 %v3752, %v4110
    %v4412 = vadd.f32 %v3753, %v4115
    %v4413 = vadd.f32 %v3754, %v4118
    %v4414 = vadd.f32 %v3755, %v4123
    %v4415 = vadd.f32 %v3756, %v4126
    %v4416 = vadd.f32 %v3757, %v4131
    %v4417 = vadd.f32 %v3758, %v4134
    %v4418 = vadd.f32 %v3759, %v4139
    %v4419 = vadd.f32 %v3760, %v4142
    %v4420 = vadd.f32 %v3761, %v4147
    %v4421 = vadd.f32 %v3762, %v4150
    %v4422 = vadd.f32 %v3763, %v4155
    %v4423 = vadd.f32 %v3764, %v4158
    %v4424 = vadd.f32 %v3765, %v4163
    %v4425 = vadd.f32 %v3766, %v4166
    %v4426 = vadd.f32 %v3767, %v4171
    %v4427 = vadd.f32 %v3768, %v4174
    %v4428 = vadd.f32 %v3769, %v4179
    %v4429 = vadd.f32 %v3770, %v4182
    %v4430 = vadd.f32 %v3771, %v4187
    %v4431 = vadd.f32 %v3772, %v4190
    %v4432 = vadd.f32 %v3773, %v4195
    %v4433 = vadd.f32 %v3774, %v4198
    %v4434 = vadd.f32 %v3775, %v4203
    %v4435 = vadd.f32 %v3776, %v4206
    %v4436 = vadd.f32 %v3777, %v4211
    %v4437 = vadd.f32 %v3778, %v4214
    %v4438 = vadd.f32 %v3779, %v4219
    %v4439 = vadd.f32 %v3780, %v4222
    %v4440 = vadd.f32 %v3781, %v4227
    %v4441 = vadd.f32 %v3782, %v4230
    %v4442 = vadd.f32 %v3783, %v4235
    %v4443 = vadd.f32 %v3784, %v4238
    %v4444 = vadd.f32 %v3785, %v4243
    %v4445 = vadd.f32 %v3786, %v4246
    %v4446 = vadd.f32 %v3787, %v4251
    %v4447 = vadd.f32 %v3788, %v4254
    %v4448 = vadd.f32 %v3789, %v4259
    %v4449 = vadd.f32 %v3790, %v4262
    %v4450 = vadd.f32 %v3791, %v4267
    %v4451 = vadd.f32 %v3792, %v4270
    %v4452 = vadd.f32 %v3793, %v4275
    %v4453 = vadd.f32 %v3794, %v4278
    %v4454 = vadd.f32 %v3795, %v4283
    %v4455 = vadd.f32 %v3796, %v4286
    %v4456 = vadd.f32 %v3797, %v4291
    %v4457 = vadd.f32 %v3798, %v4294
    %v4458 = vadd.f32 %v3799, %v4299
    %v4459 = vadd.f32 %v3800, %v4302
    %v4460 = vadd.f32 %v3801, %v4307
    %v4461 = vadd.f32 %v3802, %v4310
    %v4462 = vadd.f32 %v3803, %v4315
    %v4463 = vadd.f32 %v3804, %v4318
    %v4464 = vadd.f32 %v3805, %v4323
    %v4465 = vadd.f32 %v3806, %v4326
    %v4466 = vadd.f32 %v3807, %v4331
    %v4467 = vadd.f32 %v3808, %v4334
    %v4468 = vadd.f32 %v3809, %v4339
    %v4469 = vadd.f32 %v3810, %v4342
    %v4470 = vadd.f32 %v3811, %v4347
    %v4471 = vadd.f32 %v3812, %v4350
    %v4472 = vadd.f32 %v3813, %v4355
    %v4473 = vadd.f32 %v3814, %v4358
    %v4474 = vadd.f32 %v3815, %v4363
    %v4475 = vadd.f32 %v3816, %v4366
    %v4476 = vadd.f32 %v3817, %v4371
    %v4477 = vadd.f32 %v3818, %v4374
    %v4478 = vadd.f32 %v3819, %v4379
    %v4479 = vadd.f32 %v3820, %v4382
    %v4480 = vadd.f32 %v3821, %v4387
    %v4481 = vadd.f32 %v3822, %v4390
    %v4482 = vadd.f32 %v3823, %v4395
    %v4483 = vadd.f32 %v3824, %v4398
    %v4484 = vadd.f32 %v3825, %v4403
    %v4485 = vld [vmem:[%s0 + $0x25] sm:$0xff]
    %v4486 = vld [vmem:[%s0 + $0x2d] sm:$0xff]
    %v4487 = vld [vmem:[%s0 + $0x35] sm:$0xff]
    %v4488 = vld [vmem:[%s0 + $0x3d] sm:$0xff]
    %v4489 = vld [vmem:[%s0 + $0x45] sm:$0xff]
    %v4490 = vld [vmem:[%s0 + $0x4d] sm:$0xff]
    %v4491 = vld [vmem:[%s0 + $0x55] sm:$0xff]
    %v4492 = vld [vmem:[%s0 + $0x5d] sm:$0xff]
    %v4493 = vld [vmem:[%s0 + $0x65] sm:$0xff]
    %v4494 = vld [vmem:[%s0 + $0x6d] sm:$0xff]
    %v4495 = vld [vmem:[%s0 + $0x75] sm:$0xff]
    %v4496 = vld [vmem:[%s0 + $0x7d] sm:$0xff]
    %v4497 = vld [vmem:[%s0 + $0x85] sm:$0xff]
    %v4498 = vld [vmem:[%s0 + $0x8d] sm:$0xff]
    %v4499 = vld [vmem:[%s0 + $0x95] sm:$0xff]
    %v4500 = vld [vmem:[%s0 + $0x9d] sm:$0xff]
    %v4501 = vld [vmem:[%s0 + $0xa5] sm:$0xff]
    %v4502 = vld [vmem:[%s0 + $0xad] sm:$0xff]
    %v4503 = vld [vmem:[%s0 + $0xb5] sm:$0xff]
    %v4504 = vld [vmem:[%s0 + $0xbd] sm:$0xff]
    %v4505 = vld [vmem:[%s0 + $0xc5] sm:$0xff]
    %v4506 = vld [vmem:[%s0 + $0xcd] sm:$0xff]
    %v4507 = vld [vmem:[%s0 + $0xd5] sm:$0xff]
    %v4508 = vld [vmem:[%s0 + $0xdd] sm:$0xff]
    %v4509 = vld [vmem:[%s0 + $0xe5] sm:$0xff]
    %v4510 = vld [vmem:[%s0 + $0xed] sm:$0xff]
    %v4511 = vld [vmem:[%s0 + $0xf5] sm:$0xff]
    %v4512 = vld [vmem:[%s0 + $0xfd] sm:$0xff]
    %v4513 = vld [vmem:[%s0 + $0x105] sm:$0xff]
    %v4514 = vld [vmem:[%s0 + $0x10d] sm:$0xff]
    %v4515 = vld [vmem:[%s0 + $0x115] sm:$0xff]
    %v4516 = vld [vmem:[%s0 + $0x11d] sm:$0xff]
    %v4517 = vld [vmem:[%s0 + $0x125] sm:$0xff]
    %v4518 = vld [vmem:[%s0 + $0x12d] sm:$0xff]
    %v4519 = vld [vmem:[%s0 + $0x135] sm:$0xff]
    %v4520 = vld [vmem:[%s0 + $0x13d] sm:$0xff]
    %v4521 = vld [vmem:[%s0 + $0x145] sm:$0xff]
    %v4522 = vld [vmem:[%s0 + $0x14d] sm:$0xff]
    %v4523 = vld [vmem:[%s0 + $0x155] sm:$0xff]
    %v4524 = vld [vmem:[%s0 + $0x15d] sm:$0xff]
    %v4525 = vld [vmem:[%s0 + $0x165] sm:$0xff]
    %v4526 = vld [vmem:[%s0 + $0x16d] sm:$0xff]
    %v4527 = vld [vmem:[%s0 + $0x175] sm:$0xff]
    %v4528 = vld [vmem:[%s0 + $0x17d] sm:$0xff]
    %v4529 = vld [vmem:[%s0 + $0x185] sm:$0xff]
    %v4530 = vld [vmem:[%s0 + $0x18d] sm:$0xff]
    %v4531 = vld [vmem:[%s0 + $0x195] sm:$0xff]
    %v4532 = vld [vmem:[%s0 + $0x19d] sm:$0xff]
    %v4533 = vld [vmem:[%s0 + $0x1a5] sm:$0xff]
    %v4534 = vld [vmem:[%s0 + $0x1ad] sm:$0xff]
    %v4535 = vld [vmem:[%s0 + $0x1b5] sm:$0xff]
    %v4536 = vld [vmem:[%s0 + $0x1bd] sm:$0xff]
    %v4537 = vld [vmem:[%s0 + $0x1c5] sm:$0xff]
    %v4538 = vld [vmem:[%s0 + $0x1cd] sm:$0xff]
    %v4539 = vld [vmem:[%s0 + $0x1d5] sm:$0xff]
    %v4540 = vld [vmem:[%s0 + $0x1dd] sm:$0xff]
    %v4541 = vld [vmem:[%s0 + $0x1e5] sm:$0xff]
    %v4542 = vld [vmem:[%s0 + $0x1ed] sm:$0xff]
    %v4543 = vld [vmem:[%s0 + $0x1f5] sm:$0xff]
    %v4544 = vld [vmem:[%s0 + $0x1fd] sm:$0xff]
    %v4545 = vld [vmem:[%s0 + $0x205] sm:$0xff]
    %v4546 = vld [vmem:[%s0 + $0x20d] sm:$0xff]
    %v4547 = vld [vmem:[%s0 + $0x215] sm:$0xff]
    %v4548 = vld [vmem:[%s0 + $0x21d] sm:$0xff]
    %v4549 = vld [vmem:[%s0 + $0x225] sm:$0xff]
    %v4550 = vld [vmem:[%s0 + $0x22d] sm:$0xff]
    %v4551 = vld [vmem:[%s0 + $0x235] sm:$0xff]
    %v4552 = vld [vmem:[%s0 + $0x23d] sm:$0xff]
    %v4553 = vld [vmem:[%s0 + $0x245] sm:$0xff]
    %v4554 = vld [vmem:[%s0 + $0x24d] sm:$0xff]
    %v4555 = vld [vmem:[%s0 + $0x255] sm:$0xff]
    %v4556 = vld [vmem:[%s0 + $0x25d] sm:$0xff]
    %v4557 = vld [vmem:[%s0 + $0x265] sm:$0xff]
    %v4558 = vld [vmem:[%s0 + $0x26d] sm:$0xff]
    %v4559 = vld [vmem:[%s0 + $0x275] sm:$0xff]
    %v4560 = vld [vmem:[%s0 + $0x27d] sm:$0xff]
    %v4561 = vld [vmem:[%s0 + $0x285] sm:$0x3]
    %v4562 = vpack.c.bf16 %v4486, %v4485
    %v4563 = vpack.c.bf16 %v4488, %v4487
    %v4564 = vpack.c.bf16 %v4490, %v4489
    %v4565 = vpack.c.bf16 %v4492, %v4491
    %v4566 = vpack.c.bf16 %v4494, %v4493
    %v4567 = vpack.c.bf16 %v4496, %v4495
    %v4568 = vpack.c.bf16 %v4498, %v4497
    %v4569 = vpack.c.bf16 %v4500, %v4499
    %v4570 = vpack.c.bf16 %v4502, %v4501
    %v4571 = vpack.c.bf16 %v4504, %v4503
    %v4572 = vpack.c.bf16 %v4506, %v4505
    %v4573 = vpack.c.bf16 %v4508, %v4507
    %v4574 = vpack.c.bf16 %v4510, %v4509
    %v4575 = vpack.c.bf16 %v4512, %v4511
    %v4576 = vpack.c.bf16 %v4514, %v4513
    %v4577 = vpack.c.bf16 %v4516, %v4515
    %v4578 = vpack.c.bf16 %v4518, %v4517
    %v4579 = vpack.c.bf16 %v4520, %v4519
    %v4580 = vpack.c.bf16 %v4522, %v4521
    %v4581 = vpack.c.bf16 %v4524, %v4523
    %v4582 = vpack.c.bf16 %v4526, %v4525
    %v4583 = vpack.c.bf16 %v4528, %v4527
    %v4584 = vpack.c.bf16 %v4530, %v4529
    %v4585 = vpack.c.bf16 %v4532, %v4531
    %v4586 = vpack.c.bf16 %v4534, %v4533
    %v4587 = vpack.c.bf16 %v4536, %v4535
    %v4588 = vpack.c.bf16 %v4538, %v4537
    %v4589 = vpack.c.bf16 %v4540, %v4539
    %v4590 = vpack.c.bf16 %v4542, %v4541
    %v4591 = vpack.c.bf16 %v4544, %v4543
    %v4592 = vpack.c.bf16 %v4546, %v4545
    %v4593 = vpack.c.bf16 %v4548, %v4547
    %v4594 = vpack.c.bf16 %v4550, %v4549
    %v4595 = vpack.c.bf16 %v4552, %v4551
    %v4596 = vpack.c.bf16 %v4554, %v4553
    %v4597 = vpack.c.bf16 %v4556, %v4555
    %v4598 = vpack.c.bf16 %v4558, %v4557
    %v4599 = vpack.c.bf16 %v4560, %v4559
    %v4600 = vpack.c.bf16 %v4561, %v4561
    %s4601 = scalar_lea.vmem %s1, 14
    %v4602 = vld [vmem:[%s4601] sm:$0x3]
    %v4604 = vsel %vm260, %v4562, 0
    %v4607 = vsel %vm260, %v4563, 0
    %v4610 = vsel %vm260, %v4564, 0
    %v4613 = vsel %vm260, %v4565, 0
    %v4616 = vsel %vm260, %v4566, 0
    %v4619 = vsel %vm260, %v4567, 0
    %v4622 = vsel %vm260, %v4568, 0
    %v4625 = vsel %vm260, %v4569, 0
    %v4628 = vsel %vm260, %v4570, 0
    %v4631 = vsel %vm260, %v4571, 0
    %v4634 = vsel %vm260, %v4572, 0
    %v4637 = vsel %vm260, %v4573, 0
    %v4640 = vsel %vm260, %v4574, 0
    %v4643 = vsel %vm260, %v4575, 0
    %v4646 = vsel %vm260, %v4576, 0
    %v4649 = vsel %vm260, %v4577, 0
    %v4652 = vsel %vm260, %v4578, 0
    %v4655 = vsel %vm260, %v4579, 0
    %v4658 = vsel %vm260, %v4580, 0
    %v4661 = vsel %vm260, %v4581, 0
    %v4664 = vsel %vm260, %v4582, 0
    %v4667 = vsel %vm260, %v4583, 0
    %v4670 = vsel %vm260, %v4584, 0
    %v4673 = vsel %vm260, %v4585, 0
    %v4676 = vsel %vm260, %v4586, 0
    %v4679 = vsel %vm260, %v4587, 0
    %v4682 = vsel %vm260, %v4588, 0
    %v4685 = vsel %vm260, %v4589, 0
    %v4688 = vsel %vm260, %v4590, 0
    %v4691 = vsel %vm260, %v4591, 0
    %v4694 = vsel %vm260, %v4592, 0
    %v4697 = vsel %vm260, %v4593, 0
    %v4700 = vsel %vm260, %v4594, 0
    %v4703 = vsel %vm260, %v4595, 0
    %v4706 = vsel %vm260, %v4596, 0
    %v4709 = vsel %vm260, %v4597, 0
    %v4712 = vsel %vm260, %v4598, 0
    %v4715 = vsel %vm260, %v4599, 0
    %v4718 = vsel %vm260, %v4600, 0
    %v4721 = vsel %vm378, %v4602, 0
    %4723 = vmatprep.subr.bf16.mxu0 0
    %4724 = vmatpush1.bf16.msra.mxu0 %v4721
    %4725 = vmatprep.subr.bf16.mxu0 0
    %4726 = vmatpush1.bf16.msra.mxu0 0
    %4727 = vmatprep.subr.bf16.mxu0 0
    %4728 = vmatpush1.bf16.msra.mxu0 0
    %4729 = vmatprep.subr.bf16.mxu0 0
    %4730 = vmatpush1.bf16.msra.mxu0 0
    %4731 = vmatprep.subr.bf16.mxu0 0
    %4732 = vmatpush1.bf16.msra.mxu0 0
    %4733 = vmatprep.subr.bf16.mxu0 0
    %4734 = vmatpush1.bf16.msra.mxu0 0
    %4735 = vmatprep.subr.bf16.mxu0 0
    %4736 = vmatpush1.bf16.msra.mxu0 0
    %4737 = vmatprep.subr.bf16.mxu0 0
    %4738 = vmatpush1.bf16.msra.mxu0 0
    %4739 = vmatprep.subr.bf16.mxu0 0
    %4740 = vmatpush1.bf16.msra.mxu0 0
    %4741 = vmatprep.subr.bf16.mxu0 0
    %4742 = vmatpush1.bf16.msra.mxu0 0
    %4743 = vmatprep.subr.bf16.mxu0 0
    %4744 = vmatpush1.bf16.msra.mxu0 0
    %4745 = vmatprep.subr.bf16.mxu0 0
    %4746 = vmatpush1.bf16.msra.mxu0 0
    %4747 = vmatprep.subr.bf16.mxu0 0
    %4748 = vmatpush1.bf16.msra.mxu0 0
    %4749 = vmatprep.subr.bf16.mxu0 0
    %4750 = vmatpush1.bf16.msra.mxu0 0
    %4751 = vmatprep.subr.bf16.mxu0 0
    %4752 = vmatpush1.bf16.msra.mxu0 0
    %4753 = vmatprep.subr.bf16.mxu0 0
    %4754 = vmatpush1.bf16.msra.mxu0 0
    %4755 = vmatprep.mubr.bf16.mxu0 0
    %4756 = vmatmul.mubr.bf16.gmra.mrb[0].mxu0 %v4604
    %v4757 = vpop.f32.mrb[0].mxu0
    %v4758 = vadd.f32 0.0, %v4757
    %v4759 = vpop.f32.mrb[0].mxu0
    %v4760 = vpop.f32.mrb[0].mxu0
    %v4761 = vadd.f32 0.0, %v4760
    %v4762 = vpop.f32.mrb[0].mxu0
    %4763 = vmatprep.mubr.bf16.mxu0 0
    %4764 = vmatmul.mubr.bf16.gmra.mrb[0].mxu0 %v4607
    %v4765 = vpop.f32.mrb[0].mxu0
    %v4766 = vadd.f32 0.0, %v4765
    %v4767 = vpop.f32.mrb[0].mxu0
    %v4768 = vpop.f32.mrb[0].mxu0
    %v4769 = vadd.f32 0.0, %v4768
    %v4770 = vpop.f32.mrb[0].mxu0
    %4771 = vmatprep.mubr.bf16.mxu0 0
    %4772 = vmatmul.mubr.bf16.gmra.mrb[0].mxu0 %v4610
    %v4773 = vpop.f32.mrb[0].mxu0
    %v4774 = vadd.f32 0.0, %v4773
    %v4775 = vpop.f32.mrb[0].mxu0
    %v4776 = vpop.f32.mrb[0].mxu0
    %v4777 = vadd.f32 0.0, %v4776
    %v4778 = vpop.f32.mrb[0].mxu0
    %4779 = vmatprep.mubr.bf16.mxu0 0
    %4780 = vmatmul.mubr.bf16.gmra.mrb[0].mxu0 %v4613
    %v4781 = vpop.f32.mrb[0].mxu0
    %v4782 = vadd.f32 0.0, %v4781
    %v4783 = vpop.f32.mrb[0].mxu0
    %v4784 = vpop.f32.mrb[0].mxu0
    %v4785 = vadd.f32 0.0, %v4784
    %v4786 = vpop.f32.mrb[0].mxu0
    %4787 = vmatprep.mubr.bf16.mxu0 0
    %4788 = vmatmul.mubr.bf16.gmra.mrb[0].mxu0 %v4616
    %v4789 = vpop.f32.mrb[0].mxu0
    %v4790 = vadd.f32 0.0, %v4789
    %v4791 = vpop.f32.mrb[0].mxu0
    %v4792 = vpop.f32.mrb[0].mxu0
    %v4793 = vadd.f32 0.0, %v4792
    %v4794 = vpop.f32.mrb[0].mxu0
    %4795 = vmatprep.mubr.bf16.mxu0 0
    %4796 = vmatmul.mubr.bf16.gmra.mrb[0].mxu0 %v4619
    %v4797 = vpop.f32.mrb[0].mxu0
    %v4798 = vadd.f32 0.0, %v4797
    %v4799 = vpop.f32.mrb[0].mxu0
    %v4800 = vpop.f32.mrb[0].mxu0
    %v4801 = vadd.f32 0.0, %v4800
    %v4802 = vpop.f32.mrb[0].mxu0
    %4803 = vmatprep.mubr.bf16.mxu0 0
    %4804 = vmatmul.mubr.bf16.gmra.mrb[0].mxu0 %v4622
    %v4805 = vpop.f32.mrb[0].mxu0
    %v4806 = vadd.f32 0.0, %v4805
    %v4807 = vpop.f32.mrb[0].mxu0
    %v4808 = vpop.f32.mrb[0].mxu0
    %v4809 = vadd.f32 0.0, %v4808
    %v4810 = vpop.f32.mrb[0].mxu0
    %4811 = vmatprep.mubr.bf16.mxu0 0
    %4812 = vmatmul.mubr.bf16.gmra.mrb[0].mxu0 %v4625
    %v4813 = vpop.f32.mrb[0].mxu0
    %v4814 = vadd.f32 0.0, %v4813
    %v4815 = vpop.f32.mrb[0].mxu0
    %v4816 = vpop.f32.mrb[0].mxu0
    %v4817 = vadd.f32 0.0, %v4816
    %v4818 = vpop.f32.mrb[0].mxu0
    %4819 = vmatprep.mubr.bf16.mxu0 0
    %4820 = vmatmul.mubr.bf16.gmra.mrb[0].mxu0 %v4628
    %v4821 = vpop.f32.mrb[0].mxu0
    %v4822 = vadd.f32 0.0, %v4821
    %v4823 = vpop.f32.mrb[0].mxu0
    %v4824 = vpop.f32.mrb[0].mxu0
    %v4825 = vadd.f32 0.0, %v4824
    %v4826 = vpop.f32.mrb[0].mxu0
    %4827 = vmatprep.mubr.bf16.mxu0 0
    %4828 = vmatmul.mubr.bf16.gmra.mrb[0].mxu0 %v4631
    %v4829 = vpop.f32.mrb[0].mxu0
    %v4830 = vadd.f32 0.0, %v4829
    %v4831 = vpop.f32.mrb[0].mxu0
    %v4832 = vpop.f32.mrb[0].mxu0
    %v4833 = vadd.f32 0.0, %v4832
    %v4834 = vpop.f32.mrb[0].mxu0
    %4835 = vmatprep.mubr.bf16.mxu0 0
    %4836 = vmatmul.mubr.bf16.gmra.mrb[0].mxu0 %v4634
    %v4837 = vpop.f32.mrb[0].mxu0
    %v4838 = vadd.f32 0.0, %v4837
    %v4839 = vpop.f32.mrb[0].mxu0
    %v4840 = vpop.f32.mrb[0].mxu0
    %v4841 = vadd.f32 0.0, %v4840
    %v4842 = vpop.f32.mrb[0].mxu0
    %4843 = vmatprep.mubr.bf16.mxu0 0
    %4844 = vmatmul.mubr.bf16.gmra.mrb[0].mxu0 %v4637
    %v4845 = vpop.f32.mrb[0].mxu0
    %v4846 = vadd.f32 0.0, %v4845
    %v4847 = vpop.f32.mrb[0].mxu0
    %v4848 = vpop.f32.mrb[0].mxu0
    %v4849 = vadd.f32 0.0, %v4848
    %v4850 = vpop.f32.mrb[0].mxu0
    %4851 = vmatprep.mubr.bf16.mxu0 0
    %4852 = vmatmul.mubr.bf16.gmra.mrb[0].mxu0 %v4640
    %v4853 = vpop.f32.mrb[0].mxu0
    %v4854 = vadd.f32 0.0, %v4853
    %v4855 = vpop.f32.mrb[0].mxu0
    %v4856 = vpop.f32.mrb[0].mxu0
    %v4857 = vadd.f32 0.0, %v4856
    %v4858 = vpop.f32.mrb[0].mxu0
    %4859 = vmatprep.mubr.bf16.mxu0 0
    %4860 = vmatmul.mubr.bf16.gmra.mrb[0].mxu0 %v4643
    %v4861 = vpop.f32.mrb[0].mxu0
    %v4862 = vadd.f32 0.0, %v4861
    %v4863 = vpop.f32.mrb[0].mxu0
    %v4864 = vpop.f32.mrb[0].mxu0
    %v4865 = vadd.f32 0.0, %v4864
    %v4866 = vpop.f32.mrb[0].mxu0
    %4867 = vmatprep.mubr.bf16.mxu0 0
    %4868 = vmatmul.mubr.bf16.gmra.mrb[0].mxu0 %v4646
    %v4869 = vpop.f32.mrb[0].mxu0
    %v4870 = vadd.f32 0.0, %v4869
    %v4871 = vpop.f32.mrb[0].mxu0
    %v4872 = vpop.f32.mrb[0].mxu0
    %v4873 = vadd.f32 0.0, %v4872
    %v4874 = vpop.f32.mrb[0].mxu0
    %4875 = vmatprep.mubr.bf16.mxu0 0
    %4876 = vmatmul.mubr.bf16.gmra.mrb[0].mxu0 %v4649
    %v4877 = vpop.f32.mrb[0].mxu0
    %v4878 = vadd.f32 0.0, %v4877
    %v4879 = vpop.f32.mrb[0].mxu0
    %v4880 = vpop.f32.mrb[0].mxu0
    %v4881 = vadd.f32 0.0, %v4880
    %v4882 = vpop.f32.mrb[0].mxu0
    %4883 = vmatprep.mubr.bf16.mxu0 0
    %4884 = vmatmul.mubr.bf16.gmra.mrb[0].mxu0 %v4652
    %v4885 = vpop.f32.mrb[0].mxu0
    %v4886 = vadd.f32 0.0, %v4885
    %v4887 = vpop.f32.mrb[0].mxu0
    %v4888 = vpop.f32.mrb[0].mxu0
    %v4889 = vadd.f32 0.0, %v4888
    %v4890 = vpop.f32.mrb[0].mxu0
    %4891 = vmatprep.mubr.bf16.mxu0 0
    %4892 = vmatmul.mubr.bf16.gmra.mrb[0].mxu0 %v4655
    %v4893 = vpop.f32.mrb[0].mxu0
    %v4894 = vadd.f32 0.0, %v4893
    %v4895 = vpop.f32.mrb[0].mxu0
    %v4896 = vpop.f32.mrb[0].mxu0
    %v4897 = vadd.f32 0.0, %v4896
    %v4898 = vpop.f32.mrb[0].mxu0
    %4899 = vmatprep.mubr.bf16.mxu0 0
    %4900 = vmatmul.mubr.bf16.gmra.mrb[0].mxu0 %v4658
    %v4901 = vpop.f32.mrb[0].mxu0
    %v4902 = vadd.f32 0.0, %v4901
    %v4903 = vpop.f32.mrb[0].mxu0
    %v4904 = vpop.f32.mrb[0].mxu0
    %v4905 = vadd.f32 0.0, %v4904
    %v4906 = vpop.f32.mrb[0].mxu0
    %4907 = vmatprep.mubr.bf16.mxu0 0
    %4908 = vmatmul.mubr.bf16.gmra.mrb[0].mxu0 %v4661
    %v4909 = vpop.f32.mrb[0].mxu0
    %v4910 = vadd.f32 0.0, %v4909
    %v4911 = vpop.f32.mrb[0].mxu0
    %v4912 = vpop.f32.mrb[0].mxu0
    %v4913 = vadd.f32 0.0, %v4912
    %v4914 = vpop.f32.mrb[0].mxu0
    %4915 = vmatprep.mubr.bf16.mxu0 0
    %4916 = vmatmul.mubr.bf16.gmra.mrb[0].mxu0 %v4664
    %v4917 = vpop.f32.mrb[0].mxu0
    %v4918 = vadd.f32 0.0, %v4917
    %v4919 = vpop.f32.mrb[0].mxu0
    %v4920 = vpop.f32.mrb[0].mxu0
    %v4921 = vadd.f32 0.0, %v4920
    %v4922 = vpop.f32.mrb[0].mxu0
    %4923 = vmatprep.mubr.bf16.mxu0 0
    %4924 = vmatmul.mubr.bf16.gmra.mrb[0].mxu0 %v4667
    %v4925 = vpop.f32.mrb[0].mxu0
    %v4926 = vadd.f32 0.0, %v4925
    %v4927 = vpop.f32.mrb[0].mxu0
    %v4928 = vpop.f32.mrb[0].mxu0
    %v4929 = vadd.f32 0.0, %v4928
    %v4930 = vpop.f32.mrb[0].mxu0
    %4931 = vmatprep.mubr.bf16.mxu0 0
    %4932 = vmatmul.mubr.bf16.gmra.mrb[0].mxu0 %v4670
    %v4933 = vpop.f32.mrb[0].mxu0
    %v4934 = vadd.f32 0.0, %v4933
    %v4935 = vpop.f32.mrb[0].mxu0
    %v4936 = vpop.f32.mrb[0].mxu0
    %v4937 = vadd.f32 0.0, %v4936
    %v4938 = vpop.f32.mrb[0].mxu0
    %4939 = vmatprep.mubr.bf16.mxu0 0
    %4940 = vmatmul.mubr.bf16.gmra.mrb[0].mxu0 %v4673
    %v4941 = vpop.f32.mrb[0].mxu0
    %v4942 = vadd.f32 0.0, %v4941
    %v4943 = vpop.f32.mrb[0].mxu0
    %v4944 = vpop.f32.mrb[0].mxu0
    %v4945 = vadd.f32 0.0, %v4944
    %v4946 = vpop.f32.mrb[0].mxu0
    %4947 = vmatprep.mubr.bf16.mxu0 0
    %4948 = vmatmul.mubr.bf16.gmra.mrb[0].mxu0 %v4676
    %v4949 = vpop.f32.mrb[0].mxu0
    %v4950 = vadd.f32 0.0, %v4949
    %v4951 = vpop.f32.mrb[0].mxu0
    %v4952 = vpop.f32.mrb[0].mxu0
    %v4953 = vadd.f32 0.0, %v4952
    %v4954 = vpop.f32.mrb[0].mxu0
    %4955 = vmatprep.mubr.bf16.mxu0 0
    %4956 = vmatmul.mubr.bf16.gmra.mrb[0].mxu0 %v4679
    %v4957 = vpop.f32.mrb[0].mxu0
    %v4958 = vadd.f32 0.0, %v4957
    %v4959 = vpop.f32.mrb[0].mxu0
    %v4960 = vpop.f32.mrb[0].mxu0
    %v4961 = vadd.f32 0.0, %v4960
    %v4962 = vpop.f32.mrb[0].mxu0
    %4963 = vmatprep.mubr.bf16.mxu0 0
    %4964 = vmatmul.mubr.bf16.gmra.mrb[0].mxu0 %v4682
    %v4965 = vpop.f32.mrb[0].mxu0
    %v4966 = vadd.f32 0.0, %v4965
    %v4967 = vpop.f32.mrb[0].mxu0
    %v4968 = vpop.f32.mrb[0].mxu0
    %v4969 = vadd.f32 0.0, %v4968
    %v4970 = vpop.f32.mrb[0].mxu0
    %4971 = vmatprep.mubr.bf16.mxu0 0
    %4972 = vmatmul.mubr.bf16.gmra.mrb[0].mxu0 %v4685
    %v4973 = vpop.f32.mrb[0].mxu0
    %v4974 = vadd.f32 0.0, %v4973
    %v4975 = vpop.f32.mrb[0].mxu0
    %v4976 = vpop.f32.mrb[0].mxu0
    %v4977 = vadd.f32 0.0, %v4976
    %v4978 = vpop.f32.mrb[0].mxu0
    %4979 = vmatprep.mubr.bf16.mxu0 0
    %4980 = vmatmul.mubr.bf16.gmra.mrb[0].mxu0 %v4688
    %v4981 = vpop.f32.mrb[0].mxu0
    %v4982 = vadd.f32 0.0, %v4981
    %v4983 = vpop.f32.mrb[0].mxu0
    %v4984 = vpop.f32.mrb[0].mxu0
    %v4985 = vadd.f32 0.0, %v4984
    %v4986 = vpop.f32.mrb[0].mxu0
    %4987 = vmatprep.mubr.bf16.mxu0 0
    %4988 = vmatmul.mubr.bf16.gmra.mrb[0].mxu0 %v4691
    %v4989 = vpop.f32.mrb[0].mxu0
    %v4990 = vadd.f32 0.0, %v4989
    %v4991 = vpop.f32.mrb[0].mxu0
    %v4992 = vpop.f32.mrb[0].mxu0
    %v4993 = vadd.f32 0.0, %v4992
    %v4994 = vpop.f32.mrb[0].mxu0
    %4995 = vmatprep.mubr.bf16.mxu0 0
    %4996 = vmatmul.mubr.bf16.gmra.mrb[0].mxu0 %v4694
    %v4997 = vpop.f32.mrb[0].mxu0
    %v4998 = vadd.f32 0.0, %v4997
    %v4999 = vpop.f32.mrb[0].mxu0
    %v5000 = vpop.f32.mrb[0].mxu0
    %v5001 = vadd.f32 0.0, %v5000
    %v5002 = vpop.f32.mrb[0].mxu0
    %5003 = vmatprep.mubr.bf16.mxu0 0
    %5004 = vmatmul.mubr.bf16.gmra.mrb[0].mxu0 %v4697
    %v5005 = vpop.f32.mrb[0].mxu0
    %v5006 = vadd.f32 0.0, %v5005
    %v5007 = vpop.f32.mrb[0].mxu0
    %v5008 = vpop.f32.mrb[0].mxu0
    %v5009 = vadd.f32 0.0, %v5008
    %v5010 = vpop.f32.mrb[0].mxu0
    %5011 = vmatprep.mubr.bf16.mxu0 0
    %5012 = vmatmul.mubr.bf16.gmra.mrb[0].mxu0 %v4700
    %v5013 = vpop.f32.mrb[0].mxu0
    %v5014 = vadd.f32 0.0, %v5013
    %v5015 = vpop.f32.mrb[0].mxu0
    %v5016 = vpop.f32.mrb[0].mxu0
    %v5017 = vadd.f32 0.0, %v5016
    %v5018 = vpop.f32.mrb[0].mxu0
    %5019 = vmatprep.mubr.bf16.mxu0 0
    %5020 = vmatmul.mubr.bf16.gmra.mrb[0].mxu0 %v4703
    %v5021 = vpop.f32.mrb[0].mxu0
    %v5022 = vadd.f32 0.0, %v5021
    %v5023 = vpop.f32.mrb[0].mxu0
    %v5024 = vpop.f32.mrb[0].mxu0
    %v5025 = vadd.f32 0.0, %v5024
    %v5026 = vpop.f32.mrb[0].mxu0
    %5027 = vmatprep.mubr.bf16.mxu0 0
    %5028 = vmatmul.mubr.bf16.gmra.mrb[0].mxu0 %v4706
    %v5029 = vpop.f32.mrb[0].mxu0
    %v5030 = vadd.f32 0.0, %v5029
    %v5031 = vpop.f32.mrb[0].mxu0
    %v5032 = vpop.f32.mrb[0].mxu0
    %v5033 = vadd.f32 0.0, %v5032
    %v5034 = vpop.f32.mrb[0].mxu0
    %5035 = vmatprep.mubr.bf16.mxu0 0
    %5036 = vmatmul.mubr.bf16.gmra.mrb[0].mxu0 %v4709
    %v5037 = vpop.f32.mrb[0].mxu0
    %v5038 = vadd.f32 0.0, %v5037
    %v5039 = vpop.f32.mrb[0].mxu0
    %v5040 = vpop.f32.mrb[0].mxu0
    %v5041 = vadd.f32 0.0, %v5040
    %v5042 = vpop.f32.mrb[0].mxu0
    %5043 = vmatprep.mubr.bf16.mxu0 0
    %5044 = vmatmul.mubr.bf16.gmra.mrb[0].mxu0 %v4712
    %v5045 = vpop.f32.mrb[0].mxu0
    %v5046 = vadd.f32 0.0, %v5045
    %v5047 = vpop.f32.mrb[0].mxu0
    %v5048 = vpop.f32.mrb[0].mxu0
    %v5049 = vadd.f32 0.0, %v5048
    %v5050 = vpop.f32.mrb[0].mxu0
    %5051 = vmatprep.mubr.bf16.mxu0 0
    %5052 = vmatmul.mubr.bf16.gmra.mrb[0].mxu0 %v4715
    %v5053 = vpop.f32.mrb[0].mxu0
    %v5054 = vadd.f32 0.0, %v5053
    %v5055 = vpop.f32.mrb[0].mxu0
    %v5056 = vpop.f32.mrb[0].mxu0
    %v5057 = vadd.f32 0.0, %v5056
    %v5058 = vpop.f32.mrb[0].mxu0
    %5059 = vmatprep.mubr.bf16.mxu0 0
    %5060 = vmatmul.mubr.bf16.gmra.mrb[0].mxu0 %v4718
    %v5061 = vpop.f32.mrb[0].mxu0
    %v5062 = vadd.f32 0.0, %v5061
    %v5063 = vpop.f32.mrb[0].mxu0
    %v5064 = vpop.f32.mrb[0].mxu0
    %v5065 = vpop.f32.mrb[0].mxu0
    %5066 = vdwg.mxu0
    %v5067 = vadd.f32 %v4408, %v4758
    %v5068 = vadd.f32 %v4409, %v4761
    %v5069 = vadd.f32 %v4410, %v4766
    %v5070 = vadd.f32 %v4411, %v4769
    %v5071 = vadd.f32 %v4412, %v4774
    %v5072 = vadd.f32 %v4413, %v4777
    %v5073 = vadd.f32 %v4414, %v4782
    %v5074 = vadd.f32 %v4415, %v4785
    %v5075 = vadd.f32 %v4416, %v4790
    %v5076 = vadd.f32 %v4417, %v4793
    %v5077 = vadd.f32 %v4418, %v4798
    %v5078 = vadd.f32 %v4419, %v4801
    %v5079 = vadd.f32 %v4420, %v4806
    %v5080 = vadd.f32 %v4421, %v4809
    %v5081 = vadd.f32 %v4422, %v4814
    %v5082 = vadd.f32 %v4423, %v4817
    %v5083 = vadd.f32 %v4424, %v4822
    %v5084 = vadd.f32 %v4425, %v4825
    %v5085 = vadd.f32 %v4426, %v4830
    %v5086 = vadd.f32 %v4427, %v4833
    %v5087 = vadd.f32 %v4428, %v4838
    %v5088 = vadd.f32 %v4429, %v4841
    %v5089 = vadd.f32 %v4430, %v4846
    %v5090 = vadd.f32 %v4431, %v4849
    %v5091 = vadd.f32 %v4432, %v4854
    %v5092 = vadd.f32 %v4433, %v4857
    %v5093 = vadd.f32 %v4434, %v4862
    %v5094 = vadd.f32 %v4435, %v4865
    %v5095 = vadd.f32 %v4436, %v4870
    %v5096 = vadd.f32 %v4437, %v4873
    %v5097 = vadd.f32 %v4438, %v4878
    %v5098 = vadd.f32 %v4439, %v4881
    %v5099 = vadd.f32 %v4440, %v4886
    %v5100 = vadd.f32 %v4441, %v4889
    %v5101 = vadd.f32 %v4442, %v4894
    %v5102 = vadd.f32 %v4443, %v4897
    %v5103 = vadd.f32 %v4444, %v4902
    %v5104 = vadd.f32 %v4445, %v4905
    %v5105 = vadd.f32 %v4446, %v4910
    %v5106 = vadd.f32 %v4447, %v4913
    %v5107 = vadd.f32 %v4448, %v4918
    %v5108 = vadd.f32 %v4449, %v4921
    %v5109 = vadd.f32 %v4450, %v4926
    %v5110 = vadd.f32 %v4451, %v4929
    %v5111 = vadd.f32 %v4452, %v4934
    %v5112 = vadd.f32 %v4453, %v4937
    %v5113 = vadd.f32 %v4454, %v4942
    %v5114 = vadd.f32 %v4455, %v4945
    %v5115 = vadd.f32 %v4456, %v4950
    %v5116 = vadd.f32 %v4457, %v4953
    %v5117 = vadd.f32 %v4458, %v4958
    %v5118 = vadd.f32 %v4459, %v4961
    %v5119 = vadd.f32 %v4460, %v4966
    %v5120 = vadd.f32 %v4461, %v4969
    %v5121 = vadd.f32 %v4462, %v4974
    %v5122 = vadd.f32 %v4463, %v4977
    %v5123 = vadd.f32 %v4464, %v4982
    %v5124 = vadd.f32 %v4465, %v4985
    %v5125 = vadd.f32 %v4466, %v4990
    %v5126 = vadd.f32 %v4467, %v4993
    %v5127 = vadd.f32 %v4468, %v4998
    %v5128 = vadd.f32 %v4469, %v5001
    %v5129 = vadd.f32 %v4470, %v5006
    %v5130 = vadd.f32 %v4471, %v5009
    %v5131 = vadd.f32 %v4472, %v5014
    %v5132 = vadd.f32 %v4473, %v5017
    %v5133 = vadd.f32 %v4474, %v5022
    %v5134 = vadd.f32 %v4475, %v5025
    %v5135 = vadd.f32 %v4476, %v5030
    %v5136 = vadd.f32 %v4477, %v5033
    %v5137 = vadd.f32 %v4478, %v5038
    %v5138 = vadd.f32 %v4479, %v5041
    %v5139 = vadd.f32 %v4480, %v5046
    %v5140 = vadd.f32 %v4481, %v5049
    %v5141 = vadd.f32 %v4482, %v5054
    %v5142 = vadd.f32 %v4483, %v5057
    %v5143 = vadd.f32 %v4484, %v5062
    %v5144 = vld [vmem:[%s0 + $0x26] sm:$0xff]
    %v5145 = vld [vmem:[%s0 + $0x2e] sm:$0xff]
    %v5146 = vld [vmem:[%s0 + $0x36] sm:$0xff]
    %v5147 = vld [vmem:[%s0 + $0x3e] sm:$0xff]
    %v5148 = vld [vmem:[%s0 + $0x46] sm:$0xff]
    %v5149 = vld [vmem:[%s0 + $0x4e] sm:$0xff]
    %v5150 = vld [vmem:[%s0 + $0x56] sm:$0xff]
    %v5151 = vld [vmem:[%s0 + $0x5e] sm:$0xff]
    %v5152 = vld [vmem:[%s0 + $0x66] sm:$0xff]
    %v5153 = vld [vmem:[%s0 + $0x6e] sm:$0xff]
    %v5154 = vld [vmem:[%s0 + $0x76] sm:$0xff]
    %v5155 = vld [vmem:[%s0 + $0x7e] sm:$0xff]
    %v5156 = vld [vmem:[%s0 + $0x86] sm:$0xff]
    %v5157 = vld [vmem:[%s0 + $0x8e] sm:$0xff]
    %v5158 = vld [vmem:[%s0 + $0x96] sm:$0xff]
    %v5159 = vld [vmem:[%s0 + $0x9e] sm:$0xff]
    %v5160 = vld [vmem:[%s0 + $0xa6] sm:$0xff]
    %v5161 = vld [vmem:[%s0 + $0xae] sm:$0xff]
    %v5162 = vld [vmem:[%s0 + $0xb6] sm:$0xff]
    %v5163 = vld [vmem:[%s0 + $0xbe] sm:$0xff]
    %v5164 = vld [vmem:[%s0 + $0xc6] sm:$0xff]
    %v5165 = vld [vmem:[%s0 + $0xce] sm:$0xff]
    %v5166 = vld [vmem:[%s0 + $0xd6] sm:$0xff]
    %v5167 = vld [vmem:[%s0 + $0xde] sm:$0xff]
    %v5168 = vld [vmem:[%s0 + $0xe6] sm:$0xff]
    %v5169 = vld [vmem:[%s0 + $0xee] sm:$0xff]
    %v5170 = vld [vmem:[%s0 + $0xf6] sm:$0xff]
    %v5171 = vld [vmem:[%s0 + $0xfe] sm:$0xff]
    %v5172 = vld [vmem:[%s0 + $0x106] sm:$0xff]
    %v5173 = vld [vmem:[%s0 + $0x10e] sm:$0xff]
    %v5174 = vld [vmem:[%s0 + $0x116] sm:$0xff]
    %v5175 = vld [vmem:[%s0 + $0x11e] sm:$0xff]
    %v5176 = vld [vmem:[%s0 + $0x126] sm:$0xff]
    %v5177 = vld [vmem:[%s0 + $0x12e] sm:$0xff]
    %v5178 = vld [vmem:[%s0 + $0x136] sm:$0xff]
    %v5179 = vld [vmem:[%s0 + $0x13e] sm:$0xff]
    %v5180 = vld [vmem:[%s0 + $0x146] sm:$0xff]
    %v5181 = vld [vmem:[%s0 + $0x14e] sm:$0xff]
    %v5182 = vld [vmem:[%s0 + $0x156] sm:$0xff]
    %v5183 = vld [vmem:[%s0 + $0x15e] sm:$0xff]
    %v5184 = vld [vmem:[%s0 + $0x166] sm:$0xff]
    %v5185 = vld [vmem:[%s0 + $0x16e] sm:$0xff]
    %v5186 = vld [vmem:[%s0 + $0x176] sm:$0xff]
    %v5187 = vld [vmem:[%s0 + $0x17e] sm:$0xff]
    %v5188 = vld [vmem:[%s0 + $0x186] sm:$0xff]
    %v5189 = vld [vmem:[%s0 + $0x18e] sm:$0xff]
    %v5190 = vld [vmem:[%s0 + $0x196] sm:$0xff]
    %v5191 = vld [vmem:[%s0 + $0x19e] sm:$0xff]
    %v5192 = vld [vmem:[%s0 + $0x1a6] sm:$0xff]
    %v5193 = vld [vmem:[%s0 + $0x1ae] sm:$0xff]
    %v5194 = vld [vmem:[%s0 + $0x1b6] sm:$0xff]
    %v5195 = vld [vmem:[%s0 + $0x1be] sm:$0xff]
    %v5196 = vld [vmem:[%s0 + $0x1c6] sm:$0xff]
    %v5197 = vld [vmem:[%s0 + $0x1ce] sm:$0xff]
    %v5198 = vld [vmem:[%s0 + $0x1d6] sm:$0xff]
    %v5199 = vld [vmem:[%s0 + $0x1de] sm:$0xff]
    %v5200 = vld [vmem:[%s0 + $0x1e6] sm:$0xff]
    %v5201 = vld [vmem:[%s0 + $0x1ee] sm:$0xff]
    %v5202 = vld [vmem:[%s0 + $0x1f6] sm:$0xff]
    %v5203 = vld [vmem:[%s0 + $0x1fe] sm:$0xff]
    %v5204 = vld [vmem:[%s0 + $0x206] sm:$0xff]
    %v5205 = vld [vmem:[%s0 + $0x20e] sm:$0xff]
    %v5206 = vld [vmem:[%s0 + $0x216] sm:$0xff]
    %v5207 = vld [vmem:[%s0 + $0x21e] sm:$0xff]
    %v5208 = vld [vmem:[%s0 + $0x226] sm:$0xff]
    %v5209 = vld [vmem:[%s0 + $0x22e] sm:$0xff]
    %v5210 = vld [vmem:[%s0 + $0x236] sm:$0xff]
    %v5211 = vld [vmem:[%s0 + $0x23e] sm:$0xff]
    %v5212 = vld [vmem:[%s0 + $0x246] sm:$0xff]
    %v5213 = vld [vmem:[%s0 + $0x24e] sm:$0xff]
    %v5214 = vld [vmem:[%s0 + $0x256] sm:$0xff]
    %v5215 = vld [vmem:[%s0 + $0x25e] sm:$0xff]
    %v5216 = vld [vmem:[%s0 + $0x266] sm:$0xff]
    %v5217 = vld [vmem:[%s0 + $0x26e] sm:$0xff]
    %v5218 = vld [vmem:[%s0 + $0x276] sm:$0xff]
    %v5219 = vld [vmem:[%s0 + $0x27e] sm:$0xff]
    %v5220 = vld [vmem:[%s0 + $0x286] sm:$0x3]
    %v5221 = vpack.c.bf16 %v5145, %v5144
    %v5222 = vpack.c.bf16 %v5147, %v5146
    %v5223 = vpack.c.bf16 %v5149, %v5148
    %v5224 = vpack.c.bf16 %v5151, %v5150
    %v5225 = vpack.c.bf16 %v5153, %v5152
    %v5226 = vpack.c.bf16 %v5155, %v5154
    %v5227 = vpack.c.bf16 %v5157, %v5156
    %v5228 = vpack.c.bf16 %v5159, %v5158
    %v5229 = vpack.c.bf16 %v5161, %v5160
    %v5230 = vpack.c.bf16 %v5163, %v5162
    %v5231 = vpack.c.bf16 %v5165, %v5164
    %v5232 = vpack.c.bf16 %v5167, %v5166
    %v5233 = vpack.c.bf16 %v5169, %v5168
    %v5234 = vpack.c.bf16 %v5171, %v5170
    %v5235 = vpack.c.bf16 %v5173, %v5172
    %v5236 = vpack.c.bf16 %v5175, %v5174
    %v5237 = vpack.c.bf16 %v5177, %v5176
    %v5238 = vpack.c.bf16 %v5179, %v5178
    %v5239 = vpack.c.bf16 %v5181, %v5180
    %v5240 = vpack.c.bf16 %v5183, %v5182
    %v5241 = vpack.c.bf16 %v5185, %v5184
    %v5242 = vpack.c.bf16 %v5187, %v5186
    %v5243 = vpack.c.bf16 %v5189, %v5188
    %v5244 = vpack.c.bf16 %v5191, %v5190
    %v5245 = vpack.c.bf16 %v5193, %v5192
    %v5246 = vpack.c.bf16 %v5195, %v5194
    %v5247 = vpack.c.bf16 %v5197, %v5196
    %v5248 = vpack.c.bf16 %v5199, %v5198
    %v5249 = vpack.c.bf16 %v5201, %v5200
    %v5250 = vpack.c.bf16 %v5203, %v5202
    %v5251 = vpack.c.bf16 %v5205, %v5204
    %v5252 = vpack.c.bf16 %v5207, %v5206
    %v5253 = vpack.c.bf16 %v5209, %v5208
    %v5254 = vpack.c.bf16 %v5211, %v5210
    %v5255 = vpack.c.bf16 %v5213, %v5212
    %v5256 = vpack.c.bf16 %v5215, %v5214
    %v5257 = vpack.c.bf16 %v5217, %v5216
    %v5258 = vpack.c.bf16 %v5219, %v5218
    %v5259 = vpack.c.bf16 %v5220, %v5220
    %s5260 = scalar_lea.vmem %s1, 16
    %v5261 = vld [vmem:[%s5260] sm:$0x3]
    %v5263 = vsel %vm260, %v5221, 0
    %v5266 = vsel %vm260, %v5222, 0
    %v5269 = vsel %vm260, %v5223, 0
    %v5272 = vsel %vm260, %v5224, 0
    %v5275 = vsel %vm260, %v5225, 0
    %v5278 = vsel %vm260, %v5226, 0
    %v5281 = vsel %vm260, %v5227, 0
    %v5284 = vsel %vm260, %v5228, 0
    %v5287 = vsel %vm260, %v5229, 0
    %v5290 = vsel %vm260, %v5230, 0
    %v5293 = vsel %vm260, %v5231, 0
    %v5296 = vsel %vm260, %v5232, 0
    %v5299 = vsel %vm260, %v5233, 0
    %v5302 = vsel %vm260, %v5234, 0
    %v5305 = vsel %vm260, %v5235, 0
    %v5308 = vsel %vm260, %v5236, 0
    %v5311 = vsel %vm260, %v5237, 0
    %v5314 = vsel %vm260, %v5238, 0
    %v5317 = vsel %vm260, %v5239, 0
    %v5320 = vsel %vm260, %v5240, 0
    %v5323 = vsel %vm260, %v5241, 0
    %v5326 = vsel %vm260, %v5242, 0
    %v5329 = vsel %vm260, %v5243, 0
    %v5332 = vsel %vm260, %v5244, 0
    %v5335 = vsel %vm260, %v5245, 0
    %v5338 = vsel %vm260, %v5246, 0
    %v5341 = vsel %vm260, %v5247, 0
    %v5344 = vsel %vm260, %v5248, 0
    %v5347 = vsel %vm260, %v5249, 0
    %v5350 = vsel %vm260, %v5250, 0
    %v5353 = vsel %vm260, %v5251, 0
    %v5356 = vsel %vm260, %v5252, 0
    %v5359 = vsel %vm260, %v5253, 0
    %v5362 = vsel %vm260, %v5254, 0
    %v5365 = vsel %vm260, %v5255, 0
    %v5368 = vsel %vm260, %v5256, 0
    %v5371 = vsel %vm260, %v5257, 0
    %v5374 = vsel %vm260, %v5258, 0
    %v5377 = vsel %vm260, %v5259, 0
    %v5380 = vsel %vm378, %v5261, 0
    %5382 = vmatprep.subr.bf16.mxu0 0
    %5383 = vmatpush1.bf16.msra.mxu0 %v5380
    %5384 = vmatprep.subr.bf16.mxu0 0
    %5385 = vmatpush1.bf16.msra.mxu0 0
    %5386 = vmatprep.subr.bf16.mxu0 0
    %5387 = vmatpush1.bf16.msra.mxu0 0
    %5388 = vmatprep.subr.bf16.mxu0 0
    %5389 = vmatpush1.bf16.msra.mxu0 0
    %5390 = vmatprep.subr.bf16.mxu0 0
    %5391 = vmatpush1.bf16.msra.mxu0 0
    %5392 = vmatprep.subr.bf16.mxu0 0
    %5393 = vmatpush1.bf16.msra.mxu0 0
    %5394 = vmatprep.subr.bf16.mxu0 0
    %5395 = vmatpush1.bf16.msra.mxu0 0
    %5396 = vmatprep.subr.bf16.mxu0 0
    %5397 = vmatpush1.bf16.msra.mxu0 0
    %5398 = vmatprep.subr.bf16.mxu0 0
    %5399 = vmatpush1.bf16.msra.mxu0 0
    %5400 = vmatprep.subr.bf16.mxu0 0
    %5401 = vmatpush1.bf16.msra.mxu0 0
    %5402 = vmatprep.subr.bf16.mxu0 0
    %5403 = vmatpush1.bf16.msra.mxu0 0
    %5404 = vmatprep.subr.bf16.mxu0 0
    %5405 = vmatpush1.bf16.msra.mxu0 0
    %5406 = vmatprep.subr.bf16.mxu0 0
    %5407 = vmatpush1.bf16.msra.mxu0 0
    %5408 = vmatprep.subr.bf16.mxu0 0
    %5409 = vmatpush1.bf16.msra.mxu0 0
    %5410 = vmatprep.subr.bf16.mxu0 0
    %5411 = vmatpush1.bf16.msra.mxu0 0
    %5412 = vmatprep.subr.bf16.mxu0 0
    %5413 = vmatpush1.bf16.msra.mxu0 0
    %5414 = vmatprep.mubr.bf16.mxu0 0
    %5415 = vmatmul.mubr.bf16.gmra.mrb[0].mxu0 %v5263
    %v5416 = vpop.f32.mrb[0].mxu0
    %v5417 = vadd.f32 0.0, %v5416
    %v5418 = vpop.f32.mrb[0].mxu0
    %v5419 = vpop.f32.mrb[0].mxu0
    %v5420 = vadd.f32 0.0, %v5419
    %v5421 = vpop.f32.mrb[0].mxu0
    %5422 = vmatprep.mubr.bf16.mxu0 0
    %5423 = vmatmul.mubr.bf16.gmra.mrb[0].mxu0 %v5266
    %v5424 = vpop.f32.mrb[0].mxu0
    %v5425 = vadd.f32 0.0, %v5424
    %v5426 = vpop.f32.mrb[0].mxu0
    %v5427 = vpop.f32.mrb[0].mxu0
    %v5428 = vadd.f32 0.0, %v5427
    %v5429 = vpop.f32.mrb[0].mxu0
    %5430 = vmatprep.mubr.bf16.mxu0 0
    %5431 = vmatmul.mubr.bf16.gmra.mrb[0].mxu0 %v5269
    %v5432 = vpop.f32.mrb[0].mxu0
    %v5433 = vadd.f32 0.0, %v5432
    %v5434 = vpop.f32.mrb[0].mxu0
    %v5435 = vpop.f32.mrb[0].mxu0
    %v5436 = vadd.f32 0.0, %v5435
    %v5437 = vpop.f32.mrb[0].mxu0
    %5438 = vmatprep.mubr.bf16.mxu0 0
    %5439 = vmatmul.mubr.bf16.gmra.mrb[0].mxu0 %v5272
    %v5440 = vpop.f32.mrb[0].mxu0
    %v5441 = vadd.f32 0.0, %v5440
    %v5442 = vpop.f32.mrb[0].mxu0
    %v5443 = vpop.f32.mrb[0].mxu0
    %v5444 = vadd.f32 0.0, %v5443
    %v5445 = vpop.f32.mrb[0].mxu0
    %5446 = vmatprep.mubr.bf16.mxu0 0
    %5447 = vmatmul.mubr.bf16.gmra.mrb[0].mxu0 %v5275
    %v5448 = vpop.f32.mrb[0].mxu0
    %v5449 = vadd.f32 0.0, %v5448
    %v5450 = vpop.f32.mrb[0].mxu0
    %v5451 = vpop.f32.mrb[0].mxu0
    %v5452 = vadd.f32 0.0, %v5451
    %v5453 = vpop.f32.mrb[0].mxu0
    %5454 = vmatprep.mubr.bf16.mxu0 0
    %5455 = vmatmul.mubr.bf16.gmra.mrb[0].mxu0 %v5278
    %v5456 = vpop.f32.mrb[0].mxu0
    %v5457 = vadd.f32 0.0, %v5456
    %v5458 = vpop.f32.mrb[0].mxu0
    %v5459 = vpop.f32.mrb[0].mxu0
    %v5460 = vadd.f32 0.0, %v5459
    %v5461 = vpop.f32.mrb[0].mxu0
    %5462 = vmatprep.mubr.bf16.mxu0 0
    %5463 = vmatmul.mubr.bf16.gmra.mrb[0].mxu0 %v5281
    %v5464 = vpop.f32.mrb[0].mxu0
    %v5465 = vadd.f32 0.0, %v5464
    %v5466 = vpop.f32.mrb[0].mxu0
    %v5467 = vpop.f32.mrb[0].mxu0
    %v5468 = vadd.f32 0.0, %v5467
    %v5469 = vpop.f32.mrb[0].mxu0
    %5470 = vmatprep.mubr.bf16.mxu0 0
    %5471 = vmatmul.mubr.bf16.gmra.mrb[0].mxu0 %v5284
    %v5472 = vpop.f32.mrb[0].mxu0
    %v5473 = vadd.f32 0.0, %v5472
    %v5474 = vpop.f32.mrb[0].mxu0
    %v5475 = vpop.f32.mrb[0].mxu0
    %v5476 = vadd.f32 0.0, %v5475
    %v5477 = vpop.f32.mrb[0].mxu0
    %5478 = vmatprep.mubr.bf16.mxu0 0
    %5479 = vmatmul.mubr.bf16.gmra.mrb[0].mxu0 %v5287
    %v5480 = vpop.f32.mrb[0].mxu0
    %v5481 = vadd.f32 0.0, %v5480
    %v5482 = vpop.f32.mrb[0].mxu0
    %v5483 = vpop.f32.mrb[0].mxu0
    %v5484 = vadd.f32 0.0, %v5483
    %v5485 = vpop.f32.mrb[0].mxu0
    %5486 = vmatprep.mubr.bf16.mxu0 0
    %5487 = vmatmul.mubr.bf16.gmra.mrb[0].mxu0 %v5290
    %v5488 = vpop.f32.mrb[0].mxu0
    %v5489 = vadd.f32 0.0, %v5488
    %v5490 = vpop.f32.mrb[0].mxu0
    %v5491 = vpop.f32.mrb[0].mxu0
    %v5492 = vadd.f32 0.0, %v5491
    %v5493 = vpop.f32.mrb[0].mxu0
    %5494 = vmatprep.mubr.bf16.mxu0 0
    %5495 = vmatmul.mubr.bf16.gmra.mrb[0].mxu0 %v5293
    %v5496 = vpop.f32.mrb[0].mxu0
    %v5497 = vadd.f32 0.0, %v5496
    %v5498 = vpop.f32.mrb[0].mxu0
    %v5499 = vpop.f32.mrb[0].mxu0
    %v5500 = vadd.f32 0.0, %v5499
    %v5501 = vpop.f32.mrb[0].mxu0
    %5502 = vmatprep.mubr.bf16.mxu0 0
    %5503 = vmatmul.mubr.bf16.gmra.mrb[0].mxu0 %v5296
    %v5504 = vpop.f32.mrb[0].mxu0
    %v5505 = vadd.f32 0.0, %v5504
    %v5506 = vpop.f32.mrb[0].mxu0
    %v5507 = vpop.f32.mrb[0].mxu0
    %v5508 = vadd.f32 0.0, %v5507
    %v5509 = vpop.f32.mrb[0].mxu0
    %5510 = vmatprep.mubr.bf16.mxu0 0
    %5511 = vmatmul.mubr.bf16.gmra.mrb[0].mxu0 %v5299
    %v5512 = vpop.f32.mrb[0].mxu0
    %v5513 = vadd.f32 0.0, %v5512
    %v5514 = vpop.f32.mrb[0].mxu0
    %v5515 = vpop.f32.mrb[0].mxu0
    %v5516 = vadd.f32 0.0, %v5515
    %v5517 = vpop.f32.mrb[0].mxu0
    %5518 = vmatprep.mubr.bf16.mxu0 0
    %5519 = vmatmul.mubr.bf16.gmra.mrb[0].mxu0 %v5302
    %v5520 = vpop.f32.mrb[0].mxu0
    %v5521 = vadd.f32 0.0, %v5520
    %v5522 = vpop.f32.mrb[0].mxu0
    %v5523 = vpop.f32.mrb[0].mxu0
    %v5524 = vadd.f32 0.0, %v5523
    %v5525 = vpop.f32.mrb[0].mxu0
    %5526 = vmatprep.mubr.bf16.mxu0 0
    %5527 = vmatmul.mubr.bf16.gmra.mrb[0].mxu0 %v5305
    %v5528 = vpop.f32.mrb[0].mxu0
    %v5529 = vadd.f32 0.0, %v5528
    %v5530 = vpop.f32.mrb[0].mxu0
    %v5531 = vpop.f32.mrb[0].mxu0
    %v5532 = vadd.f32 0.0, %v5531
    %v5533 = vpop.f32.mrb[0].mxu0
    %5534 = vmatprep.mubr.bf16.mxu0 0
    %5535 = vmatmul.mubr.bf16.gmra.mrb[0].mxu0 %v5308
    %v5536 = vpop.f32.mrb[0].mxu0
    %v5537 = vadd.f32 0.0, %v5536
    %v5538 = vpop.f32.mrb[0].mxu0
    %v5539 = vpop.f32.mrb[0].mxu0
    %v5540 = vadd.f32 0.0, %v5539
    %v5541 = vpop.f32.mrb[0].mxu0
    %5542 = vmatprep.mubr.bf16.mxu0 0
    %5543 = vmatmul.mubr.bf16.gmra.mrb[0].mxu0 %v5311
    %v5544 = vpop.f32.mrb[0].mxu0
    %v5545 = vadd.f32 0.0, %v5544
    %v5546 = vpop.f32.mrb[0].mxu0
    %v5547 = vpop.f32.mrb[0].mxu0
    %v5548 = vadd.f32 0.0, %v5547
    %v5549 = vpop.f32.mrb[0].mxu0
    %5550 = vmatprep.mubr.bf16.mxu0 0
    %5551 = vmatmul.mubr.bf16.gmra.mrb[0].mxu0 %v5314
    %v5552 = vpop.f32.mrb[0].mxu0
    %v5553 = vadd.f32 0.0, %v5552
    %v5554 = vpop.f32.mrb[0].mxu0
    %v5555 = vpop.f32.mrb[0].mxu0
    %v5556 = vadd.f32 0.0, %v5555
    %v5557 = vpop.f32.mrb[0].mxu0
    %5558 = vmatprep.mubr.bf16.mxu0 0
    %5559 = vmatmul.mubr.bf16.gmra.mrb[0].mxu0 %v5317
    %v5560 = vpop.f32.mrb[0].mxu0
    %v5561 = vadd.f32 0.0, %v5560
    %v5562 = vpop.f32.mrb[0].mxu0
    %v5563 = vpop.f32.mrb[0].mxu0
    %v5564 = vadd.f32 0.0, %v5563
    %v5565 = vpop.f32.mrb[0].mxu0
    %5566 = vmatprep.mubr.bf16.mxu0 0
    %5567 = vmatmul.mubr.bf16.gmra.mrb[0].mxu0 %v5320
    %v5568 = vpop.f32.mrb[0].mxu0
    %v5569 = vadd.f32 0.0, %v5568
    %v5570 = vpop.f32.mrb[0].mxu0
    %v5571 = vpop.f32.mrb[0].mxu0
    %v5572 = vadd.f32 0.0, %v5571
    %v5573 = vpop.f32.mrb[0].mxu0
    %5574 = vmatprep.mubr.bf16.mxu0 0
    %5575 = vmatmul.mubr.bf16.gmra.mrb[0].mxu0 %v5323
    %v5576 = vpop.f32.mrb[0].mxu0
    %v5577 = vadd.f32 0.0, %v5576
    %v5578 = vpop.f32.mrb[0].mxu0
    %v5579 = vpop.f32.mrb[0].mxu0
    %v5580 = vadd.f32 0.0, %v5579
    %v5581 = vpop.f32.mrb[0].mxu0
    %5582 = vmatprep.mubr.bf16.mxu0 0
    %5583 = vmatmul.mubr.bf16.gmra.mrb[0].mxu0 %v5326
    %v5584 = vpop.f32.mrb[0].mxu0
    %v5585 = vadd.f32 0.0, %v5584
    %v5586 = vpop.f32.mrb[0].mxu0
    %v5587 = vpop.f32.mrb[0].mxu0
    %v5588 = vadd.f32 0.0, %v5587
    %v5589 = vpop.f32.mrb[0].mxu0
    %5590 = vmatprep.mubr.bf16.mxu0 0
    %5591 = vmatmul.mubr.bf16.gmra.mrb[0].mxu0 %v5329
    %v5592 = vpop.f32.mrb[0].mxu0
    %v5593 = vadd.f32 0.0, %v5592
    %v5594 = vpop.f32.mrb[0].mxu0
    %v5595 = vpop.f32.mrb[0].mxu0
    %v5596 = vadd.f32 0.0, %v5595
    %v5597 = vpop.f32.mrb[0].mxu0
    %5598 = vmatprep.mubr.bf16.mxu0 0
    %5599 = vmatmul.mubr.bf16.gmra.mrb[0].mxu0 %v5332
    %v5600 = vpop.f32.mrb[0].mxu0
    %v5601 = vadd.f32 0.0, %v5600
    %v5602 = vpop.f32.mrb[0].mxu0
    %v5603 = vpop.f32.mrb[0].mxu0
    %v5604 = vadd.f32 0.0, %v5603
    %v5605 = vpop.f32.mrb[0].mxu0
    %5606 = vmatprep.mubr.bf16.mxu0 0
    %5607 = vmatmul.mubr.bf16.gmra.mrb[0].mxu0 %v5335
    %v5608 = vpop.f32.mrb[0].mxu0
    %v5609 = vadd.f32 0.0, %v5608
    %v5610 = vpop.f32.mrb[0].mxu0
    %v5611 = vpop.f32.mrb[0].mxu0
    %v5612 = vadd.f32 0.0, %v5611
    %v5613 = vpop.f32.mrb[0].mxu0
    %5614 = vmatprep.mubr.bf16.mxu0 0
    %5615 = vmatmul.mubr.bf16.gmra.mrb[0].mxu0 %v5338
    %v5616 = vpop.f32.mrb[0].mxu0
    %v5617 = vadd.f32 0.0, %v5616
    %v5618 = vpop.f32.mrb[0].mxu0
    %v5619 = vpop.f32.mrb[0].mxu0
    %v5620 = vadd.f32 0.0, %v5619
    %v5621 = vpop.f32.mrb[0].mxu0
    %5622 = vmatprep.mubr.bf16.mxu0 0
    %5623 = vmatmul.mubr.bf16.gmra.mrb[0].mxu0 %v5341
    %v5624 = vpop.f32.mrb[0].mxu0
    %v5625 = vadd.f32 0.0, %v5624
    %v5626 = vpop.f32.mrb[0].mxu0
    %v5627 = vpop.f32.mrb[0].mxu0
    %v5628 = vadd.f32 0.0, %v5627
    %v5629 = vpop.f32.mrb[0].mxu0
    %5630 = vmatprep.mubr.bf16.mxu0 0
    %5631 = vmatmul.mubr.bf16.gmra.mrb[0].mxu0 %v5344
    %v5632 = vpop.f32.mrb[0].mxu0
    %v5633 = vadd.f32 0.0, %v5632
    %v5634 = vpop.f32.mrb[0].mxu0
    %v5635 = vpop.f32.mrb[0].mxu0
    %v5636 = vadd.f32 0.0, %v5635
    %v5637 = vpop.f32.mrb[0].mxu0
    %5638 = vmatprep.mubr.bf16.mxu0 0
    %5639 = vmatmul.mubr.bf16.gmra.mrb[0].mxu0 %v5347
    %v5640 = vpop.f32.mrb[0].mxu0
    %v5641 = vadd.f32 0.0, %v5640
    %v5642 = vpop.f32.mrb[0].mxu0
    %v5643 = vpop.f32.mrb[0].mxu0
    %v5644 = vadd.f32 0.0, %v5643
    %v5645 = vpop.f32.mrb[0].mxu0
    %5646 = vmatprep.mubr.bf16.mxu0 0
    %5647 = vmatmul.mubr.bf16.gmra.mrb[0].mxu0 %v5350
    %v5648 = vpop.f32.mrb[0].mxu0
    %v5649 = vadd.f32 0.0, %v5648
    %v5650 = vpop.f32.mrb[0].mxu0
    %v5651 = vpop.f32.mrb[0].mxu0
    %v5652 = vadd.f32 0.0, %v5651
    %v5653 = vpop.f32.mrb[0].mxu0
    %5654 = vmatprep.mubr.bf16.mxu0 0
    %5655 = vmatmul.mubr.bf16.gmra.mrb[0].mxu0 %v5353
    %v5656 = vpop.f32.mrb[0].mxu0
    %v5657 = vadd.f32 0.0, %v5656
    %v5658 = vpop.f32.mrb[0].mxu0
    %v5659 = vpop.f32.mrb[0].mxu0
    %v5660 = vadd.f32 0.0, %v5659
    %v5661 = vpop.f32.mrb[0].mxu0
    %5662 = vmatprep.mubr.bf16.mxu0 0
    %5663 = vmatmul.mubr.bf16.gmra.mrb[0].mxu0 %v5356
    %v5664 = vpop.f32.mrb[0].mxu0
    %v5665 = vadd.f32 0.0, %v5664
    %v5666 = vpop.f32.mrb[0].mxu0
    %v5667 = vpop.f32.mrb[0].mxu0
    %v5668 = vadd.f32 0.0, %v5667
    %v5669 = vpop.f32.mrb[0].mxu0
    %5670 = vmatprep.mubr.bf16.mxu0 0
    %5671 = vmatmul.mubr.bf16.gmra.mrb[0].mxu0 %v5359
    %v5672 = vpop.f32.mrb[0].mxu0
    %v5673 = vadd.f32 0.0, %v5672
    %v5674 = vpop.f32.mrb[0].mxu0
    %v5675 = vpop.f32.mrb[0].mxu0
    %v5676 = vadd.f32 0.0, %v5675
    %v5677 = vpop.f32.mrb[0].mxu0
    %5678 = vmatprep.mubr.bf16.mxu0 0
    %5679 = vmatmul.mubr.bf16.gmra.mrb[0].mxu0 %v5362
    %v5680 = vpop.f32.mrb[0].mxu0
    %v5681 = vadd.f32 0.0, %v5680
    %v5682 = vpop.f32.mrb[0].mxu0
    %v5683 = vpop.f32.mrb[0].mxu0
    %v5684 = vadd.f32 0.0, %v5683
    %v5685 = vpop.f32.mrb[0].mxu0
    %5686 = vmatprep.mubr.bf16.mxu0 0
    %5687 = vmatmul.mubr.bf16.gmra.mrb[0].mxu0 %v5365
    %v5688 = vpop.f32.mrb[0].mxu0
    %v5689 = vadd.f32 0.0, %v5688
    %v5690 = vpop.f32.mrb[0].mxu0
    %v5691 = vpop.f32.mrb[0].mxu0
    %v5692 = vadd.f32 0.0, %v5691
    %v5693 = vpop.f32.mrb[0].mxu0
    %5694 = vmatprep.mubr.bf16.mxu0 0
    %5695 = vmatmul.mubr.bf16.gmra.mrb[0].mxu0 %v5368
    %v5696 = vpop.f32.mrb[0].mxu0
    %v5697 = vadd.f32 0.0, %v5696
    %v5698 = vpop.f32.mrb[0].mxu0
    %v5699 = vpop.f32.mrb[0].mxu0
    %v5700 = vadd.f32 0.0, %v5699
    %v5701 = vpop.f32.mrb[0].mxu0
    %5702 = vmatprep.mubr.bf16.mxu0 0
    %5703 = vmatmul.mubr.bf16.gmra.mrb[0].mxu0 %v5371
    %v5704 = vpop.f32.mrb[0].mxu0
    %v5705 = vadd.f32 0.0, %v5704
    %v5706 = vpop.f32.mrb[0].mxu0
    %v5707 = vpop.f32.mrb[0].mxu0
    %v5708 = vadd.f32 0.0, %v5707
    %v5709 = vpop.f32.mrb[0].mxu0
    %5710 = vmatprep.mubr.bf16.mxu0 0
    %5711 = vmatmul.mubr.bf16.gmra.mrb[0].mxu0 %v5374
    %v5712 = vpop.f32.mrb[0].mxu0
    %v5713 = vadd.f32 0.0, %v5712
    %v5714 = vpop.f32.mrb[0].mxu0
    %v5715 = vpop.f32.mrb[0].mxu0
    %v5716 = vadd.f32 0.0, %v5715
    %v5717 = vpop.f32.mrb[0].mxu0
    %5718 = vmatprep.mubr.bf16.mxu0 0
    %5719 = vmatmul.mubr.bf16.gmra.mrb[0].mxu0 %v5377
    %v5720 = vpop.f32.mrb[0].mxu0
    %v5721 = vadd.f32 0.0, %v5720
    %v5722 = vpop.f32.mrb[0].mxu0
    %v5723 = vpop.f32.mrb[0].mxu0
    %v5724 = vpop.f32.mrb[0].mxu0
    %5725 = vdwg.mxu0
    %v5726 = vadd.f32 %v5067, %v5417
    %v5727 = vadd.f32 %v5068, %v5420
    %v5728 = vadd.f32 %v5069, %v5425
    %v5729 = vadd.f32 %v5070, %v5428
    %v5730 = vadd.f32 %v5071, %v5433
    %v5731 = vadd.f32 %v5072, %v5436
    %v5732 = vadd.f32 %v5073, %v5441
    %v5733 = vadd.f32 %v5074, %v5444
    %v5734 = vadd.f32 %v5075, %v5449
    %v5735 = vadd.f32 %v5076, %v5452
    %v5736 = vadd.f32 %v5077, %v5457
    %v5737 = vadd.f32 %v5078, %v5460
    %v5738 = vadd.f32 %v5079, %v5465
    %v5739 = vadd.f32 %v5080, %v5468
    %v5740 = vadd.f32 %v5081, %v5473
    %v5741 = vadd.f32 %v5082, %v5476
    %v5742 = vadd.f32 %v5083, %v5481
    %v5743 = vadd.f32 %v5084, %v5484
    %v5744 = vadd.f32 %v5085, %v5489
    %v5745 = vadd.f32 %v5086, %v5492
    %v5746 = vadd.f32 %v5087, %v5497
    %v5747 = vadd.f32 %v5088, %v5500
    %v5748 = vadd.f32 %v5089, %v5505
    %v5749 = vadd.f32 %v5090, %v5508
    %v5750 = vadd.f32 %v5091, %v5513
    %v5751 = vadd.f32 %v5092, %v5516
    %v5752 = vadd.f32 %v5093, %v5521
    %v5753 = vadd.f32 %v5094, %v5524
    %v5754 = vadd.f32 %v5095, %v5529
    %v5755 = vadd.f32 %v5096, %v5532
    %v5756 = vadd.f32 %v5097, %v5537
    %v5757 = vadd.f32 %v5098, %v5540
    %v5758 = vadd.f32 %v5099, %v5545
    %v5759 = vadd.f32 %v5100, %v5548
    %v5760 = vadd.f32 %v5101, %v5553
    %v5761 = vadd.f32 %v5102, %v5556
    %v5762 = vadd.f32 %v5103, %v5561
    %v5763 = vadd.f32 %v5104, %v5564
    %v5764 = vadd.f32 %v5105, %v5569
    %v5765 = vadd.f32 %v5106, %v5572
    %v5766 = vadd.f32 %v5107, %v5577
    %v5767 = vadd.f32 %v5108, %v5580
    %v5768 = vadd.f32 %v5109, %v5585
    %v5769 = vadd.f32 %v5110, %v5588
    %v5770 = vadd.f32 %v5111, %v5593
    %v5771 = vadd.f32 %v5112, %v5596
    %v5772 = vadd.f32 %v5113, %v5601
    %v5773 = vadd.f32 %v5114, %v5604
    %v5774 = vadd.f32 %v5115, %v5609
    %v5775 = vadd.f32 %v5116, %v5612
    %v5776 = vadd.f32 %v5117, %v5617
    %v5777 = vadd.f32 %v5118, %v5620
    %v5778 = vadd.f32 %v5119, %v5625
    %v5779 = vadd.f32 %v5120, %v5628
    %v5780 = vadd.f32 %v5121, %v5633
    %v5781 = vadd.f32 %v5122, %v5636
    %v5782 = vadd.f32 %v5123, %v5641
    %v5783 = vadd.f32 %v5124, %v5644
    %v5784 = vadd.f32 %v5125, %v5649
    %v5785 = vadd.f32 %v5126, %v5652
    %v5786 = vadd.f32 %v5127, %v5657
    %v5787 = vadd.f32 %v5128, %v5660
    %v5788 = vadd.f32 %v5129, %v5665
    %v5789 = vadd.f32 %v5130, %v5668
    %v5790 = vadd.f32 %v5131, %v5673
    %v5791 = vadd.f32 %v5132, %v5676
    %v5792 = vadd.f32 %v5133, %v5681
    %v5793 = vadd.f32 %v5134, %v5684
    %v5794 = vadd.f32 %v5135, %v5689
    %v5795 = vadd.f32 %v5136, %v5692
    %v5796 = vadd.f32 %v5137, %v5697
    %v5797 = vadd.f32 %v5138, %v5700
    %v5798 = vadd.f32 %v5139, %v5705
    %v5799 = vadd.f32 %v5140, %v5708
    %v5800 = vadd.f32 %v5141, %v5713
    %v5801 = vadd.f32 %v5142, %v5716
    %v5802 = vadd.f32 %v5143, %v5721
    %v5803 = vld [vmem:[%s2] sm:$0x1]
    %v5805 = vlaneseq
    %v5806 = vshrl.u32 %v5805, 7
    %v5807 = vsub.s32 0, %v5806
    %v5808 = vrot.slane %v5803, %v5807
    %v5810 = vadd.f32 %v5726, %v5808
    %v5811 = vadd.f32 %v5727, %v5808
    %v5812 = vadd.f32 %v5728, %v5808
    %v5813 = vadd.f32 %v5729, %v5808
    %v5814 = vadd.f32 %v5730, %v5808
    %v5815 = vadd.f32 %v5731, %v5808
    %v5816 = vadd.f32 %v5732, %v5808
    %v5817 = vadd.f32 %v5733, %v5808
    %v5818 = vadd.f32 %v5734, %v5808
    %v5819 = vadd.f32 %v5735, %v5808
    %v5820 = vadd.f32 %v5736, %v5808
    %v5821 = vadd.f32 %v5737, %v5808
    %v5822 = vadd.f32 %v5738, %v5808
    %v5823 = vadd.f32 %v5739, %v5808
    %v5824 = vadd.f32 %v5740, %v5808
    %v5825 = vadd.f32 %v5741, %v5808
    %v5826 = vadd.f32 %v5742, %v5808
    %v5827 = vadd.f32 %v5743, %v5808
    %v5828 = vadd.f32 %v5744, %v5808
    %v5829 = vadd.f32 %v5745, %v5808
    %v5830 = vadd.f32 %v5746, %v5808
    %v5831 = vadd.f32 %v5747, %v5808
    %v5832 = vadd.f32 %v5748, %v5808
    %v5833 = vadd.f32 %v5749, %v5808
    %v5834 = vadd.f32 %v5750, %v5808
    %v5835 = vadd.f32 %v5751, %v5808
    %v5836 = vadd.f32 %v5752, %v5808
    %v5837 = vadd.f32 %v5753, %v5808
    %v5838 = vadd.f32 %v5754, %v5808
    %v5839 = vadd.f32 %v5755, %v5808
    %v5840 = vadd.f32 %v5756, %v5808
    %v5841 = vadd.f32 %v5757, %v5808
    %v5842 = vadd.f32 %v5758, %v5808
    %v5843 = vadd.f32 %v5759, %v5808
    %v5844 = vadd.f32 %v5760, %v5808
    %v5845 = vadd.f32 %v5761, %v5808
    %v5846 = vadd.f32 %v5762, %v5808
    %v5847 = vadd.f32 %v5763, %v5808
    %v5848 = vadd.f32 %v5764, %v5808
    %v5849 = vadd.f32 %v5765, %v5808
    %v5850 = vadd.f32 %v5766, %v5808
    %v5851 = vadd.f32 %v5767, %v5808
    %v5852 = vadd.f32 %v5768, %v5808
    %v5853 = vadd.f32 %v5769, %v5808
    %v5854 = vadd.f32 %v5770, %v5808
    %v5855 = vadd.f32 %v5771, %v5808
    %v5856 = vadd.f32 %v5772, %v5808
    %v5857 = vadd.f32 %v5773, %v5808
    %v5858 = vadd.f32 %v5774, %v5808
    %v5859 = vadd.f32 %v5775, %v5808
    %v5860 = vadd.f32 %v5776, %v5808
    %v5861 = vadd.f32 %v5777, %v5808
    %v5862 = vadd.f32 %v5778, %v5808
    %v5863 = vadd.f32 %v5779, %v5808
    %v5864 = vadd.f32 %v5780, %v5808
    %v5865 = vadd.f32 %v5781, %v5808
    %v5866 = vadd.f32 %v5782, %v5808
    %v5867 = vadd.f32 %v5783, %v5808
    %v5868 = vadd.f32 %v5784, %v5808
    %v5869 = vadd.f32 %v5785, %v5808
    %v5870 = vadd.f32 %v5786, %v5808
    %v5871 = vadd.f32 %v5787, %v5808
    %v5872 = vadd.f32 %v5788, %v5808
    %v5873 = vadd.f32 %v5789, %v5808
    %v5874 = vadd.f32 %v5790, %v5808
    %v5875 = vadd.f32 %v5791, %v5808
    %v5876 = vadd.f32 %v5792, %v5808
    %v5877 = vadd.f32 %v5793, %v5808
    %v5878 = vadd.f32 %v5794, %v5808
    %v5879 = vadd.f32 %v5795, %v5808
    %v5880 = vadd.f32 %v5796, %v5808
    %v5881 = vadd.f32 %v5797, %v5808
    %v5882 = vadd.f32 %v5798, %v5808
    %v5883 = vadd.f32 %v5799, %v5808
    %v5884 = vadd.f32 %v5800, %v5808
    %v5885 = vadd.f32 %v5801, %v5808
    %v5886 = vadd.f32 %v5802, %v5808
    %v5887 = vmax.f32 %v5810, 0.0
    %v5888 = vmax.f32 %v5811, 0.0
    %v5889 = vmax.f32 %v5812, 0.0
    %v5890 = vmax.f32 %v5813, 0.0
    %v5891 = vmax.f32 %v5814, 0.0
    %v5892 = vmax.f32 %v5815, 0.0
    %v5893 = vmax.f32 %v5816, 0.0
    %v5894 = vmax.f32 %v5817, 0.0
    %v5895 = vmax.f32 %v5818, 0.0
    %v5896 = vmax.f32 %v5819, 0.0
    %v5897 = vmax.f32 %v5820, 0.0
    %v5898 = vmax.f32 %v5821, 0.0
    %v5899 = vmax.f32 %v5822, 0.0
    %v5900 = vmax.f32 %v5823, 0.0
    %v5901 = vmax.f32 %v5824, 0.0
    %v5902 = vmax.f32 %v5825, 0.0
    %v5903 = vmax.f32 %v5826, 0.0
    %v5904 = vmax.f32 %v5827, 0.0
    %v5905 = vmax.f32 %v5828, 0.0
    %v5906 = vmax.f32 %v5829, 0.0
    %v5907 = vmax.f32 %v5830, 0.0
    %v5908 = vmax.f32 %v5831, 0.0
    %v5909 = vmax.f32 %v5832, 0.0
    %v5910 = vmax.f32 %v5833, 0.0
    %v5911 = vmax.f32 %v5834, 0.0
    %v5912 = vmax.f32 %v5835, 0.0
    %v5913 = vmax.f32 %v5836, 0.0
    %v5914 = vmax.f32 %v5837, 0.0
    %v5915 = vmax.f32 %v5838, 0.0
    %v5916 = vmax.f32 %v5839, 0.0
    %v5917 = vmax.f32 %v5840, 0.0
    %v5918 = vmax.f32 %v5841, 0.0
    %v5919 = vmax.f32 %v5842, 0.0
    %v5920 = vmax.f32 %v5843, 0.0
    %v5921 = vmax.f32 %v5844, 0.0
    %v5922 = vmax.f32 %v5845, 0.0
    %v5923 = vmax.f32 %v5846, 0.0
    %v5924 = vmax.f32 %v5847, 0.0
    %v5925 = vmax.f32 %v5848, 0.0
    %v5926 = vmax.f32 %v5849, 0.0
    %v5927 = vmax.f32 %v5850, 0.0
    %v5928 = vmax.f32 %v5851, 0.0
    %v5929 = vmax.f32 %v5852, 0.0
    %v5930 = vmax.f32 %v5853, 0.0
    %v5931 = vmax.f32 %v5854, 0.0
    %v5932 = vmax.f32 %v5855, 0.0
    %v5933 = vmax.f32 %v5856, 0.0
    %v5934 = vmax.f32 %v5857, 0.0
    %v5935 = vmax.f32 %v5858, 0.0
    %v5936 = vmax.f32 %v5859, 0.0
    %v5937 = vmax.f32 %v5860, 0.0
    %v5938 = vmax.f32 %v5861, 0.0
    %v5939 = vmax.f32 %v5862, 0.0
    %v5940 = vmax.f32 %v5863, 0.0
    %v5941 = vmax.f32 %v5864, 0.0
    %v5942 = vmax.f32 %v5865, 0.0
    %v5943 = vmax.f32 %v5866, 0.0
    %v5944 = vmax.f32 %v5867, 0.0
    %v5945 = vmax.f32 %v5868, 0.0
    %v5946 = vmax.f32 %v5869, 0.0
    %v5947 = vmax.f32 %v5870, 0.0
    %v5948 = vmax.f32 %v5871, 0.0
    %v5949 = vmax.f32 %v5872, 0.0
    %v5950 = vmax.f32 %v5873, 0.0
    %v5951 = vmax.f32 %v5874, 0.0
    %v5952 = vmax.f32 %v5875, 0.0
    %v5953 = vmax.f32 %v5876, 0.0
    %v5954 = vmax.f32 %v5877, 0.0
    %v5955 = vmax.f32 %v5878, 0.0
    %v5956 = vmax.f32 %v5879, 0.0
    %v5957 = vmax.f32 %v5880, 0.0
    %v5958 = vmax.f32 %v5881, 0.0
    %v5959 = vmax.f32 %v5882, 0.0
    %v5960 = vmax.f32 %v5883, 0.0
    %v5961 = vmax.f32 %v5884, 0.0
    %v5962 = vmax.f32 %v5885, 0.0
    %v5963 = vmax.f32 %v5886, 0.0
    %v5964 = vld [vmem:[%s3] sm:$0xff]
    %v5965 = vld [vmem:[%s3 + $0x8] sm:$0x3]
    %v5968 = vcombine.high %v5964, %v5964
    %v5970 = vunpack.c.l.s4 1983009808
    %v5971 = vunpack.c.0.s8 %v5970
    %v5972 = vlaneseq
    %v5973 = vshrl.u32 %v5972, 7
    %v5974 = vsub.s32 %v5971, %v5973
    %v5975 = vrot.slane %v5964, %v5974
    %v5977 = vunpack.c.l.s4 1983009808
    %v5978 = vunpack.c.0.s8 %v5977
    %v5979 = vlaneseq
    %v5980 = vshrl.u32 %v5979, 7
    %v5981 = vsub.s32 %v5978, %v5980
    %v5982 = vrot.slane %v5968, %v5981
    %v5983 = vcombine.high %v5975, %v5975
    %v5984 = vcombine.high %v5982, %v5982
    %v5986 = vunpack.c.l.s4 1983009808
    %v5987 = vunpack.c.0.s8 %v5986
    %v5988 = vlaneseq
    %v5989 = vshrl.u32 %v5988, 7
    %v5990 = vsub.s32 %v5987, %v5989
    %v5991 = vrot.slane %v5965, %v5990
    %vm5996 = vcmask 801792
    %v5997 = vsel %vm5996, %v5991, 0
    %v6000 = vsel %vm378, %v5963, 0
    %6002 = vmatprep.subr.mxu0 0.0
    %6003 = vmatpush1.msra.mxu0 %v5887
    %6004 = vmatprep.subr.mxu0 0.0
    %6005 = vmatpush1.msra.mxu0 %v5888
    %6006 = vmatprep.subr.mxu0 0.0
    %6007 = vmatpush1.msra.mxu0 %v5889
    %6008 = vmatprep.subr.mxu0 0.0
    %6009 = vmatpush1.msra.mxu0 %v5890
    %6010 = vmatprep.subr.mxu0 0.0
    %6011 = vmatpush1.msra.mxu0 %v5891
    %6012 = vmatprep.subr.mxu0 0.0
    %6013 = vmatpush1.msra.mxu0 %v5892
    %6014 = vmatprep.subr.mxu0 0.0
    %6015 = vmatpush1.msra.mxu0 %v5893
    %6016 = vmatprep.subr.mxu0 0.0
    %6017 = vmatpush1.msra.mxu0 %v5894
    %6018 = vmatprep.subr.mxu0 0.0
    %6019 = vmatpush1.msra.mxu0 %v5895
    %6020 = vmatprep.subr.mxu0 0.0
    %6021 = vmatpush1.msra.mxu0 %v5896
    %6022 = vmatprep.subr.mxu0 0.0
    %6023 = vmatpush1.msra.mxu0 %v5897
    %6024 = vmatprep.subr.mxu0 0.0
    %6025 = vmatpush1.msra.mxu0 %v5898
    %6026 = vmatprep.subr.mxu0 0.0
    %6027 = vmatpush1.msra.mxu0 %v5899
    %6028 = vmatprep.subr.mxu0 0.0
    %6029 = vmatpush1.msra.mxu0 %v5900
    %6030 = vmatprep.subr.mxu0 0.0
    %6031 = vmatpush1.msra.mxu0 %v5901
    %6032 = vmatprep.subr.mxu0 0.0
    %6033 = vmatpush1.msra.mxu0 %v5902
    %6034 = vmatprep.subr.mxu0 0.0
    %6035 = vmatpush1.msra.mxu0 %v5903
    %6036 = vmatprep.subr.mxu0 0.0
    %6037 = vmatpush1.msra.mxu0 %v5904
    %6038 = vmatprep.subr.mxu0 0.0
    %6039 = vmatpush1.msra.mxu0 %v5905
    %6040 = vmatprep.subr.mxu0 0.0
    %6041 = vmatpush1.msra.mxu0 %v5906
    %6042 = vmatprep.subr.mxu0 0.0
    %6043 = vmatpush1.msra.mxu0 %v5907
    %6044 = vmatprep.subr.mxu0 0.0
    %6045 = vmatpush1.msra.mxu0 %v5908
    %6046 = vmatprep.subr.mxu0 0.0
    %6047 = vmatpush1.msra.mxu0 %v5909
    %6048 = vmatprep.subr.mxu0 0.0
    %6049 = vmatpush1.msra.mxu0 %v5910
    %6050 = vmatprep.subr.mxu0 0.0
    %6051 = vmatpush1.msra.mxu0 %v5911
    %6052 = vmatprep.subr.mxu0 0.0
    %6053 = vmatpush1.msra.mxu0 %v5912
    %6054 = vmatprep.subr.mxu0 0.0
    %6055 = vmatpush1.msra.mxu0 %v5913
    %6056 = vmatprep.subr.mxu0 0.0
    %6057 = vmatpush1.msra.mxu0 %v5914
    %6058 = vmatprep.subr.mxu0 0.0
    %6059 = vmatpush1.msra.mxu0 %v5915
    %6060 = vmatprep.subr.mxu0 0.0
    %6061 = vmatpush1.msra.mxu0 %v5916
    %6062 = vmatprep.subr.mxu0 0.0
    %6063 = vmatpush1.msra.mxu0 %v5917
    %6064 = vmatprep.subr.mxu0 0.0
    %6065 = vmatpush1.msra.mxu0 %v5918
    %6066 = vmatprep.mubr.f32.mxu0 %v5983
    %6067 = vmatmul.mubr.f32.gmra.mrb[0].mxu0 %v5975
    %v6068 = vpop.f32.mrb[0].mxu0
    %v6069 = vadd.f32 0.0, %v6068
    %v6070 = vpop.f32.mrb[0].mxu0
    %6071 = vdwg.mxu0
    %6072 = vmatprep.subr.mxu0 0.0
    %6073 = vmatpush1.msra.mxu0 %v5919
    %6074 = vmatprep.subr.mxu0 0.0
    %6075 = vmatpush1.msra.mxu0 %v5920
    %6076 = vmatprep.subr.mxu0 0.0
    %6077 = vmatpush1.msra.mxu0 %v5921
    %6078 = vmatprep.subr.mxu0 0.0
    %6079 = vmatpush1.msra.mxu0 %v5922
    %6080 = vmatprep.subr.mxu0 0.0
    %6081 = vmatpush1.msra.mxu0 %v5923
    %6082 = vmatprep.subr.mxu0 0.0
    %6083 = vmatpush1.msra.mxu0 %v5924
    %6084 = vmatprep.subr.mxu0 0.0
    %6085 = vmatpush1.msra.mxu0 %v5925
    %6086 = vmatprep.subr.mxu0 0.0
    %6087 = vmatpush1.msra.mxu0 %v5926
    %6088 = vmatprep.subr.mxu0 0.0
    %6089 = vmatpush1.msra.mxu0 %v5927
    %6090 = vmatprep.subr.mxu0 0.0
    %6091 = vmatpush1.msra.mxu0 %v5928
    %6092 = vmatprep.subr.mxu0 0.0
    %6093 = vmatpush1.msra.mxu0 %v5929
    %6094 = vmatprep.subr.mxu0 0.0
    %6095 = vmatpush1.msra.mxu0 %v5930
    %6096 = vmatprep.subr.mxu0 0.0
    %6097 = vmatpush1.msra.mxu0 %v5931
    %6098 = vmatprep.subr.mxu0 0.0
    %6099 = vmatpush1.msra.mxu0 %v5932
    %6100 = vmatprep.subr.mxu0 0.0
    %6101 = vmatpush1.msra.mxu0 %v5933
    %6102 = vmatprep.subr.mxu0 0.0
    %6103 = vmatpush1.msra.mxu0 %v5934
    %6104 = vmatprep.subr.mxu0 0.0
    %6105 = vmatpush1.msra.mxu0 %v5935
    %6106 = vmatprep.subr.mxu0 0.0
    %6107 = vmatpush1.msra.mxu0 %v5936
    %6108 = vmatprep.subr.mxu0 0.0
    %6109 = vmatpush1.msra.mxu0 %v5937
    %6110 = vmatprep.subr.mxu0 0.0
    %6111 = vmatpush1.msra.mxu0 %v5938
    %6112 = vmatprep.subr.mxu0 0.0
    %6113 = vmatpush1.msra.mxu0 %v5939
    %6114 = vmatprep.subr.mxu0 0.0
    %6115 = vmatpush1.msra.mxu0 %v5940
    %6116 = vmatprep.subr.mxu0 0.0
    %6117 = vmatpush1.msra.mxu0 %v5941
    %6118 = vmatprep.subr.mxu0 0.0
    %6119 = vmatpush1.msra.mxu0 %v5942
    %6120 = vmatprep.subr.mxu0 0.0
    %6121 = vmatpush1.msra.mxu0 %v5943
    %6122 = vmatprep.subr.mxu0 0.0
    %6123 = vmatpush1.msra.mxu0 %v5944
    %6124 = vmatprep.subr.mxu0 0.0
    %6125 = vmatpush1.msra.mxu0 %v5945
    %6126 = vmatprep.subr.mxu0 0.0
    %6127 = vmatpush1.msra.mxu0 %v5946
    %6128 = vmatprep.subr.mxu0 0.0
    %6129 = vmatpush1.msra.mxu0 %v5947
    %6130 = vmatprep.subr.mxu0 0.0
    %6131 = vmatpush1.msra.mxu0 %v5948
    %6132 = vmatprep.subr.mxu0 0.0
    %6133 = vmatpush1.msra.mxu0 %v5949
    %6134 = vmatprep.subr.mxu0 0.0
    %6135 = vmatpush1.msra.mxu0 %v5950
    %6136 = vmatprep.mubr.f32.mxu0 %v5984
    %6137 = vmatmul.mubr.f32.gmra.mrb[0].mxu0 %v5982
    %v6138 = vpop.f32.mrb[0].mxu0
    %v6139 = vadd.f32 %v6069, %v6138
    %v6140 = vpop.f32.mrb[0].mxu0
    %6141 = vdwg.mxu0
    %6142 = vmatprep.subr.mxu0 0.0
    %6143 = vmatpush1.msra.mxu0 %v5951
    %6144 = vmatprep.subr.mxu0 0.0
    %6145 = vmatpush1.msra.mxu0 %v5952
    %6146 = vmatprep.subr.mxu0 0.0
    %6147 = vmatpush1.msra.mxu0 %v5953
    %6148 = vmatprep.subr.mxu0 0.0
    %6149 = vmatpush1.msra.mxu0 %v5954
    %6150 = vmatprep.subr.mxu0 0.0
    %6151 = vmatpush1.msra.mxu0 %v5955
    %6152 = vmatprep.subr.mxu0 0.0
    %6153 = vmatpush1.msra.mxu0 %v5956
    %6154 = vmatprep.subr.mxu0 0.0
    %6155 = vmatpush1.msra.mxu0 %v5957
    %6156 = vmatprep.subr.mxu0 0.0
    %6157 = vmatpush1.msra.mxu0 %v5958
    %6158 = vmatprep.subr.mxu0 0.0
    %6159 = vmatpush1.msra.mxu0 %v5959
    %6160 = vmatprep.subr.mxu0 0.0
    %6161 = vmatpush1.msra.mxu0 %v5960
    %6162 = vmatprep.subr.mxu0 0.0
    %6163 = vmatpush1.msra.mxu0 %v5961
    %6164 = vmatprep.subr.mxu0 0.0
    %6165 = vmatpush1.msra.mxu0 %v5962
    %6166 = vmatprep.subr.mxu0 0.0
    %6167 = vmatpush1.msra.mxu0 %v6000
    %6168 = vmatprep.subr.mxu0 0.0
    %6169 = vmatpush1.msra.mxu0 0.0
    %6170 = vmatprep.subr.mxu0 0.0
    %6171 = vmatpush1.msra.mxu0 0.0
    %6172 = vmatprep.subr.mxu0 0.0
    %6173 = vmatpush1.msra.mxu0 0.0
    %6174 = vmatprep.subr.mxu0 0.0
    %6175 = vmatpush1.msra.mxu0 0.0
    %6176 = vmatprep.subr.mxu0 0.0
    %6177 = vmatpush1.msra.mxu0 0.0
    %6178 = vmatprep.subr.mxu0 0.0
    %6179 = vmatpush1.msra.mxu0 0.0
    %6180 = vmatprep.subr.mxu0 0.0
    %6181 = vmatpush1.msra.mxu0 0.0
    %6182 = vmatprep.subr.mxu0 0.0
    %6183 = vmatpush1.msra.mxu0 0.0
    %6184 = vmatprep.subr.mxu0 0.0
    %6185 = vmatpush1.msra.mxu0 0.0
    %6186 = vmatprep.subr.mxu0 0.0
    %6187 = vmatpush1.msra.mxu0 0.0
    %6188 = vmatprep.subr.mxu0 0.0
    %6189 = vmatpush1.msra.mxu0 0.0
    %6190 = vmatprep.subr.mxu0 0.0
    %6191 = vmatpush1.msra.mxu0 0.0
    %6192 = vmatprep.subr.mxu0 0.0
    %6193 = vmatpush1.msra.mxu0 0.0
    %6194 = vmatprep.subr.mxu0 0.0
    %6195 = vmatpush1.msra.mxu0 0.0
    %6196 = vmatprep.subr.mxu0 0.0
    %6197 = vmatpush1.msra.mxu0 0.0
    %6198 = vmatprep.subr.mxu0 0.0
    %6199 = vmatpush1.msra.mxu0 0.0
    %6200 = vmatprep.subr.mxu0 0.0
    %6201 = vmatpush1.msra.mxu0 0.0
    %6202 = vmatprep.subr.mxu0 0.0
    %6203 = vmatpush1.msra.mxu0 0.0
    %6204 = vmatprep.subr.mxu0 0.0
    %6205 = vmatpush1.msra.mxu0 0.0
    %6206 = vmatprep.mubr.f32.mxu0 0.0
    %6207 = vmatmul.mubr.f32.gmra.mrb[0].mxu0 %v5997
    %v6208 = vpop.f32.mrb[0].mxu0
    %v6209 = vadd.f32 %v6139, %v6208
    %v6210 = vpop.f32.mrb[0].mxu0
    %6211 = vdwg.mxu0
    %v6212 = vpack.c.bf16 %v6209, %v6209
    %v6213 = vld [vmem:[%s4] sm:$0xf]
    %v6214 = vld [vmem:[%s4 + $0x4] sm:$0xf]
    %v6215 = vld [vmem:[%s4 + $0x8] sm:$0xf]
    %v6216 = vld [vmem:[%s4 + $0xc] sm:$0xf]
    %v6217 = vld [vmem:[%s4 + $0x10] sm:$0xf]
    %v6218 = vld [vmem:[%s4 + $0x14] sm:$0xf]
    %v6219 = vld [vmem:[%s4 + $0x18] sm:$0xf]
    %v6220 = vld [vmem:[%s4 + $0x1c] sm:$0xf]
    %v6221 = vld [vmem:[%s4 + $0x20] sm:$0xf]
    %v6222 = vld [vmem:[%s4 + $0x24] sm:$0xf]
    %v6223 = vld [vmem:[%s4 + $0x28] sm:$0xf]
    %v6224 = vld [vmem:[%s4 + $0x2c] sm:$0xf]
    %v6225 = vld [vmem:[%s4 + $0x30] sm:$0xf]
    %v6226 = vld [vmem:[%s4 + $0x34] sm:$0xf]
    %v6227 = vld [vmem:[%s4 + $0x38] sm:$0xf]
    %v6228 = vld [vmem:[%s4 + $0x3c] sm:$0xf]
    %v6229 = vld [vmem:[%s5] sm:$0x1]
    %v6231 = vlaneseq
    %v6232 = vshrl.u32 %v6231, 7
    %v6233 = vsub.s32 0, %v6232
    %v6234 = vrot.slane %v6229, %v6233
    %v6252 = vunpack.c.l.b16 %v6213
    %v6253 = vunpack.c.l.b16 %v6214
    %v6254 = vunpack.c.l.b16 %v6215
    %v6255 = vunpack.c.l.b16 %v6216
    %v6256 = vunpack.c.l.b16 %v6217
    %v6257 = vunpack.c.l.b16 %v6218
    %v6258 = vunpack.c.l.b16 %v6219
    %v6259 = vunpack.c.l.b16 %v6220
    %v6260 = vunpack.c.l.b16 %v6221
    %v6261 = vunpack.c.l.b16 %v6222
    %v6262 = vunpack.c.l.b16 %v6223
    %v6263 = vunpack.c.l.b16 %v6224
    %v6264 = vunpack.c.l.b16 %v6225
    %v6265 = vunpack.c.l.b16 %v6226
    %v6266 = vunpack.c.l.b16 %v6227
    %v6267 = vunpack.c.l.b16 %v6228
    %v6268 = vpack.c.b16 %v6253, %v6252
    %v6269 = vpack.c.b16 %v6255, %v6254
    %v6270 = vpack.c.b16 %v6257, %v6256
    %v6271 = vpack.c.b16 %v6259, %v6258
    %v6272 = vpack.c.b16 %v6261, %v6260
    %v6273 = vpack.c.b16 %v6263, %v6262
    %v6274 = vpack.c.b16 %v6265, %v6264
    %v6275 = vpack.c.b16 %v6267, %v6266
    %6284 = vmatprep.subr.bf16.mxu0 0
    %6285 = vmatpush1.bf16.msra.mxu0 %v6268
    %6286 = vmatprep.subr.bf16.mxu0 0
    %6287 = vmatpush1.bf16.msra.mxu0 %v6269
    %6288 = vmatprep.subr.bf16.mxu0 0
    %6289 = vmatpush1.bf16.msra.mxu0 %v6270
    %6290 = vmatprep.subr.bf16.mxu0 0
    %6291 = vmatpush1.bf16.msra.mxu0 %v6271
    %6292 = vmatprep.subr.bf16.mxu0 0
    %6293 = vmatpush1.bf16.msra.mxu0 %v6272
    %6294 = vmatprep.subr.bf16.mxu0 0
    %6295 = vmatpush1.bf16.msra.mxu0 %v6273
    %6296 = vmatprep.subr.bf16.mxu0 0
    %6297 = vmatpush1.bf16.msra.mxu0 %v6274
    %6298 = vmatprep.subr.bf16.mxu0 0
    %6299 = vmatpush1.bf16.msra.mxu0 %v6275
    %6300 = vmatprep.subr.bf16.mxu0 0
    %6301 = vmatpush1.bf16.msra.mxu0 0
    %6302 = vmatprep.subr.bf16.mxu0 0
    %6303 = vmatpush1.bf16.msra.mxu0 0
    %6304 = vmatprep.subr.bf16.mxu0 0
    %6305 = vmatpush1.bf16.msra.mxu0 0
    %6306 = vmatprep.subr.bf16.mxu0 0
    %6307 = vmatpush1.bf16.msra.mxu0 0
    %6308 = vmatprep.subr.bf16.mxu0 0
    %6309 = vmatpush1.bf16.msra.mxu0 0
    %6310 = vmatprep.subr.bf16.mxu0 0
    %6311 = vmatpush1.bf16.msra.mxu0 0
    %6312 = vmatprep.subr.bf16.mxu0 0
    %6313 = vmatpush1.bf16.msra.mxu0 0
    %6314 = vmatprep.subr.bf16.mxu0 0
    %6315 = vmatpush1.bf16.msra.mxu0 0
    %6316 = vmatprep.mubr.bf16.mxu0 0
    %6317 = vmatmul.mubr.bf16.gmra.mrb[0].mxu0 %v6212
    %v6318 = vpop.f32.mrb[0].mxu0
    %v6319 = vadd.f32 %v6234, %v6318
    %v6320 = vpop.f32.mrb[0].mxu0
    %v6321 = vpop.f32.mrb[0].mxu0
    %v6322 = vpop.f32.mrb[0].mxu0
    %6323 = vdwg.mxu0
    %6324 = vst [vmem:[#allocation2] sm:$0x3] %v6319
    // Predicated region
    $region26: #{holistic_forward.1} parent=1 // pred_check
      _
    $region27: #{holistic_forward.1} parent=1 // pred_check_branch
      %6326 = sbr.rel (0) target = $region29
    $region28: #{holistic_forward.1} parent=1 // pred_region
      %s6328 = ssub.s32 32, 32
      %6329 = vsyncadd [#allocation3], %s6328
      %s6331 = sshll.u32 [#allocation2], 4
      %s6332 = int_to_ptr.vmem [resolvable:$true] %s6331
      %6334 = dma.vmem_to_hbm [thread:$0]  %s6332, 32, %s6, [#allocation3]
    $region29: #{holistic_forward.1} parent=1 // pred_fallthru
      _
    // Predicated region
    $region30: #{holistic_forward.1} parent=1 // pred_check
      _
    $region31: #{holistic_forward.1} parent=1 // pred_check_branch
      %6336 = sbr.rel (0) target = $region33
    $region32: #{holistic_forward.1} parent=1 // pred_region
      %6337 = dma.done [#allocation3], 32
    $region33: #{holistic_forward.1} parent=1 // pred_fallthru
      _
    %6338 = vsyncpa [#allocation3], 1

</llo_original>
